<compile_context>
chip_gen: v6e
topology: v6e:2x2x1
jax: 0.10.0
libtpu: 0.0.40
codegen_flags: <defaults>
</compile_context>

<pallas_src>
import jax
import jax.numpy as jnp
from jax.experimental import pallas as pl
from jax.experimental.pallas import tpu as pltpu

IN_DIM = 784
HID1 = 500
HID2 = 500
OUT_DIM = 784

HID_PAD = 512   # 4 * 128 lanes (500 -> 512, zero padded, exact math)


def _round_up(x, m):
    return ((x + m - 1) // m) * m


def _mlp_kernel(x_ref, w1_ref, b1_ref, w2_ref, b2_ref, w3_ref, b3_ref, y_ref):
    # One fused 3-layer MLP per (TM, 784) batch tile.  Matmuls run on the MXU
    # in bf16 with f32 accumulation; ReLU (VPU) and sigmoid (EUP exp) ride in
    # otherwise-idle VLIW slots under the MXU.  h1/h2 never touch HBM.
    x = x_ref[...].astype(jnp.bfloat16)   # in-kernel cast: hidden under the MXU

    h1 = jnp.dot(x, w1_ref[...], preferred_element_type=jnp.float32) + b1_ref[...]
    h1 = jnp.maximum(h1, 0.0).astype(jnp.bfloat16)

    h2 = jnp.dot(h1, w2_ref[...], preferred_element_type=jnp.float32) + b2_ref[...]
    h2 = jnp.maximum(h2, 0.0).astype(jnp.bfloat16)

    logits = jnp.dot(h2, w3_ref[...], preferred_element_type=jnp.float32) + b3_ref[...]
    y_ref[...] = jax.nn.sigmoid(logits).astype(y_ref.dtype)


def _pad2(a, rows, cols, dtype):
    r, c = a.shape
    return jnp.pad(a, ((0, rows - r), (0, cols - c))).astype(dtype)


def prepare_params(params):
    """Prepack (pad + cast) parameters ONCE, outside the per-call forward.

    Weights are stored (in_features, out_features) = torch W.T.  Hidden dims
    are zero-padded 500 -> 512 (lane multiple); padded rows/cols contribute
    nothing, so the math is exact.  The 784 input/output dims are NOT padded.
    """
    w1, b1, w2, b2, w3, b3 = params
    return (
        _pad2(w1, IN_DIM, HID_PAD, jnp.bfloat16),    # (784, 512)
        _pad2(b1, 1, HID_PAD, jnp.float32),          # (1, 512)
        _pad2(w2, HID_PAD, HID_PAD, jnp.bfloat16),   # (512, 512)
        _pad2(b2, 1, HID_PAD, jnp.float32),          # (1, 512)
        _pad2(w3, HID_PAD, OUT_DIM, jnp.bfloat16),   # (512, 784)
        _pad2(b3, 1, OUT_DIM, jnp.float32),          # (1, 784)
    )


def _pick_tile(padded_b):
    """Trace-time, device-aware batch-tile + scoped-VMEM choice."""
    try:
        vmem = pltpu.get_tpu_info().vmem_capacity_bytes
    except Exception:
        vmem = 64 << 20  # conservative fallback if the query is unavailable
    if vmem >= (96 << 20):
        # Single-TensorCore, 128-MiB-VMEM parts (v5e / v6e): the grid is a
        # serial loop, so use the biggest tile that fits to amortize the
        # ~0.35 us per-step overhead.  Never shrink tiles for "parallelism".
        max_tm, vmem_limit, split_cores = 2048, 64 << 20, False
    else:
        # v7x: 64 MiB / TC, 2 TCs -> make sure there are >= 2 grid steps so the
        # "parallel" batch axis actually shards across both TensorCores.
        max_tm, vmem_limit, split_cores = 512, 40 << 20, True

    n_tiles = pl.cdiv(padded_b, max_tm)
    if split_cores:
        n_tiles = max(2, n_tiles)
    tm = min(max_tm, _round_up(pl.cdiv(padded_b, n_tiles), 16))
    return tm, vmem_limit


@jax.jit
def baseline_net_forward(x, packed_params):
    """x: anything flattening to (-1, 784). Returns (B, 784) bfloat16 in [0,1]."""
    w1_p, b1_p, w2_p, b2_p, w3_p, b3_p = packed_params

    x2d = x.reshape(-1, IN_DIM).astype(jnp.float32)
    batch = x2d.shape[0]

    # Pad the batch (rows only) to a full tile so every grid step is identical.
    padded_b = _round_up(batch, 16)
    tm, vmem_limit = _pick_tile(padded_b)
    padded_b = _round_up(padded_b, tm)
    if padded_b != batch:
        x2d = jnp.pad(x2d, ((0, padded_b - batch), (0, 0)))

    grid = (padded_b // tm,)
    const = lambda i: (0, 0)  # resident weights/biases: same block every step

    flops = 2 * padded_b * (IN_DIM * HID_PAD + HID_PAD * HID_PAD + HID_PAD * OUT_DIM)
    bytes_accessed = (
        x2d.size * 4
        + padded_b * OUT_DIM * 2
        + (w1_p.size + w2_p.size + w3_p.size) * 2
        + (b1_p.size + b2_p.size + b3_p.size) * 4
    )

    y = pl.pallas_call(
        _mlp_kernel,
        out_shape=jax.ShapeDtypeStruct((padded_b, OUT_DIM), jnp.bfloat16),
        grid_spec=pltpu.PrefetchScalarGridSpec(
            num_scalar_prefetch=0,
            grid=grid,
            in_specs=[
                pl.BlockSpec((tm, IN_DIM), lambda i: (i, 0)),
                pl.BlockSpec((IN_DIM, HID_PAD), const),
                pl.BlockSpec((1, HID_PAD), const),
                pl.BlockSpec((HID_PAD, HID_PAD), const),
                pl.BlockSpec((1, HID_PAD), const),
                pl.BlockSpec((HID_PAD, OUT_DIM), const),
                pl.BlockSpec((1, OUT_DIM), const),
            ],
            out_specs=pl.BlockSpec((tm, OUT_DIM), lambda i: (i, 0)),
        ),
        compiler_params=pltpu.CompilerParams(
            dimension_semantics=("parallel",),
            vmem_limit_bytes=vmem_limit,
        ),
        cost_estimate=pl.CostEstimate(
            flops=flops,
            transcendentals=padded_b * OUT_DIM,
            bytes_accessed=bytes_accessed,
        ),
    )(x2d, w1_p, b1_p, w2_p, b2_p, w3_p, b3_p)

    if padded_b != batch:
        y = y[:batch]
    return y


def init_params(key):
    """PyTorch-style Linear init; weights stored as (in, out) = torch W.T."""
    def linear(key, fan_in, fan_out):
        kw, kb = jax.random.split(key)
        bound = 1.0 / jnp.sqrt(float(fan_in))
        w = jax.random.uniform(kw, (fan_in, fan_out), jnp.float32, -bound, bound)
        b = jax.random.uniform(kb, (1, fan_out), jnp.float32, -bound, bound)
        return w, b

    k1, k2, k3 = jax.random.split(key, 3)
    w1, b1 = linear(k1, IN_DIM, HID1)
    w2, b2 = linear(k2, HID1, HID2)
    w3, b3 = linear(k3, HID2, OUT_DIM)
    return (w1, b1, w2, b2, w3, b3)


def _reference_forward(x, params):
    """Plain-JAX f32 reference for correctness checking."""
    w1, b1, w2, b2, w3, b3 = params
    x2d = x.reshape(-1, IN_DIM).astype(jnp.float32)
    h = jnp.maximum(x2d @ w1 + b1, 0.0)
    h = jnp.maximum(h @ w2 + b2, 0.0)
    return jax.nn.sigmoid(h @ w3 + b3)


if __name__ == "__main__":
    key = jax.random.PRNGKey(0)
    kp, kx = jax.random.split(key)

    params = init_params(kp)
    packed = prepare_params(params)   # prepack weights/biases ONCE

    # MNIST-like input, NCHW as in the PyTorch module: batch=2, 1x28x28.
    x = jax.random.uniform(kx, (2, 1, 28, 28), jnp.float32)

    y = jax.block_until_ready(baseline_net_forward(x, packed))
    y_ref = _reference_forward(x, params)

    assert y.shape == (2, OUT_DIM), y.shape
    y_f32 = jnp.asarray(y, jnp.float32)
    max_err = float(jnp.max(jnp.abs(y_f32 - y_ref)))
    # bf16 matmul inputs + bf16 sigmoid output (f32 accumulation) vs f32 ref.
    assert jnp.allclose(y_f32, y_ref, atol=2e-2, rtol=2e-2), (
        f"mismatch vs reference, max_err={max_err}")

    print("KERNEL_OK")
</pallas_src>

<mosaic_0001>
module attributes {stable_mosaic.version = 11 : i64} {
  func.func @_mlp_kernel(%arg0: i32, %arg1: memref<16x784xf32, #tpu.memory_space<vmem>>, %arg2: memref<784x512xbf16, #tpu.memory_space<vmem>>, %arg3: memref<1x512xf32, #tpu.memory_space<vmem>>, %arg4: memref<512x512xbf16, #tpu.memory_space<vmem>>, %arg5: memref<1x512xf32, #tpu.memory_space<vmem>>, %arg6: memref<512x784xbf16, #tpu.memory_space<vmem>>, %arg7: memref<1x784xf32, #tpu.memory_space<vmem>>, %arg8: memref<16x784xbf16, #tpu.memory_space<vmem>>) attributes {dimension_semantics = [#tpu.dimension_semantics<parallel>], iteration_bounds = array<i64: 1>, scalar_prefetch = 0 : i64, scratch_operands = 0 : i64, tpu.core_type = #tpu.core_type<tc>, window_params = [{transform_indices = @transform_0, window_bounds = array<i64: 16, 784>}, {pipeline_mode = #tpu.pipeline_mode<synchronous>, transform_indices = @transform_1, window_bounds = array<i64: 784, 512>}, {pipeline_mode = #tpu.pipeline_mode<synchronous>, transform_indices = @transform_2, window_bounds = array<i64: 1, 512>}, {pipeline_mode = #tpu.pipeline_mode<synchronous>, transform_indices = @transform_3, window_bounds = array<i64: 512, 512>}, {pipeline_mode = #tpu.pipeline_mode<synchronous>, transform_indices = @transform_4, window_bounds = array<i64: 1, 512>}, {pipeline_mode = #tpu.pipeline_mode<synchronous>, transform_indices = @transform_5, window_bounds = array<i64: 512, 784>}, {pipeline_mode = #tpu.pipeline_mode<synchronous>, transform_indices = @transform_6, window_bounds = array<i64: 1, 784>}, {transform_indices = @transform_7, window_bounds = array<i64: 16, 784>}]} {
    %c0 = arith.constant 0 : index
    %c0_0 = arith.constant 0 : index
    %0 = vector.load %arg1[%c0, %c0_0] : memref<16x784xf32, #tpu.memory_space<vmem>>, vector<16x784xf32>
    %1 = arith.truncf %0 : vector<16x784xf32> to vector<16x784xbf16>
    %c0_1 = arith.constant 0 : index
    %c0_2 = arith.constant 0 : index
    %2 = vector.load %arg2[%c0_1, %c0_2] : memref<784x512xbf16, #tpu.memory_space<vmem>>, vector<784x512xbf16>
    %cst = arith.constant dense<0.000000e+00> : vector<16x512xf32>
    %3 = tpu.matmul %1, %2, %cst {dimension_numbers = #tpu.dot_dimension_numbers<[1], [0], [0], [1], [0, 0, 1, 1], [], []>} : vector<16x784xbf16>, vector<784x512xbf16>, vector<16x512xf32> -> vector<16x512xf32>
    %c0_3 = arith.constant 0 : index
    %c0_4 = arith.constant 0 : index
    %4 = vector.load %arg3[%c0_3, %c0_4] : memref<1x512xf32, #tpu.memory_space<vmem>>, vector<1x512xf32>
    %5 = vector.broadcast %4 : vector<1x512xf32> to vector<16x512xf32>
    %6 = arith.addf %3, %5 : vector<16x512xf32>
    %cst_5 = arith.constant 0.000000e+00 : f32
    %7 = vector.broadcast %cst_5 : f32 to vector<16x512xf32>
    %8 = arith.maximumf %6, %7 : vector<16x512xf32>
    %9 = arith.truncf %8 : vector<16x512xf32> to vector<16x512xbf16>
    %c0_6 = arith.constant 0 : index
    %c0_7 = arith.constant 0 : index
    %10 = vector.load %arg4[%c0_6, %c0_7] : memref<512x512xbf16, #tpu.memory_space<vmem>>, vector<512x512xbf16>
    %cst_8 = arith.constant dense<0.000000e+00> : vector<16x512xf32>
    %11 = tpu.matmul %9, %10, %cst_8 {dimension_numbers = #tpu.dot_dimension_numbers<[1], [0], [0], [1], [0, 0, 1, 1], [], []>} : vector<16x512xbf16>, vector<512x512xbf16>, vector<16x512xf32> -> vector<16x512xf32>
    %c0_9 = arith.constant 0 : index
    %c0_10 = arith.constant 0 : index
    %12 = vector.load %arg5[%c0_9, %c0_10] : memref<1x512xf32, #tpu.memory_space<vmem>>, vector<1x512xf32>
    %13 = vector.broadcast %12 : vector<1x512xf32> to vector<16x512xf32>
    %14 = arith.addf %11, %13 : vector<16x512xf32>
    %cst_11 = arith.constant 0.000000e+00 : f32
    %15 = vector.broadcast %cst_11 : f32 to vector<16x512xf32>
    %16 = arith.maximumf %14, %15 : vector<16x512xf32>
    %17 = arith.truncf %16 : vector<16x512xf32> to vector<16x512xbf16>
    %c0_12 = arith.constant 0 : index
    %c0_13 = arith.constant 0 : index
    %18 = vector.load %arg6[%c0_12, %c0_13] : memref<512x784xbf16, #tpu.memory_space<vmem>>, vector<512x784xbf16>
    %cst_14 = arith.constant dense<0.000000e+00> : vector<16x784xf32>
    %19 = tpu.matmul %17, %18, %cst_14 {dimension_numbers = #tpu.dot_dimension_numbers<[1], [0], [0], [1], [0, 0, 1, 1], [], []>} : vector<16x512xbf16>, vector<512x784xbf16>, vector<16x784xf32> -> vector<16x784xf32>
    %c0_15 = arith.constant 0 : index
    %c0_16 = arith.constant 0 : index
    %20 = vector.load %arg7[%c0_15, %c0_16] : memref<1x784xf32, #tpu.memory_space<vmem>>, vector<1x784xf32>
    %21 = vector.broadcast %20 : vector<1x784xf32> to vector<16x784xf32>
    %22 = arith.addf %19, %21 : vector<16x784xf32>
    %23 = arith.negf %22 : vector<16x784xf32>
    %24 = math.exp %23 : vector<16x784xf32>
    %cst_17 = arith.constant 1.000000e+00 : f32
    %25 = vector.broadcast %cst_17 : f32 to vector<16x784xf32>
    %26 = arith.addf %25, %24 : vector<16x784xf32>
    %27 = arith.divf %25, %26 : vector<16x784xf32>
    %28 = arith.truncf %27 : vector<16x784xf32> to vector<16x784xbf16>
    %c0_18 = arith.constant 0 : index
    %c0_19 = arith.constant 0 : index
    %29 = vector.load %arg8[%c0_18, %c0_19] : memref<16x784xbf16, #tpu.memory_space<vmem>>, vector<16x784xbf16>
    tpu.vector_store %arg8[%c0_18, %c0_19], %28 {strides = array<i32>} : memref<16x784xbf16, #tpu.memory_space<vmem>>, vector<16x784xbf16>,
    return
  }
  func.func @transform_0(%arg0: i32) -> (i32, i32) {
    %c0_i32 = arith.constant 0 : i32
    %c0_i32_0 = arith.constant 0 : i32
    return %arg0, %c0_i32 : i32, i32
  }
  func.func @transform_1(%arg0: i32) -> (i32, i32) {
    %c0_i32 = arith.constant 0 : i32
    %c0_i32_0 = arith.constant 0 : i32
    %c0_i32_1 = arith.constant 0 : i32
    return %c0_i32, %c0_i32_0 : i32, i32
  }
  func.func @transform_2(%arg0: i32) -> (i32, i32) {
    %c0_i32 = arith.constant 0 : i32
    %c0_i32_0 = arith.constant 0 : i32
    %c0_i32_1 = arith.constant 0 : i32
    return %c0_i32, %c0_i32_0 : i32, i32
  }
  func.func @transform_3(%arg0: i32) -> (i32, i32) {
    %c0_i32 = arith.constant 0 : i32
    %c0_i32_0 = arith.constant 0 : i32
    %c0_i32_1 = arith.constant 0 : i32
    return %c0_i32, %c0_i32_0 : i32, i32
  }
  func.func @transform_4(%arg0: i32) -> (i32, i32) {
    %c0_i32 = arith.constant 0 : i32
    %c0_i32_0 = arith.constant 0 : i32
    %c0_i32_1 = arith.constant 0 : i32
    return %c0_i32, %c0_i32_0 : i32, i32
  }
  func.func @transform_5(%arg0: i32) -> (i32, i32) {
    %c0_i32 = arith.constant 0 : i32
    %c0_i32_0 = arith.constant 0 : i32
    %c0_i32_1 = arith.constant 0 : i32
    return %c0_i32, %c0_i32_0 : i32, i32
  }
  func.func @transform_6(%arg0: i32) -> (i32, i32) {
    %c0_i32 = arith.constant 0 : i32
    %c0_i32_0 = arith.constant 0 : i32
    %c0_i32_1 = arith.constant 0 : i32
    return %c0_i32, %c0_i32_0 : i32, i32
  }
  func.func @transform_7(%arg0: i32) -> (i32, i32) {
    %c0_i32 = arith.constant 0 : i32
    %c0_i32_0 = arith.constant 0 : i32
    return %arg0, %c0_i32 : i32, i32
  }
}

</mosaic_0001>

<llo_original>
// kernel: baseline_net_forward.1
$region0: #{baseline_net_forward.1}
  #allocation0 [shape = 'u32[]', space=smem, size = 0x4, offset = 0x4, fixed_abs, tag = 'smem constant byte address 0x4 - core index']
  #allocation1 [shape = 'u32[144,128]{1,0:T(1,128)}', space=vmem, size = 0x12000, scoped, tag = 'internal scratch']
  %s0 = inlined_call_operand.vmem [shape: f32[16,784], index: 0, kind: input, shape index: {}]
  %s1 = inlined_call_operand.vmem [shape: bf16[784,512], index: 1, kind: input, shape index: {}]
  %s2 = inlined_call_operand.vmem [shape: f32[1,512], index: 2, kind: input, shape index: {}]
  %s3 = inlined_call_operand.vmem [shape: bf16[512,512], index: 3, kind: input, shape index: {}]
  %s4 = inlined_call_operand.vmem [shape: f32[1,512], index: 4, kind: input, shape index: {}]
  %s5 = inlined_call_operand.vmem [shape: bf16[512,784], index: 5, kind: input, shape index: {}]
  %s6 = inlined_call_operand.vmem [shape: f32[1,784], index: 6, kind: input, shape index: {}]
  %s7 = inlined_call_operand.vmem [shape: bf16[16,784], index: 7, kind: output, shape index: {}]
  %s8 = sld [smem:[#allocation0]]
  $region38: #{baseline_net_forward.1} parent=0
    _
  %s10 = ssub.s32 1, %s8
  %s11 = scalar_select 0, %s10, %s8
  // Predicated region
  $region2: #{baseline_net_forward.1} parent=0 // pred_check
    _
  $region3: #{baseline_net_forward.1} parent=0 // pred_check_branch
    %13 = sbr.rel (0) target = $region5
  $region4: #{baseline_net_forward.1} parent=0 // pred_region
    _
  $region5: #{baseline_net_forward.1} parent=0 // pred_fallthru
    _
  // Predicated region
  $region6: #{baseline_net_forward.1} parent=0 // pred_check
    _
  $region7: #{baseline_net_forward.1} parent=0 // pred_check_branch
    %15 = sbr.rel (0) target = $region9
  $region8: #{baseline_net_forward.1} parent=0 // pred_region
    _
  $region9: #{baseline_net_forward.1} parent=0 // pred_fallthru
    _
  // Predicated region
  $region10: #{baseline_net_forward.1} parent=0 // pred_check
    _
  $region11: #{baseline_net_forward.1} parent=0 // pred_check_branch
    %17 = sbr.rel (0) target = $region13
  $region12: #{baseline_net_forward.1} parent=0 // pred_region
    _
  $region13: #{baseline_net_forward.1} parent=0 // pred_fallthru
    _
  // Predicated region
  $region14: #{baseline_net_forward.1} parent=0 // pred_check
    _
  $region15: #{baseline_net_forward.1} parent=0 // pred_check_branch
    %19 = sbr.rel (0) target = $region17
  $region16: #{baseline_net_forward.1} parent=0 // pred_region
    _
  $region17: #{baseline_net_forward.1} parent=0 // pred_fallthru
    _
  // Predicated region
  $region18: #{baseline_net_forward.1} parent=0 // pred_check
    _
  $region19: #{baseline_net_forward.1} parent=0 // pred_check_branch
    %21 = sbr.rel (0) target = $region21
  $region20: #{baseline_net_forward.1} parent=0 // pred_region
    _
  $region21: #{baseline_net_forward.1} parent=0 // pred_fallthru
    _
  // Predicated region
  $region22: #{baseline_net_forward.1} parent=0 // pred_check
    _
  $region23: #{baseline_net_forward.1} parent=0 // pred_check_branch
    %23 = sbr.rel (0) target = $region25
  $region24: #{baseline_net_forward.1} parent=0 // pred_region
    _
  $region25: #{baseline_net_forward.1} parent=0 // pred_fallthru
    _
  // Predicated region
  $region26: #{baseline_net_forward.1} parent=0 // pred_check
    _
  $region27: #{baseline_net_forward.1} parent=0 // pred_check_branch
    %25 = sbr.rel (0) target = $region29
  $region28: #{baseline_net_forward.1} parent=0 // pred_region
    _
  $region29: #{baseline_net_forward.1} parent=0 // pred_fallthru
    _
  %v27 = vld [vmem:[%s0] sm:$0xff]
  %v28 = vld [vmem:[%s0 + $0x8] sm:$0xff]
  %v29 = vld [vmem:[%s0 + $0x10] sm:$0xff]
  %v30 = vld [vmem:[%s0 + $0x18] sm:$0xff]
  %v31 = vld [vmem:[%s0 + $0x20] sm:$0xff]
  %v32 = vld [vmem:[%s0 + $0x28] sm:$0xff]
  %v33 = vld [vmem:[%s0 + $0x30] sm:$0xff]
  %v34 = vld [vmem:[%s0 + $0x38] sm:$0xff]
  %v35 = vld [vmem:[%s0 + $0x40] sm:$0xff]
  %v36 = vld [vmem:[%s0 + $0x48] sm:$0xff]
  %v37 = vld [vmem:[%s0 + $0x50] sm:$0xff]
  %v38 = vld [vmem:[%s0 + $0x58] sm:$0xff]
  %v39 = vld [vmem:[%s0 + $0x60] sm:$0xff]
  %v40 = vld [vmem:[%s0 + $0x68] sm:$0xff]
  %v41 = vpack.c.bf16 %v34, %v27
  %v42 = vpack.c.bf16 %v35, %v28
  %v43 = vpack.c.bf16 %v36, %v29
  %v44 = vpack.c.bf16 %v37, %v30
  %v45 = vpack.c.bf16 %v38, %v31
  %v46 = vpack.c.bf16 %v39, %v32
  %v47 = vpack.c.bf16 %v40, %v33
  %v48 = vld [vmem:[%s1] sm:$0xff]
  %v49 = vld [vmem:[%s1 + $0x8] sm:$0xff]
  %v50 = vld [vmem:[%s1 + $0x10] sm:$0xff]
  %v51 = vld [vmem:[%s1 + $0x18] sm:$0xff]
  %v52 = vld [vmem:[%s1 + $0x20] sm:$0xff]
  %v53 = vld [vmem:[%s1 + $0x28] sm:$0xff]
  %v54 = vld [vmem:[%s1 + $0x30] sm:$0xff]
  %v55 = vld [vmem:[%s1 + $0x38] sm:$0xff]
  %v56 = vld [vmem:[%s1 + $0x40] sm:$0xff]
  %v57 = vld [vmem:[%s1 + $0x48] sm:$0xff]
  %v58 = vld [vmem:[%s1 + $0x50] sm:$0xff]
  %v59 = vld [vmem:[%s1 + $0x58] sm:$0xff]
  %v60 = vld [vmem:[%s1 + $0x60] sm:$0xff]
  %v61 = vld [vmem:[%s1 + $0x68] sm:$0xff]
  %v62 = vld [vmem:[%s1 + $0x70] sm:$0xff]
  %v63 = vld [vmem:[%s1 + $0x78] sm:$0xff]
  %v64 = vld [vmem:[%s1 + $0x80] sm:$0xff]
  %v65 = vld [vmem:[%s1 + $0x88] sm:$0xff]
  %v66 = vld [vmem:[%s1 + $0x90] sm:$0xff]
  %v67 = vld [vmem:[%s1 + $0x98] sm:$0xff]
  %v68 = vld [vmem:[%s1 + $0xa0] sm:$0xff]
  %v69 = vld [vmem:[%s1 + $0xa8] sm:$0xff]
  %v70 = vld [vmem:[%s1 + $0xb0] sm:$0xff]
  %v71 = vld [vmem:[%s1 + $0xb8] sm:$0xff]
  %v72 = vld [vmem:[%s1 + $0xc0] sm:$0xff]
  %v73 = vld [vmem:[%s1 + $0xc8] sm:$0xff]
  %v74 = vld [vmem:[%s1 + $0xd0] sm:$0xff]
  %v75 = vld [vmem:[%s1 + $0xd8] sm:$0xff]
  %v76 = vld [vmem:[%s1 + $0xe0] sm:$0xff]
  %v77 = vld [vmem:[%s1 + $0xe8] sm:$0xff]
  %v78 = vld [vmem:[%s1 + $0xf0] sm:$0xff]
  %v79 = vld [vmem:[%s1 + $0xf8] sm:$0xff]
  %v80 = vld [vmem:[%s1 + $0x100] sm:$0xff]
  %v81 = vld [vmem:[%s1 + $0x108] sm:$0xff]
  %v82 = vld [vmem:[%s1 + $0x110] sm:$0xff]
  %v83 = vld [vmem:[%s1 + $0x118] sm:$0xff]
  %v84 = vld [vmem:[%s1 + $0x120] sm:$0xff]
  %v85 = vld [vmem:[%s1 + $0x128] sm:$0xff]
  %v86 = vld [vmem:[%s1 + $0x130] sm:$0xff]
  %v87 = vld [vmem:[%s1 + $0x138] sm:$0xff]
  %v88 = vld [vmem:[%s1 + $0x140] sm:$0xff]
  %v89 = vld [vmem:[%s1 + $0x148] sm:$0xff]
  %v90 = vld [vmem:[%s1 + $0x150] sm:$0xff]
  %v91 = vld [vmem:[%s1 + $0x158] sm:$0xff]
  %v92 = vld [vmem:[%s1 + $0x160] sm:$0xff]
  %v93 = vld [vmem:[%s1 + $0x168] sm:$0xff]
  %v94 = vld [vmem:[%s1 + $0x170] sm:$0xff]
  %v95 = vld [vmem:[%s1 + $0x178] sm:$0xff]
  %v96 = vld [vmem:[%s1 + $0x180] sm:$0xff]
  %v97 = vld [vmem:[%s1 + $0x188] sm:$0xff]
  %v98 = vld [vmem:[%s1 + $0x190] sm:$0xff]
  %v99 = vld [vmem:[%s1 + $0x198] sm:$0xff]
  %v100 = vld [vmem:[%s1 + $0x1a0] sm:$0xff]
  %v101 = vld [vmem:[%s1 + $0x1a8] sm:$0xff]
  %v102 = vld [vmem:[%s1 + $0x1b0] sm:$0xff]
  %v103 = vld [vmem:[%s1 + $0x1b8] sm:$0xff]
  %v104 = vld [vmem:[%s1 + $0x1c0] sm:$0xff]
  %v105 = vld [vmem:[%s1 + $0x1c8] sm:$0xff]
  %v106 = vld [vmem:[%s1 + $0x1d0] sm:$0xff]
  %v107 = vld [vmem:[%s1 + $0x1d8] sm:$0xff]
  %v108 = vld [vmem:[%s1 + $0x1e0] sm:$0xff]
  %v109 = vld [vmem:[%s1 + $0x1e8] sm:$0xff]
  %v110 = vld [vmem:[%s1 + $0x1f0] sm:$0xff]
  %v111 = vld [vmem:[%s1 + $0x1f8] sm:$0xff]
  %v112 = vld [vmem:[%s1 + $0x200] sm:$0xff]
  %v113 = vld [vmem:[%s1 + $0x208] sm:$0xff]
  %v114 = vld [vmem:[%s1 + $0x210] sm:$0xff]
  %v115 = vld [vmem:[%s1 + $0x218] sm:$0xff]
  %v116 = vld [vmem:[%s1 + $0x220] sm:$0xff]
  %v117 = vld [vmem:[%s1 + $0x228] sm:$0xff]
  %v118 = vld [vmem:[%s1 + $0x230] sm:$0xff]
  %v119 = vld [vmem:[%s1 + $0x238] sm:$0xff]
  %v120 = vld [vmem:[%s1 + $0x240] sm:$0xff]
  %v121 = vld [vmem:[%s1 + $0x248] sm:$0xff]
  %v122 = vld [vmem:[%s1 + $0x250] sm:$0xff]
  %v123 = vld [vmem:[%s1 + $0x258] sm:$0xff]
  %v124 = vld [vmem:[%s1 + $0x260] sm:$0xff]
  %v125 = vld [vmem:[%s1 + $0x268] sm:$0xff]
  %v126 = vld [vmem:[%s1 + $0x270] sm:$0xff]
  %v127 = vld [vmem:[%s1 + $0x278] sm:$0xff]
  %v128 = vld [vmem:[%s1 + $0x280] sm:$0xff]
  %v129 = vld [vmem:[%s1 + $0x288] sm:$0xff]
  %v130 = vld [vmem:[%s1 + $0x290] sm:$0xff]
  %v131 = vld [vmem:[%s1 + $0x298] sm:$0xff]
  %v132 = vld [vmem:[%s1 + $0x2a0] sm:$0xff]
  %v133 = vld [vmem:[%s1 + $0x2a8] sm:$0xff]
  %v134 = vld [vmem:[%s1 + $0x2b0] sm:$0xff]
  %v135 = vld [vmem:[%s1 + $0x2b8] sm:$0xff]
  %v136 = vld [vmem:[%s1 + $0x2c0] sm:$0xff]
  %v137 = vld [vmem:[%s1 + $0x2c8] sm:$0xff]
  %v138 = vld [vmem:[%s1 + $0x2d0] sm:$0xff]
  %v139 = vld [vmem:[%s1 + $0x2d8] sm:$0xff]
  %v140 = vld [vmem:[%s1 + $0x2e0] sm:$0xff]
  %v141 = vld [vmem:[%s1 + $0x2e8] sm:$0xff]
  %v142 = vld [vmem:[%s1 + $0x2f0] sm:$0xff]
  %v143 = vld [vmem:[%s1 + $0x2f8] sm:$0xff]
  %v144 = vld [vmem:[%s1 + $0x300] sm:$0xff]
  %v145 = vld [vmem:[%s1 + $0x308] sm:$0xff]
  %v146 = vld [vmem:[%s1 + $0x310] sm:$0xff]
  %v147 = vld [vmem:[%s1 + $0x318] sm:$0xff]
  %v148 = vld [vmem:[%s1 + $0x320] sm:$0xff]
  %v149 = vld [vmem:[%s1 + $0x328] sm:$0xff]
  %v150 = vld [vmem:[%s1 + $0x330] sm:$0xff]
  %v151 = vld [vmem:[%s1 + $0x338] sm:$0xff]
  %v152 = vld [vmem:[%s1 + $0x340] sm:$0xff]
  %v153 = vld [vmem:[%s1 + $0x348] sm:$0xff]
  %v154 = vld [vmem:[%s1 + $0x350] sm:$0xff]
  %v155 = vld [vmem:[%s1 + $0x358] sm:$0xff]
  %v156 = vld [vmem:[%s1 + $0x360] sm:$0xff]
  %v157 = vld [vmem:[%s1 + $0x368] sm:$0xff]
  %v158 = vld [vmem:[%s1 + $0x370] sm:$0xff]
  %v159 = vld [vmem:[%s1 + $0x378] sm:$0xff]
  %v160 = vld [vmem:[%s1 + $0x380] sm:$0xff]
  %v161 = vld [vmem:[%s1 + $0x388] sm:$0xff]
  %v162 = vld [vmem:[%s1 + $0x390] sm:$0xff]
  %v163 = vld [vmem:[%s1 + $0x398] sm:$0xff]
  %v164 = vld [vmem:[%s1 + $0x3a0] sm:$0xff]
  %v165 = vld [vmem:[%s1 + $0x3a8] sm:$0xff]
  %v166 = vld [vmem:[%s1 + $0x3b0] sm:$0xff]
  %v167 = vld [vmem:[%s1 + $0x3b8] sm:$0xff]
  %v168 = vld [vmem:[%s1 + $0x3c0] sm:$0xff]
  %v169 = vld [vmem:[%s1 + $0x3c8] sm:$0xff]
  %v170 = vld [vmem:[%s1 + $0x3d0] sm:$0xff]
  %v171 = vld [vmem:[%s1 + $0x3d8] sm:$0xff]
  %v172 = vld [vmem:[%s1 + $0x3e0] sm:$0xff]
  %v173 = vld [vmem:[%s1 + $0x3e8] sm:$0xff]
  %v174 = vld [vmem:[%s1 + $0x3f0] sm:$0xff]
  %v175 = vld [vmem:[%s1 + $0x3f8] sm:$0xff]
  %v176 = vld [vmem:[%s1 + $0x400] sm:$0xff]
  %v177 = vld [vmem:[%s1 + $0x408] sm:$0xff]
  %v178 = vld [vmem:[%s1 + $0x410] sm:$0xff]
  %v179 = vld [vmem:[%s1 + $0x418] sm:$0xff]
  %v180 = vld [vmem:[%s1 + $0x420] sm:$0xff]
  %v181 = vld [vmem:[%s1 + $0x428] sm:$0xff]
  %v182 = vld [vmem:[%s1 + $0x430] sm:$0xff]
  %v183 = vld [vmem:[%s1 + $0x438] sm:$0xff]
  %v184 = vld [vmem:[%s1 + $0x440] sm:$0xff]
  %v185 = vld [vmem:[%s1 + $0x448] sm:$0xff]
  %v186 = vld [vmem:[%s1 + $0x450] sm:$0xff]
  %v187 = vld [vmem:[%s1 + $0x458] sm:$0xff]
  %v188 = vld [vmem:[%s1 + $0x460] sm:$0xff]
  %v189 = vld [vmem:[%s1 + $0x468] sm:$0xff]
  %v190 = vld [vmem:[%s1 + $0x470] sm:$0xff]
  %v191 = vld [vmem:[%s1 + $0x478] sm:$0xff]
  %v192 = vld [vmem:[%s1 + $0x480] sm:$0xff]
  %v193 = vld [vmem:[%s1 + $0x488] sm:$0xff]
  %v194 = vld [vmem:[%s1 + $0x490] sm:$0xff]
  %v195 = vld [vmem:[%s1 + $0x498] sm:$0xff]
  %v196 = vld [vmem:[%s1 + $0x4a0] sm:$0xff]
  %v197 = vld [vmem:[%s1 + $0x4a8] sm:$0xff]
  %v198 = vld [vmem:[%s1 + $0x4b0] sm:$0xff]
  %v199 = vld [vmem:[%s1 + $0x4b8] sm:$0xff]
  %v200 = vld [vmem:[%s1 + $0x4c0] sm:$0xff]
  %v201 = vld [vmem:[%s1 + $0x4c8] sm:$0xff]
  %v202 = vld [vmem:[%s1 + $0x4d0] sm:$0xff]
  %v203 = vld [vmem:[%s1 + $0x4d8] sm:$0xff]
  %v204 = vld [vmem:[%s1 + $0x4e0] sm:$0xff]
  %v205 = vld [vmem:[%s1 + $0x4e8] sm:$0xff]
  %v206 = vld [vmem:[%s1 + $0x4f0] sm:$0xff]
  %v207 = vld [vmem:[%s1 + $0x4f8] sm:$0xff]
  %v208 = vld [vmem:[%s1 + $0x500] sm:$0xff]
  %v209 = vld [vmem:[%s1 + $0x508] sm:$0xff]
  %v210 = vld [vmem:[%s1 + $0x510] sm:$0xff]
  %v211 = vld [vmem:[%s1 + $0x518] sm:$0xff]
  %v212 = vld [vmem:[%s1 + $0x520] sm:$0xff]
  %v213 = vld [vmem:[%s1 + $0x528] sm:$0xff]
  %v214 = vld [vmem:[%s1 + $0x530] sm:$0xff]
  %v215 = vld [vmem:[%s1 + $0x538] sm:$0xff]
  %v216 = vld [vmem:[%s1 + $0x540] sm:$0xff]
  %v217 = vld [vmem:[%s1 + $0x548] sm:$0xff]
  %v218 = vld [vmem:[%s1 + $0x550] sm:$0xff]
  %v219 = vld [vmem:[%s1 + $0x558] sm:$0xff]
  %v220 = vld [vmem:[%s1 + $0x560] sm:$0xff]
  %v221 = vld [vmem:[%s1 + $0x568] sm:$0xff]
  %v222 = vld [vmem:[%s1 + $0x570] sm:$0xff]
  %v223 = vld [vmem:[%s1 + $0x578] sm:$0xff]
  %v224 = vld [vmem:[%s1 + $0x580] sm:$0xff]
  %v225 = vld [vmem:[%s1 + $0x588] sm:$0xff]
  %v226 = vld [vmem:[%s1 + $0x590] sm:$0xff]
  %v227 = vld [vmem:[%s1 + $0x598] sm:$0xff]
  %v228 = vld [vmem:[%s1 + $0x5a0] sm:$0xff]
  %v229 = vld [vmem:[%s1 + $0x5a8] sm:$0xff]
  %v230 = vld [vmem:[%s1 + $0x5b0] sm:$0xff]
  %v231 = vld [vmem:[%s1 + $0x5b8] sm:$0xff]
  %v232 = vld [vmem:[%s1 + $0x5c0] sm:$0xff]
  %v233 = vld [vmem:[%s1 + $0x5c8] sm:$0xff]
  %v234 = vld [vmem:[%s1 + $0x5d0] sm:$0xff]
  %v235 = vld [vmem:[%s1 + $0x5d8] sm:$0xff]
  %v236 = vld [vmem:[%s1 + $0x5e0] sm:$0xff]
  %v237 = vld [vmem:[%s1 + $0x5e8] sm:$0xff]
  %v238 = vld [vmem:[%s1 + $0x5f0] sm:$0xff]
  %v239 = vld [vmem:[%s1 + $0x5f8] sm:$0xff]
  %v240 = vld [vmem:[%s1 + $0x600] sm:$0xff]
  %v241 = vld [vmem:[%s1 + $0x608] sm:$0xff]
  %v242 = vld [vmem:[%s1 + $0x610] sm:$0xff]
  %v243 = vld [vmem:[%s1 + $0x618] sm:$0xff]
  %v244 = vld [vmem:[%s2] sm:$0xf]
  %v246 = vlaneseq
  %v247 = vshrl.u32 %v246, 7
  %v248 = vsub.s32 0, %v247
  %v249 = vrot.slane %v244, %v248
  %v250 = vlaneseq
  %v251 = vshrl.u32 %v250, 7
  %v252 = vsub.s32 1, %v251
  %v253 = vrot.slane %v244, %v252
  %v254 = vlaneseq
  %v255 = vshrl.u32 %v254, 7
  %v256 = vsub.s32 2, %v255
  %v257 = vrot.slane %v244, %v256
  %v258 = vlaneseq
  %v259 = vshrl.u32 %v258, 7
  %v260 = vsub.s32 3, %v259
  %v261 = vrot.slane %v244, %v260
  %v462 = vunpack.c.l.b16 %v48
  %v463 = vunpack.c.h.b16 %v48
  %v464 = vunpack.c.l.b16 %v49
  %v465 = vunpack.c.h.b16 %v49
  %v466 = vunpack.c.l.b16 %v50
  %v467 = vunpack.c.h.b16 %v50
  %v468 = vunpack.c.l.b16 %v51
  %v469 = vunpack.c.h.b16 %v51
  %v470 = vunpack.c.l.b16 %v52
  %v471 = vunpack.c.h.b16 %v52
  %v472 = vunpack.c.l.b16 %v53
  %v473 = vunpack.c.h.b16 %v53
  %v474 = vunpack.c.l.b16 %v54
  %v475 = vunpack.c.h.b16 %v54
  %v476 = vunpack.c.l.b16 %v55
  %v477 = vunpack.c.h.b16 %v55
  %v478 = vunpack.c.l.b16 %v56
  %v479 = vunpack.c.h.b16 %v56
  %v480 = vunpack.c.l.b16 %v57
  %v481 = vunpack.c.h.b16 %v57
  %v482 = vunpack.c.l.b16 %v58
  %v483 = vunpack.c.h.b16 %v58
  %v484 = vunpack.c.l.b16 %v59
  %v485 = vunpack.c.h.b16 %v59
  %v486 = vunpack.c.l.b16 %v60
  %v487 = vunpack.c.h.b16 %v60
  %v488 = vunpack.c.l.b16 %v61
  %v489 = vunpack.c.h.b16 %v61
  %v490 = vunpack.c.l.b16 %v62
  %v491 = vunpack.c.h.b16 %v62
  %v492 = vunpack.c.l.b16 %v63
  %v493 = vunpack.c.h.b16 %v63
  %v494 = vunpack.c.l.b16 %v64
  %v495 = vunpack.c.h.b16 %v64
  %v496 = vunpack.c.l.b16 %v65
  %v497 = vunpack.c.h.b16 %v65
  %v498 = vunpack.c.l.b16 %v66
  %v499 = vunpack.c.h.b16 %v66
  %v500 = vunpack.c.l.b16 %v67
  %v501 = vunpack.c.h.b16 %v67
  %v502 = vunpack.c.l.b16 %v68
  %v503 = vunpack.c.h.b16 %v68
  %v504 = vunpack.c.l.b16 %v69
  %v505 = vunpack.c.h.b16 %v69
  %v506 = vunpack.c.l.b16 %v70
  %v507 = vunpack.c.h.b16 %v70
  %v508 = vunpack.c.l.b16 %v71
  %v509 = vunpack.c.h.b16 %v71
  %v510 = vunpack.c.l.b16 %v72
  %v511 = vunpack.c.h.b16 %v72
  %v512 = vunpack.c.l.b16 %v73
  %v513 = vunpack.c.h.b16 %v73
  %v514 = vunpack.c.l.b16 %v74
  %v515 = vunpack.c.h.b16 %v74
  %v516 = vunpack.c.l.b16 %v75
  %v517 = vunpack.c.h.b16 %v75
  %v518 = vunpack.c.l.b16 %v76
  %v519 = vunpack.c.h.b16 %v76
  %v520 = vunpack.c.l.b16 %v77
  %v521 = vunpack.c.h.b16 %v77
  %v522 = vunpack.c.l.b16 %v78
  %v523 = vunpack.c.h.b16 %v78
  %v524 = vunpack.c.l.b16 %v79
  %v525 = vunpack.c.h.b16 %v79
  %v526 = vunpack.c.l.b16 %v80
  %v527 = vunpack.c.h.b16 %v80
  %v528 = vunpack.c.l.b16 %v81
  %v529 = vunpack.c.h.b16 %v81
  %v530 = vunpack.c.l.b16 %v82
  %v531 = vunpack.c.h.b16 %v82
  %v532 = vunpack.c.l.b16 %v83
  %v533 = vunpack.c.h.b16 %v83
  %v534 = vunpack.c.l.b16 %v84
  %v535 = vunpack.c.h.b16 %v84
  %v536 = vunpack.c.l.b16 %v85
  %v537 = vunpack.c.h.b16 %v85
  %v538 = vunpack.c.l.b16 %v86
  %v539 = vunpack.c.h.b16 %v86
  %v540 = vunpack.c.l.b16 %v87
  %v541 = vunpack.c.h.b16 %v87
  %v542 = vunpack.c.l.b16 %v88
  %v543 = vunpack.c.h.b16 %v88
  %v544 = vunpack.c.l.b16 %v89
  %v545 = vunpack.c.h.b16 %v89
  %v546 = vunpack.c.l.b16 %v90
  %v547 = vunpack.c.h.b16 %v90
  %v548 = vunpack.c.l.b16 %v91
  %v549 = vunpack.c.h.b16 %v91
  %v550 = vunpack.c.l.b16 %v92
  %v551 = vunpack.c.h.b16 %v92
  %v552 = vunpack.c.l.b16 %v93
  %v553 = vunpack.c.h.b16 %v93
  %v554 = vunpack.c.l.b16 %v94
  %v555 = vunpack.c.h.b16 %v94
  %v556 = vunpack.c.l.b16 %v95
  %v557 = vunpack.c.h.b16 %v95
  %v558 = vunpack.c.l.b16 %v96
  %v559 = vunpack.c.h.b16 %v96
  %v560 = vunpack.c.l.b16 %v97
  %v561 = vunpack.c.h.b16 %v97
  %v562 = vunpack.c.l.b16 %v98
  %v563 = vunpack.c.h.b16 %v98
  %v564 = vunpack.c.l.b16 %v99
  %v565 = vunpack.c.h.b16 %v99
  %v566 = vunpack.c.l.b16 %v100
  %v567 = vunpack.c.h.b16 %v100
  %v568 = vunpack.c.l.b16 %v101
  %v569 = vunpack.c.h.b16 %v101
  %v570 = vunpack.c.l.b16 %v102
  %v571 = vunpack.c.h.b16 %v102
  %v572 = vunpack.c.l.b16 %v103
  %v573 = vunpack.c.h.b16 %v103
  %v574 = vunpack.c.l.b16 %v104
  %v575 = vunpack.c.h.b16 %v104
  %v576 = vunpack.c.l.b16 %v105
  %v577 = vunpack.c.h.b16 %v105
  %v578 = vunpack.c.l.b16 %v106
  %v579 = vunpack.c.h.b16 %v106
  %v580 = vunpack.c.l.b16 %v107
  %v581 = vunpack.c.h.b16 %v107
  %v582 = vunpack.c.l.b16 %v108
  %v583 = vunpack.c.h.b16 %v108
  %v584 = vunpack.c.l.b16 %v109
  %v585 = vunpack.c.h.b16 %v109
  %v586 = vunpack.c.l.b16 %v110
  %v587 = vunpack.c.h.b16 %v110
  %v588 = vunpack.c.l.b16 %v111
  %v589 = vunpack.c.h.b16 %v111
  %v590 = vunpack.c.l.b16 %v112
  %v591 = vunpack.c.h.b16 %v112
  %v592 = vunpack.c.l.b16 %v113
  %v593 = vunpack.c.h.b16 %v113
  %v594 = vunpack.c.l.b16 %v114
  %v595 = vunpack.c.h.b16 %v114
  %v596 = vunpack.c.l.b16 %v115
  %v597 = vunpack.c.h.b16 %v115
  %v598 = vunpack.c.l.b16 %v116
  %v599 = vunpack.c.h.b16 %v116
  %v600 = vunpack.c.l.b16 %v117
  %v601 = vunpack.c.h.b16 %v117
  %v602 = vunpack.c.l.b16 %v118
  %v603 = vunpack.c.h.b16 %v118
  %v604 = vunpack.c.l.b16 %v119
  %v605 = vunpack.c.h.b16 %v119
  %v606 = vunpack.c.l.b16 %v120
  %v607 = vunpack.c.h.b16 %v120
  %v608 = vunpack.c.l.b16 %v121
  %v609 = vunpack.c.h.b16 %v121
  %v610 = vunpack.c.l.b16 %v122
  %v611 = vunpack.c.h.b16 %v122
  %v612 = vunpack.c.l.b16 %v123
  %v613 = vunpack.c.h.b16 %v123
  %v614 = vunpack.c.l.b16 %v124
  %v615 = vunpack.c.h.b16 %v124
  %v616 = vunpack.c.l.b16 %v125
  %v617 = vunpack.c.h.b16 %v125
  %v618 = vunpack.c.l.b16 %v126
  %v619 = vunpack.c.h.b16 %v126
  %v620 = vunpack.c.l.b16 %v127
  %v621 = vunpack.c.h.b16 %v127
  %v622 = vunpack.c.l.b16 %v128
  %v623 = vunpack.c.h.b16 %v128
  %v624 = vunpack.c.l.b16 %v129
  %v625 = vunpack.c.h.b16 %v129
  %v626 = vunpack.c.l.b16 %v130
  %v627 = vunpack.c.h.b16 %v130
  %v628 = vunpack.c.l.b16 %v131
  %v629 = vunpack.c.h.b16 %v131
  %v630 = vunpack.c.l.b16 %v132
  %v631 = vunpack.c.h.b16 %v132
  %v632 = vunpack.c.l.b16 %v133
  %v633 = vunpack.c.h.b16 %v133
  %v634 = vunpack.c.l.b16 %v134
  %v635 = vunpack.c.h.b16 %v134
  %v636 = vunpack.c.l.b16 %v135
  %v637 = vunpack.c.h.b16 %v135
  %v638 = vunpack.c.l.b16 %v136
  %v639 = vunpack.c.h.b16 %v136
  %v640 = vunpack.c.l.b16 %v137
  %v641 = vunpack.c.h.b16 %v137
  %v642 = vunpack.c.l.b16 %v138
  %v643 = vunpack.c.h.b16 %v138
  %v644 = vunpack.c.l.b16 %v139
  %v645 = vunpack.c.h.b16 %v139
  %v646 = vunpack.c.l.b16 %v140
  %v647 = vunpack.c.h.b16 %v140
  %v648 = vunpack.c.l.b16 %v141
  %v649 = vunpack.c.h.b16 %v141
  %v650 = vunpack.c.l.b16 %v142
  %v651 = vunpack.c.h.b16 %v142
  %v652 = vunpack.c.l.b16 %v143
  %v653 = vunpack.c.h.b16 %v143
  %v654 = vunpack.c.l.b16 %v144
  %v655 = vunpack.c.h.b16 %v144
  %v656 = vunpack.c.l.b16 %v145
  %v657 = vunpack.c.h.b16 %v145
  %v658 = vunpack.c.l.b16 %v146
  %v659 = vunpack.c.h.b16 %v146
  %v660 = vunpack.c.l.b16 %v147
  %v661 = vunpack.c.h.b16 %v147
  %v662 = vunpack.c.l.b16 %v148
  %v663 = vunpack.c.h.b16 %v148
  %v664 = vunpack.c.l.b16 %v149
  %v665 = vunpack.c.h.b16 %v149
  %v666 = vunpack.c.l.b16 %v150
  %v667 = vunpack.c.h.b16 %v150
  %v668 = vunpack.c.l.b16 %v151
  %v669 = vunpack.c.h.b16 %v151
  %v670 = vunpack.c.l.b16 %v152
  %v671 = vunpack.c.h.b16 %v152
  %v672 = vunpack.c.l.b16 %v153
  %v673 = vunpack.c.h.b16 %v153
  %v674 = vunpack.c.l.b16 %v154
  %v675 = vunpack.c.h.b16 %v154
  %v676 = vunpack.c.l.b16 %v155
  %v677 = vunpack.c.h.b16 %v155
  %v678 = vunpack.c.l.b16 %v156
  %v679 = vunpack.c.h.b16 %v156
  %v680 = vunpack.c.l.b16 %v157
  %v681 = vunpack.c.h.b16 %v157
  %v682 = vunpack.c.l.b16 %v158
  %v683 = vunpack.c.h.b16 %v158
  %v684 = vunpack.c.l.b16 %v159
  %v685 = vunpack.c.h.b16 %v159
  %v686 = vunpack.c.l.b16 %v160
  %v687 = vunpack.c.h.b16 %v160
  %v688 = vunpack.c.l.b16 %v161
  %v689 = vunpack.c.h.b16 %v161
  %v690 = vunpack.c.l.b16 %v162
  %v691 = vunpack.c.h.b16 %v162
  %v692 = vunpack.c.l.b16 %v163
  %v693 = vunpack.c.h.b16 %v163
  %v694 = vunpack.c.l.b16 %v164
  %v695 = vunpack.c.h.b16 %v164
  %v696 = vunpack.c.l.b16 %v165
  %v697 = vunpack.c.h.b16 %v165
  %v698 = vunpack.c.l.b16 %v166
  %v699 = vunpack.c.h.b16 %v166
  %v700 = vunpack.c.l.b16 %v167
  %v701 = vunpack.c.h.b16 %v167
  %v702 = vunpack.c.l.b16 %v168
  %v703 = vunpack.c.h.b16 %v168
  %v704 = vunpack.c.l.b16 %v169
  %v705 = vunpack.c.h.b16 %v169
  %v706 = vunpack.c.l.b16 %v170
  %v707 = vunpack.c.h.b16 %v170
  %v708 = vunpack.c.l.b16 %v171
  %v709 = vunpack.c.h.b16 %v171
  %v710 = vunpack.c.l.b16 %v172
  %v711 = vunpack.c.h.b16 %v172
  %v712 = vunpack.c.l.b16 %v173
  %v713 = vunpack.c.h.b16 %v173
  %v714 = vunpack.c.l.b16 %v174
  %v715 = vunpack.c.h.b16 %v174
  %v716 = vunpack.c.l.b16 %v175
  %v717 = vunpack.c.h.b16 %v175
  %v718 = vunpack.c.l.b16 %v176
  %v719 = vunpack.c.h.b16 %v176
  %v720 = vunpack.c.l.b16 %v177
  %v721 = vunpack.c.h.b16 %v177
  %v722 = vunpack.c.l.b16 %v178
  %v723 = vunpack.c.h.b16 %v178
  %v724 = vunpack.c.l.b16 %v179
  %v725 = vunpack.c.h.b16 %v179
  %v726 = vunpack.c.l.b16 %v180
  %v727 = vunpack.c.h.b16 %v180
  %v728 = vunpack.c.l.b16 %v181
  %v729 = vunpack.c.h.b16 %v181
  %v730 = vunpack.c.l.b16 %v182
  %v731 = vunpack.c.h.b16 %v182
  %v732 = vunpack.c.l.b16 %v183
  %v733 = vunpack.c.h.b16 %v183
  %v734 = vunpack.c.l.b16 %v184
  %v735 = vunpack.c.h.b16 %v184
  %v736 = vunpack.c.l.b16 %v185
  %v737 = vunpack.c.h.b16 %v185
  %v738 = vunpack.c.l.b16 %v186
  %v739 = vunpack.c.h.b16 %v186
  %v740 = vunpack.c.l.b16 %v187
  %v741 = vunpack.c.h.b16 %v187
  %v742 = vunpack.c.l.b16 %v188
  %v743 = vunpack.c.h.b16 %v188
  %v744 = vunpack.c.l.b16 %v189
  %v745 = vunpack.c.h.b16 %v189
  %v746 = vunpack.c.l.b16 %v190
  %v747 = vunpack.c.h.b16 %v190
  %v748 = vunpack.c.l.b16 %v191
  %v749 = vunpack.c.h.b16 %v191
  %v750 = vunpack.c.l.b16 %v192
  %v751 = vunpack.c.h.b16 %v192
  %v752 = vunpack.c.l.b16 %v193
  %v753 = vunpack.c.h.b16 %v193
  %v754 = vunpack.c.l.b16 %v194
  %v755 = vunpack.c.h.b16 %v194
  %v756 = vunpack.c.l.b16 %v195
  %v757 = vunpack.c.h.b16 %v195
  %v758 = vunpack.c.l.b16 %v196
  %v759 = vunpack.c.h.b16 %v196
  %v760 = vunpack.c.l.b16 %v197
  %v761 = vunpack.c.h.b16 %v197
  %v762 = vunpack.c.l.b16 %v198
  %v763 = vunpack.c.h.b16 %v198
  %v764 = vunpack.c.l.b16 %v199
  %v765 = vunpack.c.h.b16 %v199
  %v766 = vunpack.c.l.b16 %v200
  %v767 = vunpack.c.h.b16 %v200
  %v768 = vunpack.c.l.b16 %v201
  %v769 = vunpack.c.h.b16 %v201
  %v770 = vunpack.c.l.b16 %v202
  %v771 = vunpack.c.h.b16 %v202
  %v772 = vunpack.c.l.b16 %v203
  %v773 = vunpack.c.h.b16 %v203
  %v774 = vunpack.c.l.b16 %v204
  %v775 = vunpack.c.h.b16 %v204
  %v776 = vunpack.c.l.b16 %v205
  %v777 = vunpack.c.h.b16 %v205
  %v778 = vunpack.c.l.b16 %v206
  %v779 = vunpack.c.h.b16 %v206
  %v780 = vunpack.c.l.b16 %v207
  %v781 = vunpack.c.h.b16 %v207
  %v782 = vunpack.c.l.b16 %v208
  %v783 = vunpack.c.h.b16 %v208
  %v784 = vunpack.c.l.b16 %v209
  %v785 = vunpack.c.h.b16 %v209
  %v786 = vunpack.c.l.b16 %v210
  %v787 = vunpack.c.h.b16 %v210
  %v788 = vunpack.c.l.b16 %v211
  %v789 = vunpack.c.h.b16 %v211
  %v790 = vunpack.c.l.b16 %v212
  %v791 = vunpack.c.h.b16 %v212
  %v792 = vunpack.c.l.b16 %v213
  %v793 = vunpack.c.h.b16 %v213
  %v794 = vunpack.c.l.b16 %v214
  %v795 = vunpack.c.h.b16 %v214
  %v796 = vunpack.c.l.b16 %v215
  %v797 = vunpack.c.h.b16 %v215
  %v798 = vunpack.c.l.b16 %v216
  %v799 = vunpack.c.h.b16 %v216
  %v800 = vunpack.c.l.b16 %v217
  %v801 = vunpack.c.h.b16 %v217
  %v802 = vunpack.c.l.b16 %v218
  %v803 = vunpack.c.h.b16 %v218
  %v804 = vunpack.c.l.b16 %v219
  %v805 = vunpack.c.h.b16 %v219
  %v806 = vunpack.c.l.b16 %v220
  %v807 = vunpack.c.h.b16 %v220
  %v808 = vunpack.c.l.b16 %v221
  %v809 = vunpack.c.h.b16 %v221
  %v810 = vunpack.c.l.b16 %v222
  %v811 = vunpack.c.h.b16 %v222
  %v812 = vunpack.c.l.b16 %v223
  %v813 = vunpack.c.h.b16 %v223
  %v814 = vunpack.c.l.b16 %v224
  %v815 = vunpack.c.h.b16 %v224
  %v816 = vunpack.c.l.b16 %v225
  %v817 = vunpack.c.h.b16 %v225
  %v818 = vunpack.c.l.b16 %v226
  %v819 = vunpack.c.h.b16 %v226
  %v820 = vunpack.c.l.b16 %v227
  %v821 = vunpack.c.h.b16 %v227
  %v822 = vunpack.c.l.b16 %v228
  %v823 = vunpack.c.h.b16 %v228
  %v824 = vunpack.c.l.b16 %v229
  %v825 = vunpack.c.h.b16 %v229
  %v826 = vunpack.c.l.b16 %v230
  %v827 = vunpack.c.h.b16 %v230
  %v828 = vunpack.c.l.b16 %v231
  %v829 = vunpack.c.h.b16 %v231
  %v830 = vunpack.c.l.b16 %v232
  %v831 = vunpack.c.h.b16 %v232
  %v832 = vunpack.c.l.b16 %v233
  %v833 = vunpack.c.h.b16 %v233
  %v834 = vunpack.c.l.b16 %v234
  %v835 = vunpack.c.h.b16 %v234
  %v836 = vunpack.c.l.b16 %v235
  %v837 = vunpack.c.h.b16 %v235
  %v838 = vunpack.c.l.b16 %v236
  %v839 = vunpack.c.h.b16 %v236
  %v840 = vunpack.c.l.b16 %v237
  %v841 = vunpack.c.h.b16 %v237
  %v842 = vunpack.c.l.b16 %v238
  %v843 = vunpack.c.h.b16 %v238
  %v844 = vunpack.c.l.b16 %v239
  %v845 = vunpack.c.h.b16 %v239
  %v846 = vunpack.c.l.b16 %v240
  %v847 = vunpack.c.h.b16 %v240
  %v848 = vunpack.c.l.b16 %v241
  %v849 = vunpack.c.h.b16 %v241
  %v850 = vunpack.c.l.b16 %v242
  %v851 = vunpack.c.h.b16 %v242
  %v852 = vunpack.c.l.b16 %v243
  %v853 = vunpack.c.h.b16 %v243
  %v854 = vpack.c.b16 %v466, %v462
  %v855 = vpack.c.b16 %v467, %v463
  %v856 = vpack.c.b16 %v468, %v464
  %v857 = vpack.c.b16 %v469, %v465
  %v858 = vpack.c.b16 %v474, %v470
  %v859 = vpack.c.b16 %v475, %v471
  %v860 = vpack.c.b16 %v476, %v472
  %v861 = vpack.c.b16 %v477, %v473
  %v862 = vpack.c.b16 %v482, %v478
  %v863 = vpack.c.b16 %v483, %v479
  %v864 = vpack.c.b16 %v484, %v480
  %v865 = vpack.c.b16 %v485, %v481
  %v866 = vpack.c.b16 %v490, %v486
  %v867 = vpack.c.b16 %v491, %v487
  %v868 = vpack.c.b16 %v492, %v488
  %v869 = vpack.c.b16 %v493, %v489
  %v870 = vpack.c.b16 %v498, %v494
  %v871 = vpack.c.b16 %v499, %v495
  %v872 = vpack.c.b16 %v500, %v496
  %v873 = vpack.c.b16 %v501, %v497
  %v874 = vpack.c.b16 %v506, %v502
  %v875 = vpack.c.b16 %v507, %v503
  %v876 = vpack.c.b16 %v508, %v504
  %v877 = vpack.c.b16 %v509, %v505
  %v878 = vpack.c.b16 %v514, %v510
  %v879 = vpack.c.b16 %v515, %v511
  %v880 = vpack.c.b16 %v516, %v512
  %v881 = vpack.c.b16 %v517, %v513
  %v882 = vpack.c.b16 %v522, %v518
  %v883 = vpack.c.b16 %v523, %v519
  %v884 = vpack.c.b16 %v524, %v520
  %v885 = vpack.c.b16 %v525, %v521
  %v886 = vpack.c.b16 %v530, %v526
  %v887 = vpack.c.b16 %v531, %v527
  %v888 = vpack.c.b16 %v532, %v528
  %v889 = vpack.c.b16 %v533, %v529
  %v890 = vpack.c.b16 %v538, %v534
  %v891 = vpack.c.b16 %v539, %v535
  %v892 = vpack.c.b16 %v540, %v536
  %v893 = vpack.c.b16 %v541, %v537
  %v894 = vpack.c.b16 %v546, %v542
  %v895 = vpack.c.b16 %v547, %v543
  %v896 = vpack.c.b16 %v548, %v544
  %v897 = vpack.c.b16 %v549, %v545
  %v898 = vpack.c.b16 %v554, %v550
  %v899 = vpack.c.b16 %v555, %v551
  %v900 = vpack.c.b16 %v556, %v552
  %v901 = vpack.c.b16 %v557, %v553
  %v902 = vpack.c.b16 %v562, %v558
  %v903 = vpack.c.b16 %v563, %v559
  %v904 = vpack.c.b16 %v564, %v560
  %v905 = vpack.c.b16 %v565, %v561
  %v906 = vpack.c.b16 %v570, %v566
  %v907 = vpack.c.b16 %v571, %v567
  %v908 = vpack.c.b16 %v572, %v568
  %v909 = vpack.c.b16 %v573, %v569
  %v910 = vpack.c.b16 %v578, %v574
  %v911 = vpack.c.b16 %v579, %v575
  %v912 = vpack.c.b16 %v580, %v576
  %v913 = vpack.c.b16 %v581, %v577
  %v914 = vpack.c.b16 %v586, %v582
  %v915 = vpack.c.b16 %v587, %v583
  %v916 = vpack.c.b16 %v588, %v584
  %v917 = vpack.c.b16 %v589, %v585
  %v918 = vpack.c.b16 %v594, %v590
  %v919 = vpack.c.b16 %v595, %v591
  %v920 = vpack.c.b16 %v596, %v592
  %v921 = vpack.c.b16 %v597, %v593
  %v922 = vpack.c.b16 %v602, %v598
  %v923 = vpack.c.b16 %v603, %v599
  %v924 = vpack.c.b16 %v604, %v600
  %v925 = vpack.c.b16 %v605, %v601
  %v926 = vpack.c.b16 %v610, %v606
  %v927 = vpack.c.b16 %v611, %v607
  %v928 = vpack.c.b16 %v612, %v608
  %v929 = vpack.c.b16 %v613, %v609
  %v930 = vpack.c.b16 %v618, %v614
  %v931 = vpack.c.b16 %v619, %v615
  %v932 = vpack.c.b16 %v620, %v616
  %v933 = vpack.c.b16 %v621, %v617
  %v934 = vpack.c.b16 %v626, %v622
  %v935 = vpack.c.b16 %v627, %v623
  %v936 = vpack.c.b16 %v628, %v624
  %v937 = vpack.c.b16 %v629, %v625
  %v938 = vpack.c.b16 %v634, %v630
  %v939 = vpack.c.b16 %v635, %v631
  %v940 = vpack.c.b16 %v636, %v632
  %v941 = vpack.c.b16 %v637, %v633
  %v942 = vpack.c.b16 %v642, %v638
  %v943 = vpack.c.b16 %v643, %v639
  %v944 = vpack.c.b16 %v644, %v640
  %v945 = vpack.c.b16 %v645, %v641
  %v946 = vpack.c.b16 %v650, %v646
  %v947 = vpack.c.b16 %v651, %v647
  %v948 = vpack.c.b16 %v652, %v648
  %v949 = vpack.c.b16 %v653, %v649
  %v950 = vpack.c.b16 %v658, %v654
  %v951 = vpack.c.b16 %v659, %v655
  %v952 = vpack.c.b16 %v660, %v656
  %v953 = vpack.c.b16 %v661, %v657
  %v954 = vpack.c.b16 %v666, %v662
  %v955 = vpack.c.b16 %v667, %v663
  %v956 = vpack.c.b16 %v668, %v664
  %v957 = vpack.c.b16 %v669, %v665
  %v958 = vpack.c.b16 %v674, %v670
  %v959 = vpack.c.b16 %v675, %v671
  %v960 = vpack.c.b16 %v676, %v672
  %v961 = vpack.c.b16 %v677, %v673
  %v962 = vpack.c.b16 %v682, %v678
  %v963 = vpack.c.b16 %v683, %v679
  %v964 = vpack.c.b16 %v684, %v680
  %v965 = vpack.c.b16 %v685, %v681
  %v966 = vpack.c.b16 %v690, %v686
  %v967 = vpack.c.b16 %v691, %v687
  %v968 = vpack.c.b16 %v692, %v688
  %v969 = vpack.c.b16 %v693, %v689
  %v970 = vpack.c.b16 %v698, %v694
  %v971 = vpack.c.b16 %v699, %v695
  %v972 = vpack.c.b16 %v700, %v696
  %v973 = vpack.c.b16 %v701, %v697
  %v974 = vpack.c.b16 %v706, %v702
  %v975 = vpack.c.b16 %v707, %v703
  %v976 = vpack.c.b16 %v708, %v704
  %v977 = vpack.c.b16 %v709, %v705
  %v978 = vpack.c.b16 %v714, %v710
  %v979 = vpack.c.b16 %v715, %v711
  %v980 = vpack.c.b16 %v716, %v712
  %v981 = vpack.c.b16 %v717, %v713
  %v982 = vpack.c.b16 %v722, %v718
  %v983 = vpack.c.b16 %v723, %v719
  %v984 = vpack.c.b16 %v724, %v720
  %v985 = vpack.c.b16 %v725, %v721
  %v986 = vpack.c.b16 %v730, %v726
  %v987 = vpack.c.b16 %v731, %v727
  %v988 = vpack.c.b16 %v732, %v728
  %v989 = vpack.c.b16 %v733, %v729
  %v990 = vpack.c.b16 %v738, %v734
  %v991 = vpack.c.b16 %v739, %v735
  %v992 = vpack.c.b16 %v740, %v736
  %v993 = vpack.c.b16 %v741, %v737
  %v994 = vpack.c.b16 %v746, %v742
  %v995 = vpack.c.b16 %v747, %v743
  %v996 = vpack.c.b16 %v748, %v744
  %v997 = vpack.c.b16 %v749, %v745
  %v998 = vpack.c.b16 %v754, %v750
  %v999 = vpack.c.b16 %v755, %v751
  %v1000 = vpack.c.b16 %v756, %v752
  %v1001 = vpack.c.b16 %v757, %v753
  %v1002 = vpack.c.b16 %v762, %v758
  %v1003 = vpack.c.b16 %v763, %v759
  %v1004 = vpack.c.b16 %v764, %v760
  %v1005 = vpack.c.b16 %v765, %v761
  %v1006 = vpack.c.b16 %v770, %v766
  %v1007 = vpack.c.b16 %v771, %v767
  %v1008 = vpack.c.b16 %v772, %v768
  %v1009 = vpack.c.b16 %v773, %v769
  %v1010 = vpack.c.b16 %v778, %v774
  %v1011 = vpack.c.b16 %v779, %v775
  %v1012 = vpack.c.b16 %v780, %v776
  %v1013 = vpack.c.b16 %v781, %v777
  %v1014 = vpack.c.b16 %v786, %v782
  %v1015 = vpack.c.b16 %v787, %v783
  %v1016 = vpack.c.b16 %v788, %v784
  %v1017 = vpack.c.b16 %v789, %v785
  %v1018 = vpack.c.b16 %v794, %v790
  %v1019 = vpack.c.b16 %v795, %v791
  %v1020 = vpack.c.b16 %v796, %v792
  %v1021 = vpack.c.b16 %v797, %v793
  %v1022 = vpack.c.b16 %v802, %v798
  %v1023 = vpack.c.b16 %v803, %v799
  %v1024 = vpack.c.b16 %v804, %v800
  %v1025 = vpack.c.b16 %v805, %v801
  %v1026 = vpack.c.b16 %v810, %v806
  %v1027 = vpack.c.b16 %v811, %v807
  %v1028 = vpack.c.b16 %v812, %v808
  %v1029 = vpack.c.b16 %v813, %v809
  %v1030 = vpack.c.b16 %v818, %v814
  %v1031 = vpack.c.b16 %v819, %v815
  %v1032 = vpack.c.b16 %v820, %v816
  %v1033 = vpack.c.b16 %v821, %v817
  %v1034 = vpack.c.b16 %v826, %v822
  %v1035 = vpack.c.b16 %v827, %v823
  %v1036 = vpack.c.b16 %v828, %v824
  %v1037 = vpack.c.b16 %v829, %v825
  %v1038 = vpack.c.b16 %v834, %v830
  %v1039 = vpack.c.b16 %v835, %v831
  %v1040 = vpack.c.b16 %v836, %v832
  %v1041 = vpack.c.b16 %v837, %v833
  %v1042 = vpack.c.b16 %v842, %v838
  %v1043 = vpack.c.b16 %v843, %v839
  %v1044 = vpack.c.b16 %v844, %v840
  %v1045 = vpack.c.b16 %v845, %v841
  %v1046 = vpack.c.b16 %v850, %v846
  %v1047 = vpack.c.b16 %v851, %v847
  %v1048 = vpack.c.b16 %v852, %v848
  %v1049 = vpack.c.b16 %v853, %v849
  %vm1246 = vcmask 130048
  %v1248 = vsel %vm1246, %v47, 0
  %1250 = vmatprep.subr.bf16.mxu0 %v883
  %1251 = vmatpush1.bf16.msra.mxu0 %v882
  %1252 = vmatprep.subr.bf16.mxu0 %v879
  %1253 = vmatpush1.bf16.msra.mxu0 %v878
  %1254 = vmatprep.subr.bf16.mxu0 %v875
  %1255 = vmatpush1.bf16.msra.mxu0 %v874
  %1256 = vmatprep.subr.bf16.mxu0 %v871
  %1257 = vmatpush1.bf16.msra.mxu0 %v870
  %1258 = vmatprep.subr.bf16.mxu0 %v867
  %1259 = vmatpush1.bf16.msra.mxu0 %v866
  %1260 = vmatprep.subr.bf16.mxu0 %v863
  %1261 = vmatpush1.bf16.msra.mxu0 %v862
  %1262 = vmatprep.subr.bf16.mxu0 %v859
  %1263 = vmatpush1.bf16.msra.mxu0 %v858
  %1264 = vmatprep.subr.bf16.mxu0 %v855
  %1265 = vmatpush1.bf16.msra.mxu0 %v854
  %1266 = vmatprep.subr.bf16.mxu0 %v915
  %1267 = vmatpush2.bf16.msra.mxu0 %v914
  %1268 = vmatprep.subr.bf16.mxu0 %v911
  %1269 = vmatpush2.bf16.msra.mxu0 %v910
  %1270 = vmatprep.subr.bf16.mxu0 %v907
  %1271 = vmatpush2.bf16.msra.mxu0 %v906
  %1272 = vmatprep.subr.bf16.mxu0 %v903
  %1273 = vmatpush2.bf16.msra.mxu0 %v902
  %1274 = vmatprep.subr.bf16.mxu0 %v899
  %1275 = vmatpush2.bf16.msra.mxu0 %v898
  %1276 = vmatprep.subr.bf16.mxu0 %v895
  %1277 = vmatpush2.bf16.msra.mxu0 %v894
  %1278 = vmatprep.subr.bf16.mxu0 %v891
  %1279 = vmatpush2.bf16.msra.mxu0 %v890
  %1280 = vmatprep.subr.bf16.mxu0 %v887
  %1281 = vmatpush2.bf16.msra.mxu0 %v886
  %1282 = vmatprep.mubr.bf16.mxu0 %v42
  %1283 = vmatmul.mubr.bf16.gmra.mxu0 %v41
  %v1284 = vpop.f32.mrf.mxu0
  %v1285 = vadd.f32 %v249, %v1284
  %v1286 = vpop.f32.mrf.mxu0
  %v1287 = vadd.f32 %v253, %v1286
  %v1288 = vpop.f32.mrf.mxu0
  %v1289 = vadd.f32 %v249, %v1288
  %v1290 = vpop.f32.mrf.mxu0
  %v1291 = vadd.f32 %v253, %v1290
  %1292 = vdwg.mxu0
  %1293 = vmatprep.subr.bf16.mxu0 %v947
  %1294 = vmatpush1.bf16.msra.mxu0 %v946
  %1295 = vmatprep.subr.bf16.mxu0 %v943
  %1296 = vmatpush1.bf16.msra.mxu0 %v942
  %1297 = vmatprep.subr.bf16.mxu0 %v939
  %1298 = vmatpush1.bf16.msra.mxu0 %v938
  %1299 = vmatprep.subr.bf16.mxu0 %v935
  %1300 = vmatpush1.bf16.msra.mxu0 %v934
  %1301 = vmatprep.subr.bf16.mxu0 %v931
  %1302 = vmatpush1.bf16.msra.mxu0 %v930
  %1303 = vmatprep.subr.bf16.mxu0 %v927
  %1304 = vmatpush1.bf16.msra.mxu0 %v926
  %1305 = vmatprep.subr.bf16.mxu0 %v923
  %1306 = vmatpush1.bf16.msra.mxu0 %v922
  %1307 = vmatprep.subr.bf16.mxu0 %v919
  %1308 = vmatpush1.bf16.msra.mxu0 %v918
  %1309 = vmatprep.subr.bf16.mxu0 %v979
  %1310 = vmatpush2.bf16.msra.mxu0 %v978
  %1311 = vmatprep.subr.bf16.mxu0 %v975
  %1312 = vmatpush2.bf16.msra.mxu0 %v974
  %1313 = vmatprep.subr.bf16.mxu0 %v971
  %1314 = vmatpush2.bf16.msra.mxu0 %v970
  %1315 = vmatprep.subr.bf16.mxu0 %v967
  %1316 = vmatpush2.bf16.msra.mxu0 %v966
  %1317 = vmatprep.subr.bf16.mxu0 %v963
  %1318 = vmatpush2.bf16.msra.mxu0 %v962
  %1319 = vmatprep.subr.bf16.mxu0 %v959
  %1320 = vmatpush2.bf16.msra.mxu0 %v958
  %1321 = vmatprep.subr.bf16.mxu0 %v955
  %1322 = vmatpush2.bf16.msra.mxu0 %v954
  %1323 = vmatprep.subr.bf16.mxu0 %v951
  %1324 = vmatpush2.bf16.msra.mxu0 %v950
  %1325 = vmatprep.mubr.bf16.mxu0 %v44
  %1326 = vmatmul.mubr.bf16.gmra.mxu0 %v43
  %v1327 = vpop.f32.mrf.mxu0
  %v1328 = vadd.f32 %v1285, %v1327
  %v1329 = vpop.f32.mrf.mxu0
  %v1330 = vadd.f32 %v1287, %v1329
  %v1331 = vpop.f32.mrf.mxu0
  %v1332 = vadd.f32 %v1289, %v1331
  %v1333 = vpop.f32.mrf.mxu0
  %v1334 = vadd.f32 %v1291, %v1333
  %1335 = vdwg.mxu0
  %1336 = vmatprep.subr.bf16.mxu0 %v1011
  %1337 = vmatpush1.bf16.msra.mxu0 %v1010
  %1338 = vmatprep.subr.bf16.mxu0 %v1007
  %1339 = vmatpush1.bf16.msra.mxu0 %v1006
  %1340 = vmatprep.subr.bf16.mxu0 %v1003
  %1341 = vmatpush1.bf16.msra.mxu0 %v1002
  %1342 = vmatprep.subr.bf16.mxu0 %v999
  %1343 = vmatpush1.bf16.msra.mxu0 %v998
  %1344 = vmatprep.subr.bf16.mxu0 %v995
  %1345 = vmatpush1.bf16.msra.mxu0 %v994
  %1346 = vmatprep.subr.bf16.mxu0 %v991
  %1347 = vmatpush1.bf16.msra.mxu0 %v990
  %1348 = vmatprep.subr.bf16.mxu0 %v987
  %1349 = vmatpush1.bf16.msra.mxu0 %v986
  %1350 = vmatprep.subr.bf16.mxu0 %v983
  %1351 = vmatpush1.bf16.msra.mxu0 %v982
  %1352 = vmatprep.subr.bf16.mxu0 %v1043
  %1353 = vmatpush2.bf16.msra.mxu0 %v1042
  %1354 = vmatprep.subr.bf16.mxu0 %v1039
  %1355 = vmatpush2.bf16.msra.mxu0 %v1038
  %1356 = vmatprep.subr.bf16.mxu0 %v1035
  %1357 = vmatpush2.bf16.msra.mxu0 %v1034
  %1358 = vmatprep.subr.bf16.mxu0 %v1031
  %1359 = vmatpush2.bf16.msra.mxu0 %v1030
  %1360 = vmatprep.subr.bf16.mxu0 %v1027
  %1361 = vmatpush2.bf16.msra.mxu0 %v1026
  %1362 = vmatprep.subr.bf16.mxu0 %v1023
  %1363 = vmatpush2.bf16.msra.mxu0 %v1022
  %1364 = vmatprep.subr.bf16.mxu0 %v1019
  %1365 = vmatpush2.bf16.msra.mxu0 %v1018
  %1366 = vmatprep.subr.bf16.mxu0 %v1015
  %1367 = vmatpush2.bf16.msra.mxu0 %v1014
  %1368 = vmatprep.mubr.bf16.mxu0 %v46
  %1369 = vmatmul.mubr.bf16.gmra.mxu0 %v45
  %v1370 = vpop.f32.mrf.mxu0
  %v1371 = vadd.f32 %v1328, %v1370
  %v1372 = vpop.f32.mrf.mxu0
  %v1373 = vadd.f32 %v1330, %v1372
  %v1374 = vpop.f32.mrf.mxu0
  %v1375 = vadd.f32 %v1332, %v1374
  %v1376 = vpop.f32.mrf.mxu0
  %v1377 = vadd.f32 %v1334, %v1376
  %1378 = vdwg.mxu0
  %1379 = vmatprep.subr.bf16.mxu0 0
  %1380 = vmatpush1.bf16.msra.mxu0 0
  %1381 = vmatprep.subr.bf16.mxu0 0
  %1382 = vmatpush1.bf16.msra.mxu0 0
  %1383 = vmatprep.subr.bf16.mxu0 0
  %1384 = vmatpush1.bf16.msra.mxu0 0
  %1385 = vmatprep.subr.bf16.mxu0 0
  %1386 = vmatpush1.bf16.msra.mxu0 0
  %1387 = vmatprep.subr.bf16.mxu0 0
  %1388 = vmatpush1.bf16.msra.mxu0 0
  %1389 = vmatprep.subr.bf16.mxu0 0
  %1390 = vmatpush1.bf16.msra.mxu0 0
  %1391 = vmatprep.subr.bf16.mxu0 0
  %1392 = vmatpush1.bf16.msra.mxu0 0
  %1393 = vmatprep.subr.bf16.mxu0 %v1047
  %1394 = vmatpush1.bf16.msra.mxu0 %v1046
  %1395 = vmatprep.subr.bf16.mxu0 0
  %1396 = vmatpush2.bf16.msra.mxu0 0
  %1397 = vmatprep.subr.bf16.mxu0 0
  %1398 = vmatpush2.bf16.msra.mxu0 0
  %1399 = vmatprep.subr.bf16.mxu0 0
  %1400 = vmatpush2.bf16.msra.mxu0 0
  %1401 = vmatprep.subr.bf16.mxu0 0
  %1402 = vmatpush2.bf16.msra.mxu0 0
  %1403 = vmatprep.subr.bf16.mxu0 0
  %1404 = vmatpush2.bf16.msra.mxu0 0
  %1405 = vmatprep.subr.bf16.mxu0 0
  %1406 = vmatpush2.bf16.msra.mxu0 0
  %1407 = vmatprep.subr.bf16.mxu0 0
  %1408 = vmatpush2.bf16.msra.mxu0 0
  %1409 = vmatprep.subr.bf16.mxu0 0
  %1410 = vmatpush2.bf16.msra.mxu0 0
  %1411 = vmatprep.mubr.bf16.mxu0 0
  %1412 = vmatmul.mubr.bf16.gmra.mxu0 %v1248
  %v1413 = vpop.f32.mrf.mxu0
  %v1414 = vadd.f32 %v1371, %v1413
  %v1415 = vpop.f32.mrf.mxu0
  %v1416 = vadd.f32 %v1373, %v1415
  %v1417 = vpop.f32.mrf.mxu0
  %v1418 = vadd.f32 %v1375, %v1417
  %v1419 = vpop.f32.mrf.mxu0
  %v1420 = vadd.f32 %v1377, %v1419
  %1421 = vdwg.mxu0
  %1422 = vmatprep.subr.bf16.mxu0 %v885
  %1423 = vmatpush1.bf16.msra.mxu0 %v884
  %1424 = vmatprep.subr.bf16.mxu0 %v881
  %1425 = vmatpush1.bf16.msra.mxu0 %v880
  %1426 = vmatprep.subr.bf16.mxu0 %v877
  %1427 = vmatpush1.bf16.msra.mxu0 %v876
  %1428 = vmatprep.subr.bf16.mxu0 %v873
  %1429 = vmatpush1.bf16.msra.mxu0 %v872
  %1430 = vmatprep.subr.bf16.mxu0 %v869
  %1431 = vmatpush1.bf16.msra.mxu0 %v868
  %1432 = vmatprep.subr.bf16.mxu0 %v865
  %1433 = vmatpush1.bf16.msra.mxu0 %v864
  %1434 = vmatprep.subr.bf16.mxu0 %v861
  %1435 = vmatpush1.bf16.msra.mxu0 %v860
  %1436 = vmatprep.subr.bf16.mxu0 %v857
  %1437 = vmatpush1.bf16.msra.mxu0 %v856
  %1438 = vmatprep.subr.bf16.mxu0 %v917
  %1439 = vmatpush2.bf16.msra.mxu0 %v916
  %1440 = vmatprep.subr.bf16.mxu0 %v913
  %1441 = vmatpush2.bf16.msra.mxu0 %v912
  %1442 = vmatprep.subr.bf16.mxu0 %v909
  %1443 = vmatpush2.bf16.msra.mxu0 %v908
  %1444 = vmatprep.subr.bf16.mxu0 %v905
  %1445 = vmatpush2.bf16.msra.mxu0 %v904
  %1446 = vmatprep.subr.bf16.mxu0 %v901
  %1447 = vmatpush2.bf16.msra.mxu0 %v900
  %1448 = vmatprep.subr.bf16.mxu0 %v897
  %1449 = vmatpush2.bf16.msra.mxu0 %v896
  %1450 = vmatprep.subr.bf16.mxu0 %v893
  %1451 = vmatpush2.bf16.msra.mxu0 %v892
  %1452 = vmatprep.subr.bf16.mxu0 %v889
  %1453 = vmatpush2.bf16.msra.mxu0 %v888
  %1454 = vmatprep.mubr.bf16.mxu0 %v42
  %1455 = vmatmul.mubr.bf16.gmra.mxu0 %v41
  %v1456 = vpop.f32.mrf.mxu0
  %v1457 = vadd.f32 %v257, %v1456
  %v1458 = vpop.f32.mrf.mxu0
  %v1459 = vadd.f32 %v261, %v1458
  %v1460 = vpop.f32.mrf.mxu0
  %v1461 = vadd.f32 %v257, %v1460
  %v1462 = vpop.f32.mrf.mxu0
  %v1463 = vadd.f32 %v261, %v1462
  %1464 = vdwg.mxu0
  %1465 = vmatprep.subr.bf16.mxu0 %v949
  %1466 = vmatpush1.bf16.msra.mxu0 %v948
  %1467 = vmatprep.subr.bf16.mxu0 %v945
  %1468 = vmatpush1.bf16.msra.mxu0 %v944
  %1469 = vmatprep.subr.bf16.mxu0 %v941
  %1470 = vmatpush1.bf16.msra.mxu0 %v940
  %1471 = vmatprep.subr.bf16.mxu0 %v937
  %1472 = vmatpush1.bf16.msra.mxu0 %v936
  %1473 = vmatprep.subr.bf16.mxu0 %v933
  %1474 = vmatpush1.bf16.msra.mxu0 %v932
  %1475 = vmatprep.subr.bf16.mxu0 %v929
  %1476 = vmatpush1.bf16.msra.mxu0 %v928
  %1477 = vmatprep.subr.bf16.mxu0 %v925
  %1478 = vmatpush1.bf16.msra.mxu0 %v924
  %1479 = vmatprep.subr.bf16.mxu0 %v921
  %1480 = vmatpush1.bf16.msra.mxu0 %v920
  %1481 = vmatprep.subr.bf16.mxu0 %v981
  %1482 = vmatpush2.bf16.msra.mxu0 %v980
  %1483 = vmatprep.subr.bf16.mxu0 %v977
  %1484 = vmatpush2.bf16.msra.mxu0 %v976
  %1485 = vmatprep.subr.bf16.mxu0 %v973
  %1486 = vmatpush2.bf16.msra.mxu0 %v972
  %1487 = vmatprep.subr.bf16.mxu0 %v969
  %1488 = vmatpush2.bf16.msra.mxu0 %v968
  %1489 = vmatprep.subr.bf16.mxu0 %v965
  %1490 = vmatpush2.bf16.msra.mxu0 %v964
  %1491 = vmatprep.subr.bf16.mxu0 %v961
  %1492 = vmatpush2.bf16.msra.mxu0 %v960
  %1493 = vmatprep.subr.bf16.mxu0 %v957
  %1494 = vmatpush2.bf16.msra.mxu0 %v956
  %1495 = vmatprep.subr.bf16.mxu0 %v953
  %1496 = vmatpush2.bf16.msra.mxu0 %v952
  %1497 = vmatprep.mubr.bf16.mxu0 %v44
  %1498 = vmatmul.mubr.bf16.gmra.mxu0 %v43
  %v1499 = vpop.f32.mrf.mxu0
  %v1500 = vadd.f32 %v1457, %v1499
  %v1501 = vpop.f32.mrf.mxu0
  %v1502 = vadd.f32 %v1459, %v1501
  %v1503 = vpop.f32.mrf.mxu0
  %v1504 = vadd.f32 %v1461, %v1503
  %v1505 = vpop.f32.mrf.mxu0
  %v1506 = vadd.f32 %v1463, %v1505
  %1507 = vdwg.mxu0
  %1508 = vmatprep.subr.bf16.mxu0 %v1013
  %1509 = vmatpush1.bf16.msra.mxu0 %v1012
  %1510 = vmatprep.subr.bf16.mxu0 %v1009
  %1511 = vmatpush1.bf16.msra.mxu0 %v1008
  %1512 = vmatprep.subr.bf16.mxu0 %v1005
  %1513 = vmatpush1.bf16.msra.mxu0 %v1004
  %1514 = vmatprep.subr.bf16.mxu0 %v1001
  %1515 = vmatpush1.bf16.msra.mxu0 %v1000
  %1516 = vmatprep.subr.bf16.mxu0 %v997
  %1517 = vmatpush1.bf16.msra.mxu0 %v996
  %1518 = vmatprep.subr.bf16.mxu0 %v993
  %1519 = vmatpush1.bf16.msra.mxu0 %v992
  %1520 = vmatprep.subr.bf16.mxu0 %v989
  %1521 = vmatpush1.bf16.msra.mxu0 %v988
  %1522 = vmatprep.subr.bf16.mxu0 %v985
  %1523 = vmatpush1.bf16.msra.mxu0 %v984
  %1524 = vmatprep.subr.bf16.mxu0 %v1045
  %1525 = vmatpush2.bf16.msra.mxu0 %v1044
  %1526 = vmatprep.subr.bf16.mxu0 %v1041
  %1527 = vmatpush2.bf16.msra.mxu0 %v1040
  %1528 = vmatprep.subr.bf16.mxu0 %v1037
  %1529 = vmatpush2.bf16.msra.mxu0 %v1036
  %1530 = vmatprep.subr.bf16.mxu0 %v1033
  %1531 = vmatpush2.bf16.msra.mxu0 %v1032
  %1532 = vmatprep.subr.bf16.mxu0 %v1029
  %1533 = vmatpush2.bf16.msra.mxu0 %v1028
  %1534 = vmatprep.subr.bf16.mxu0 %v1025
  %1535 = vmatpush2.bf16.msra.mxu0 %v1024
  %1536 = vmatprep.subr.bf16.mxu0 %v1021
  %1537 = vmatpush2.bf16.msra.mxu0 %v1020
  %1538 = vmatprep.subr.bf16.mxu0 %v1017
  %1539 = vmatpush2.bf16.msra.mxu0 %v1016
  %1540 = vmatprep.mubr.bf16.mxu0 %v46
  %1541 = vmatmul.mubr.bf16.gmra.mxu0 %v45
  %v1542 = vpop.f32.mrf.mxu0
  %v1543 = vadd.f32 %v1500, %v1542
  %v1544 = vpop.f32.mrf.mxu0
  %v1545 = vadd.f32 %v1502, %v1544
  %v1546 = vpop.f32.mrf.mxu0
  %v1547 = vadd.f32 %v1504, %v1546
  %v1548 = vpop.f32.mrf.mxu0
  %v1549 = vadd.f32 %v1506, %v1548
  %1550 = vdwg.mxu0
  %1551 = vmatprep.subr.bf16.mxu0 0
  %1552 = vmatpush1.bf16.msra.mxu0 0
  %1553 = vmatprep.subr.bf16.mxu0 0
  %1554 = vmatpush1.bf16.msra.mxu0 0
  %1555 = vmatprep.subr.bf16.mxu0 0
  %1556 = vmatpush1.bf16.msra.mxu0 0
  %1557 = vmatprep.subr.bf16.mxu0 0
  %1558 = vmatpush1.bf16.msra.mxu0 0
  %1559 = vmatprep.subr.bf16.mxu0 0
  %1560 = vmatpush1.bf16.msra.mxu0 0
  %1561 = vmatprep.subr.bf16.mxu0 0
  %1562 = vmatpush1.bf16.msra.mxu0 0
  %1563 = vmatprep.subr.bf16.mxu0 0
  %1564 = vmatpush1.bf16.msra.mxu0 0
  %1565 = vmatprep.subr.bf16.mxu0 %v1049
  %1566 = vmatpush1.bf16.msra.mxu0 %v1048
  %1567 = vmatprep.subr.bf16.mxu0 0
  %1568 = vmatpush2.bf16.msra.mxu0 0
  %1569 = vmatprep.subr.bf16.mxu0 0
  %1570 = vmatpush2.bf16.msra.mxu0 0
  %1571 = vmatprep.subr.bf16.mxu0 0
  %1572 = vmatpush2.bf16.msra.mxu0 0
  %1573 = vmatprep.subr.bf16.mxu0 0
  %1574 = vmatpush2.bf16.msra.mxu0 0
  %1575 = vmatprep.subr.bf16.mxu0 0
  %1576 = vmatpush2.bf16.msra.mxu0 0
  %1577 = vmatprep.subr.bf16.mxu0 0
  %1578 = vmatpush2.bf16.msra.mxu0 0
  %1579 = vmatprep.subr.bf16.mxu0 0
  %1580 = vmatpush2.bf16.msra.mxu0 0
  %1581 = vmatprep.subr.bf16.mxu0 0
  %1582 = vmatpush2.bf16.msra.mxu0 0
  %1583 = vmatprep.mubr.bf16.mxu0 0
  %1584 = vmatmul.mubr.bf16.gmra.mxu0 %v1248
  %v1585 = vpop.f32.mrf.mxu0
  %v1586 = vadd.f32 %v1543, %v1585
  %v1587 = vpop.f32.mrf.mxu0
  %v1588 = vadd.f32 %v1545, %v1587
  %v1589 = vpop.f32.mrf.mxu0
  %v1590 = vadd.f32 %v1547, %v1589
  %v1591 = vpop.f32.mrf.mxu0
  %v1592 = vadd.f32 %v1549, %v1591
  %1593 = vdwg.mxu0
  %v1594 = vmax.f32 %v1414, 0.0
  %v1595 = vmax.f32 %v1416, 0.0
  %v1596 = vmax.f32 %v1586, 0.0
  %v1597 = vmax.f32 %v1588, 0.0
  %v1598 = vmax.f32 %v1418, 0.0
  %v1599 = vmax.f32 %v1420, 0.0
  %v1600 = vmax.f32 %v1590, 0.0
  %v1601 = vmax.f32 %v1592, 0.0
  %v1602 = vpack.c.bf16 %v1598, %v1594
  %v1603 = vpack.c.bf16 %v1599, %v1595
  %v1604 = vpack.c.bf16 %v1600, %v1596
  %v1605 = vpack.c.bf16 %v1601, %v1597
  %v1606 = vld [vmem:[%s3] sm:$0xff]
  %v1607 = vld [vmem:[%s3 + $0x8] sm:$0xff]
  %v1608 = vld [vmem:[%s3 + $0x10] sm:$0xff]
  %v1609 = vld [vmem:[%s3 + $0x18] sm:$0xff]
  %v1610 = vld [vmem:[%s3 + $0x20] sm:$0xff]
  %v1611 = vld [vmem:[%s3 + $0x28] sm:$0xff]
  %v1612 = vld [vmem:[%s3 + $0x30] sm:$0xff]
  %v1613 = vld [vmem:[%s3 + $0x38] sm:$0xff]
  %v1614 = vld [vmem:[%s3 + $0x40] sm:$0xff]
  %v1615 = vld [vmem:[%s3 + $0x48] sm:$0xff]
  %v1616 = vld [vmem:[%s3 + $0x50] sm:$0xff]
  %v1617 = vld [vmem:[%s3 + $0x58] sm:$0xff]
  %v1618 = vld [vmem:[%s3 + $0x60] sm:$0xff]
  %v1619 = vld [vmem:[%s3 + $0x68] sm:$0xff]
  %v1620 = vld [vmem:[%s3 + $0x70] sm:$0xff]
  %v1621 = vld [vmem:[%s3 + $0x78] sm:$0xff]
  %v1622 = vld [vmem:[%s3 + $0x80] sm:$0xff]
  %v1623 = vld [vmem:[%s3 + $0x88] sm:$0xff]
  %v1624 = vld [vmem:[%s3 + $0x90] sm:$0xff]
  %v1625 = vld [vmem:[%s3 + $0x98] sm:$0xff]
  %v1626 = vld [vmem:[%s3 + $0xa0] sm:$0xff]
  %v1627 = vld [vmem:[%s3 + $0xa8] sm:$0xff]
  %v1628 = vld [vmem:[%s3 + $0xb0] sm:$0xff]
  %v1629 = vld [vmem:[%s3 + $0xb8] sm:$0xff]
  %v1630 = vld [vmem:[%s3 + $0xc0] sm:$0xff]
  %v1631 = vld [vmem:[%s3 + $0xc8] sm:$0xff]
  %v1632 = vld [vmem:[%s3 + $0xd0] sm:$0xff]
  %v1633 = vld [vmem:[%s3 + $0xd8] sm:$0xff]
  %v1634 = vld [vmem:[%s3 + $0xe0] sm:$0xff]
  %v1635 = vld [vmem:[%s3 + $0xe8] sm:$0xff]
  %v1636 = vld [vmem:[%s3 + $0xf0] sm:$0xff]
  %v1637 = vld [vmem:[%s3 + $0xf8] sm:$0xff]
  %v1638 = vld [vmem:[%s3 + $0x100] sm:$0xff]
  %v1639 = vld [vmem:[%s3 + $0x108] sm:$0xff]
  %v1640 = vld [vmem:[%s3 + $0x110] sm:$0xff]
  %v1641 = vld [vmem:[%s3 + $0x118] sm:$0xff]
  %v1642 = vld [vmem:[%s3 + $0x120] sm:$0xff]
  %v1643 = vld [vmem:[%s3 + $0x128] sm:$0xff]
  %v1644 = vld [vmem:[%s3 + $0x130] sm:$0xff]
  %v1645 = vld [vmem:[%s3 + $0x138] sm:$0xff]
  %v1646 = vld [vmem:[%s3 + $0x140] sm:$0xff]
  %v1647 = vld [vmem:[%s3 + $0x148] sm:$0xff]
  %v1648 = vld [vmem:[%s3 + $0x150] sm:$0xff]
  %v1649 = vld [vmem:[%s3 + $0x158] sm:$0xff]
  %v1650 = vld [vmem:[%s3 + $0x160] sm:$0xff]
  %v1651 = vld [vmem:[%s3 + $0x168] sm:$0xff]
  %v1652 = vld [vmem:[%s3 + $0x170] sm:$0xff]
  %v1653 = vld [vmem:[%s3 + $0x178] sm:$0xff]
  %v1654 = vld [vmem:[%s3 + $0x180] sm:$0xff]
  %v1655 = vld [vmem:[%s3 + $0x188] sm:$0xff]
  %v1656 = vld [vmem:[%s3 + $0x190] sm:$0xff]
  %v1657 = vld [vmem:[%s3 + $0x198] sm:$0xff]
  %v1658 = vld [vmem:[%s3 + $0x1a0] sm:$0xff]
  %v1659 = vld [vmem:[%s3 + $0x1a8] sm:$0xff]
  %v1660 = vld [vmem:[%s3 + $0x1b0] sm:$0xff]
  %v1661 = vld [vmem:[%s3 + $0x1b8] sm:$0xff]
  %v1662 = vld [vmem:[%s3 + $0x1c0] sm:$0xff]
  %v1663 = vld [vmem:[%s3 + $0x1c8] sm:$0xff]
  %v1664 = vld [vmem:[%s3 + $0x1d0] sm:$0xff]
  %v1665 = vld [vmem:[%s3 + $0x1d8] sm:$0xff]
  %v1666 = vld [vmem:[%s3 + $0x1e0] sm:$0xff]
  %v1667 = vld [vmem:[%s3 + $0x1e8] sm:$0xff]
  %v1668 = vld [vmem:[%s3 + $0x1f0] sm:$0xff]
  %v1669 = vld [vmem:[%s3 + $0x1f8] sm:$0xff]
  %v1670 = vld [vmem:[%s3 + $0x200] sm:$0xff]
  %v1671 = vld [vmem:[%s3 + $0x208] sm:$0xff]
  %v1672 = vld [vmem:[%s3 + $0x210] sm:$0xff]
  %v1673 = vld [vmem:[%s3 + $0x218] sm:$0xff]
  %v1674 = vld [vmem:[%s3 + $0x220] sm:$0xff]
  %v1675 = vld [vmem:[%s3 + $0x228] sm:$0xff]
  %v1676 = vld [vmem:[%s3 + $0x230] sm:$0xff]
  %v1677 = vld [vmem:[%s3 + $0x238] sm:$0xff]
  %v1678 = vld [vmem:[%s3 + $0x240] sm:$0xff]
  %v1679 = vld [vmem:[%s3 + $0x248] sm:$0xff]
  %v1680 = vld [vmem:[%s3 + $0x250] sm:$0xff]
  %v1681 = vld [vmem:[%s3 + $0x258] sm:$0xff]
  %v1682 = vld [vmem:[%s3 + $0x260] sm:$0xff]
  %v1683 = vld [vmem:[%s3 + $0x268] sm:$0xff]
  %v1684 = vld [vmem:[%s3 + $0x270] sm:$0xff]
  %v1685 = vld [vmem:[%s3 + $0x278] sm:$0xff]
  %v1686 = vld [vmem:[%s3 + $0x280] sm:$0xff]
  %v1687 = vld [vmem:[%s3 + $0x288] sm:$0xff]
  %v1688 = vld [vmem:[%s3 + $0x290] sm:$0xff]
  %v1689 = vld [vmem:[%s3 + $0x298] sm:$0xff]
  %v1690 = vld [vmem:[%s3 + $0x2a0] sm:$0xff]
  %v1691 = vld [vmem:[%s3 + $0x2a8] sm:$0xff]
  %v1692 = vld [vmem:[%s3 + $0x2b0] sm:$0xff]
  %v1693 = vld [vmem:[%s3 + $0x2b8] sm:$0xff]
  %v1694 = vld [vmem:[%s3 + $0x2c0] sm:$0xff]
  %v1695 = vld [vmem:[%s3 + $0x2c8] sm:$0xff]
  %v1696 = vld [vmem:[%s3 + $0x2d0] sm:$0xff]
  %v1697 = vld [vmem:[%s3 + $0x2d8] sm:$0xff]
  %v1698 = vld [vmem:[%s3 + $0x2e0] sm:$0xff]
  %v1699 = vld [vmem:[%s3 + $0x2e8] sm:$0xff]
  %v1700 = vld [vmem:[%s3 + $0x2f0] sm:$0xff]
  %v1701 = vld [vmem:[%s3 + $0x2f8] sm:$0xff]
  %v1702 = vld [vmem:[%s3 + $0x300] sm:$0xff]
  %v1703 = vld [vmem:[%s3 + $0x308] sm:$0xff]
  %v1704 = vld [vmem:[%s3 + $0x310] sm:$0xff]
  %v1705 = vld [vmem:[%s3 + $0x318] sm:$0xff]
  %v1706 = vld [vmem:[%s3 + $0x320] sm:$0xff]
  %v1707 = vld [vmem:[%s3 + $0x328] sm:$0xff]
  %v1708 = vld [vmem:[%s3 + $0x330] sm:$0xff]
  %v1709 = vld [vmem:[%s3 + $0x338] sm:$0xff]
  %v1710 = vld [vmem:[%s3 + $0x340] sm:$0xff]
  %v1711 = vld [vmem:[%s3 + $0x348] sm:$0xff]
  %v1712 = vld [vmem:[%s3 + $0x350] sm:$0xff]
  %v1713 = vld [vmem:[%s3 + $0x358] sm:$0xff]
  %v1714 = vld [vmem:[%s3 + $0x360] sm:$0xff]
  %v1715 = vld [vmem:[%s3 + $0x368] sm:$0xff]
  %v1716 = vld [vmem:[%s3 + $0x370] sm:$0xff]
  %v1717 = vld [vmem:[%s3 + $0x378] sm:$0xff]
  %v1718 = vld [vmem:[%s3 + $0x380] sm:$0xff]
  %v1719 = vld [vmem:[%s3 + $0x388] sm:$0xff]
  %v1720 = vld [vmem:[%s3 + $0x390] sm:$0xff]
  %v1721 = vld [vmem:[%s3 + $0x398] sm:$0xff]
  %v1722 = vld [vmem:[%s3 + $0x3a0] sm:$0xff]
  %v1723 = vld [vmem:[%s3 + $0x3a8] sm:$0xff]
  %v1724 = vld [vmem:[%s3 + $0x3b0] sm:$0xff]
  %v1725 = vld [vmem:[%s3 + $0x3b8] sm:$0xff]
  %v1726 = vld [vmem:[%s3 + $0x3c0] sm:$0xff]
  %v1727 = vld [vmem:[%s3 + $0x3c8] sm:$0xff]
  %v1728 = vld [vmem:[%s3 + $0x3d0] sm:$0xff]
  %v1729 = vld [vmem:[%s3 + $0x3d8] sm:$0xff]
  %v1730 = vld [vmem:[%s3 + $0x3e0] sm:$0xff]
  %v1731 = vld [vmem:[%s3 + $0x3e8] sm:$0xff]
  %v1732 = vld [vmem:[%s3 + $0x3f0] sm:$0xff]
  %v1733 = vld [vmem:[%s3 + $0x3f8] sm:$0xff]
  %v1734 = vld [vmem:[%s4] sm:$0xf]
  %v1736 = vlaneseq
  %v1737 = vshrl.u32 %v1736, 7
  %v1738 = vsub.s32 0, %v1737
  %v1739 = vrot.slane %v1734, %v1738
  %v1740 = vlaneseq
  %v1741 = vshrl.u32 %v1740, 7
  %v1742 = vsub.s32 1, %v1741
  %v1743 = vrot.slane %v1734, %v1742
  %v1744 = vlaneseq
  %v1745 = vshrl.u32 %v1744, 7
  %v1746 = vsub.s32 2, %v1745
  %v1747 = vrot.slane %v1734, %v1746
  %v1748 = vlaneseq
  %v1749 = vshrl.u32 %v1748, 7
  %v1750 = vsub.s32 3, %v1749
  %v1751 = vrot.slane %v1734, %v1750
  %v1884 = vunpack.c.l.b16 %v1606
  %v1885 = vunpack.c.h.b16 %v1606
  %v1886 = vunpack.c.l.b16 %v1607
  %v1887 = vunpack.c.h.b16 %v1607
  %v1888 = vunpack.c.l.b16 %v1608
  %v1889 = vunpack.c.h.b16 %v1608
  %v1890 = vunpack.c.l.b16 %v1609
  %v1891 = vunpack.c.h.b16 %v1609
  %v1892 = vunpack.c.l.b16 %v1610
  %v1893 = vunpack.c.h.b16 %v1610
  %v1894 = vunpack.c.l.b16 %v1611
  %v1895 = vunpack.c.h.b16 %v1611
  %v1896 = vunpack.c.l.b16 %v1612
  %v1897 = vunpack.c.h.b16 %v1612
  %v1898 = vunpack.c.l.b16 %v1613
  %v1899 = vunpack.c.h.b16 %v1613
  %v1900 = vunpack.c.l.b16 %v1614
  %v1901 = vunpack.c.h.b16 %v1614
  %v1902 = vunpack.c.l.b16 %v1615
  %v1903 = vunpack.c.h.b16 %v1615
  %v1904 = vunpack.c.l.b16 %v1616
  %v1905 = vunpack.c.h.b16 %v1616
  %v1906 = vunpack.c.l.b16 %v1617
  %v1907 = vunpack.c.h.b16 %v1617
  %v1908 = vunpack.c.l.b16 %v1618
  %v1909 = vunpack.c.h.b16 %v1618
  %v1910 = vunpack.c.l.b16 %v1619
  %v1911 = vunpack.c.h.b16 %v1619
  %v1912 = vunpack.c.l.b16 %v1620
  %v1913 = vunpack.c.h.b16 %v1620
  %v1914 = vunpack.c.l.b16 %v1621
  %v1915 = vunpack.c.h.b16 %v1621
  %v1916 = vunpack.c.l.b16 %v1622
  %v1917 = vunpack.c.h.b16 %v1622
  %v1918 = vunpack.c.l.b16 %v1623
  %v1919 = vunpack.c.h.b16 %v1623
  %v1920 = vunpack.c.l.b16 %v1624
  %v1921 = vunpack.c.h.b16 %v1624
  %v1922 = vunpack.c.l.b16 %v1625
  %v1923 = vunpack.c.h.b16 %v1625
  %v1924 = vunpack.c.l.b16 %v1626
  %v1925 = vunpack.c.h.b16 %v1626
  %v1926 = vunpack.c.l.b16 %v1627
  %v1927 = vunpack.c.h.b16 %v1627
  %v1928 = vunpack.c.l.b16 %v1628
  %v1929 = vunpack.c.h.b16 %v1628
  %v1930 = vunpack.c.l.b16 %v1629
  %v1931 = vunpack.c.h.b16 %v1629
  %v1932 = vunpack.c.l.b16 %v1630
  %v1933 = vunpack.c.h.b16 %v1630
  %v1934 = vunpack.c.l.b16 %v1631
  %v1935 = vunpack.c.h.b16 %v1631
  %v1936 = vunpack.c.l.b16 %v1632
  %v1937 = vunpack.c.h.b16 %v1632
  %v1938 = vunpack.c.l.b16 %v1633
  %v1939 = vunpack.c.h.b16 %v1633
  %v1940 = vunpack.c.l.b16 %v1634
  %v1941 = vunpack.c.h.b16 %v1634
  %v1942 = vunpack.c.l.b16 %v1635
  %v1943 = vunpack.c.h.b16 %v1635
  %v1944 = vunpack.c.l.b16 %v1636
  %v1945 = vunpack.c.h.b16 %v1636
  %v1946 = vunpack.c.l.b16 %v1637
  %v1947 = vunpack.c.h.b16 %v1637
  %v1948 = vunpack.c.l.b16 %v1638
  %v1949 = vunpack.c.h.b16 %v1638
  %v1950 = vunpack.c.l.b16 %v1639
  %v1951 = vunpack.c.h.b16 %v1639
  %v1952 = vunpack.c.l.b16 %v1640
  %v1953 = vunpack.c.h.b16 %v1640
  %v1954 = vunpack.c.l.b16 %v1641
  %v1955 = vunpack.c.h.b16 %v1641
  %v1956 = vunpack.c.l.b16 %v1642
  %v1957 = vunpack.c.h.b16 %v1642
  %v1958 = vunpack.c.l.b16 %v1643
  %v1959 = vunpack.c.h.b16 %v1643
  %v1960 = vunpack.c.l.b16 %v1644
  %v1961 = vunpack.c.h.b16 %v1644
  %v1962 = vunpack.c.l.b16 %v1645
  %v1963 = vunpack.c.h.b16 %v1645
  %v1964 = vunpack.c.l.b16 %v1646
  %v1965 = vunpack.c.h.b16 %v1646
  %v1966 = vunpack.c.l.b16 %v1647
  %v1967 = vunpack.c.h.b16 %v1647
  %v1968 = vunpack.c.l.b16 %v1648
  %v1969 = vunpack.c.h.b16 %v1648
  %v1970 = vunpack.c.l.b16 %v1649
  %v1971 = vunpack.c.h.b16 %v1649
  %v1972 = vunpack.c.l.b16 %v1650
  %v1973 = vunpack.c.h.b16 %v1650
  %v1974 = vunpack.c.l.b16 %v1651
  %v1975 = vunpack.c.h.b16 %v1651
  %v1976 = vunpack.c.l.b16 %v1652
  %v1977 = vunpack.c.h.b16 %v1652
  %v1978 = vunpack.c.l.b16 %v1653
  %v1979 = vunpack.c.h.b16 %v1653
  %v1980 = vunpack.c.l.b16 %v1654
  %v1981 = vunpack.c.h.b16 %v1654
  %v1982 = vunpack.c.l.b16 %v1655
  %v1983 = vunpack.c.h.b16 %v1655
  %v1984 = vunpack.c.l.b16 %v1656
  %v1985 = vunpack.c.h.b16 %v1656
  %v1986 = vunpack.c.l.b16 %v1657
  %v1987 = vunpack.c.h.b16 %v1657
  %v1988 = vunpack.c.l.b16 %v1658
  %v1989 = vunpack.c.h.b16 %v1658
  %v1990 = vunpack.c.l.b16 %v1659
  %v1991 = vunpack.c.h.b16 %v1659
  %v1992 = vunpack.c.l.b16 %v1660
  %v1993 = vunpack.c.h.b16 %v1660
  %v1994 = vunpack.c.l.b16 %v1661
  %v1995 = vunpack.c.h.b16 %v1661
  %v1996 = vunpack.c.l.b16 %v1662
  %v1997 = vunpack.c.h.b16 %v1662
  %v1998 = vunpack.c.l.b16 %v1663
  %v1999 = vunpack.c.h.b16 %v1663
  %v2000 = vunpack.c.l.b16 %v1664
  %v2001 = vunpack.c.h.b16 %v1664
  %v2002 = vunpack.c.l.b16 %v1665
  %v2003 = vunpack.c.h.b16 %v1665
  %v2004 = vunpack.c.l.b16 %v1666
  %v2005 = vunpack.c.h.b16 %v1666
  %v2006 = vunpack.c.l.b16 %v1667
  %v2007 = vunpack.c.h.b16 %v1667
  %v2008 = vunpack.c.l.b16 %v1668
  %v2009 = vunpack.c.h.b16 %v1668
  %v2010 = vunpack.c.l.b16 %v1669
  %v2011 = vunpack.c.h.b16 %v1669
  %v2012 = vunpack.c.l.b16 %v1670
  %v2013 = vunpack.c.h.b16 %v1670
  %v2014 = vunpack.c.l.b16 %v1671
  %v2015 = vunpack.c.h.b16 %v1671
  %v2016 = vunpack.c.l.b16 %v1672
  %v2017 = vunpack.c.h.b16 %v1672
  %v2018 = vunpack.c.l.b16 %v1673
  %v2019 = vunpack.c.h.b16 %v1673
  %v2020 = vunpack.c.l.b16 %v1674
  %v2021 = vunpack.c.h.b16 %v1674
  %v2022 = vunpack.c.l.b16 %v1675
  %v2023 = vunpack.c.h.b16 %v1675
  %v2024 = vunpack.c.l.b16 %v1676
  %v2025 = vunpack.c.h.b16 %v1676
  %v2026 = vunpack.c.l.b16 %v1677
  %v2027 = vunpack.c.h.b16 %v1677
  %v2028 = vunpack.c.l.b16 %v1678
  %v2029 = vunpack.c.h.b16 %v1678
  %v2030 = vunpack.c.l.b16 %v1679
  %v2031 = vunpack.c.h.b16 %v1679
  %v2032 = vunpack.c.l.b16 %v1680
  %v2033 = vunpack.c.h.b16 %v1680
  %v2034 = vunpack.c.l.b16 %v1681
  %v2035 = vunpack.c.h.b16 %v1681
  %v2036 = vunpack.c.l.b16 %v1682
  %v2037 = vunpack.c.h.b16 %v1682
  %v2038 = vunpack.c.l.b16 %v1683
  %v2039 = vunpack.c.h.b16 %v1683
  %v2040 = vunpack.c.l.b16 %v1684
  %v2041 = vunpack.c.h.b16 %v1684
  %v2042 = vunpack.c.l.b16 %v1685
  %v2043 = vunpack.c.h.b16 %v1685
  %v2044 = vunpack.c.l.b16 %v1686
  %v2045 = vunpack.c.h.b16 %v1686
  %v2046 = vunpack.c.l.b16 %v1687
  %v2047 = vunpack.c.h.b16 %v1687
  %v2048 = vunpack.c.l.b16 %v1688
  %v2049 = vunpack.c.h.b16 %v1688
  %v2050 = vunpack.c.l.b16 %v1689
  %v2051 = vunpack.c.h.b16 %v1689
  %v2052 = vunpack.c.l.b16 %v1690
  %v2053 = vunpack.c.h.b16 %v1690
  %v2054 = vunpack.c.l.b16 %v1691
  %v2055 = vunpack.c.h.b16 %v1691
  %v2056 = vunpack.c.l.b16 %v1692
  %v2057 = vunpack.c.h.b16 %v1692
  %v2058 = vunpack.c.l.b16 %v1693
  %v2059 = vunpack.c.h.b16 %v1693
  %v2060 = vunpack.c.l.b16 %v1694
  %v2061 = vunpack.c.h.b16 %v1694
  %v2062 = vunpack.c.l.b16 %v1695
  %v2063 = vunpack.c.h.b16 %v1695
  %v2064 = vunpack.c.l.b16 %v1696
  %v2065 = vunpack.c.h.b16 %v1696
  %v2066 = vunpack.c.l.b16 %v1697
  %v2067 = vunpack.c.h.b16 %v1697
  %v2068 = vunpack.c.l.b16 %v1698
  %v2069 = vunpack.c.h.b16 %v1698
  %v2070 = vunpack.c.l.b16 %v1699
  %v2071 = vunpack.c.h.b16 %v1699
  %v2072 = vunpack.c.l.b16 %v1700
  %v2073 = vunpack.c.h.b16 %v1700
  %v2074 = vunpack.c.l.b16 %v1701
  %v2075 = vunpack.c.h.b16 %v1701
  %v2076 = vunpack.c.l.b16 %v1702
  %v2077 = vunpack.c.h.b16 %v1702
  %v2078 = vunpack.c.l.b16 %v1703
  %v2079 = vunpack.c.h.b16 %v1703
  %v2080 = vunpack.c.l.b16 %v1704
  %v2081 = vunpack.c.h.b16 %v1704
  %v2082 = vunpack.c.l.b16 %v1705
  %v2083 = vunpack.c.h.b16 %v1705
  %v2084 = vunpack.c.l.b16 %v1706
  %v2085 = vunpack.c.h.b16 %v1706
  %v2086 = vunpack.c.l.b16 %v1707
  %v2087 = vunpack.c.h.b16 %v1707
  %v2088 = vunpack.c.l.b16 %v1708
  %v2089 = vunpack.c.h.b16 %v1708
  %v2090 = vunpack.c.l.b16 %v1709
  %v2091 = vunpack.c.h.b16 %v1709
  %v2092 = vunpack.c.l.b16 %v1710
  %v2093 = vunpack.c.h.b16 %v1710
  %v2094 = vunpack.c.l.b16 %v1711
  %v2095 = vunpack.c.h.b16 %v1711
  %v2096 = vunpack.c.l.b16 %v1712
  %v2097 = vunpack.c.h.b16 %v1712
  %v2098 = vunpack.c.l.b16 %v1713
  %v2099 = vunpack.c.h.b16 %v1713
  %v2100 = vunpack.c.l.b16 %v1714
  %v2101 = vunpack.c.h.b16 %v1714
  %v2102 = vunpack.c.l.b16 %v1715
  %v2103 = vunpack.c.h.b16 %v1715
  %v2104 = vunpack.c.l.b16 %v1716
  %v2105 = vunpack.c.h.b16 %v1716
  %v2106 = vunpack.c.l.b16 %v1717
  %v2107 = vunpack.c.h.b16 %v1717
  %v2108 = vunpack.c.l.b16 %v1718
  %v2109 = vunpack.c.h.b16 %v1718
  %v2110 = vunpack.c.l.b16 %v1719
  %v2111 = vunpack.c.h.b16 %v1719
  %v2112 = vunpack.c.l.b16 %v1720
  %v2113 = vunpack.c.h.b16 %v1720
  %v2114 = vunpack.c.l.b16 %v1721
  %v2115 = vunpack.c.h.b16 %v1721
  %v2116 = vunpack.c.l.b16 %v1722
  %v2117 = vunpack.c.h.b16 %v1722
  %v2118 = vunpack.c.l.b16 %v1723
  %v2119 = vunpack.c.h.b16 %v1723
  %v2120 = vunpack.c.l.b16 %v1724
  %v2121 = vunpack.c.h.b16 %v1724
  %v2122 = vunpack.c.l.b16 %v1725
  %v2123 = vunpack.c.h.b16 %v1725
  %v2124 = vunpack.c.l.b16 %v1726
  %v2125 = vunpack.c.h.b16 %v1726
  %v2126 = vunpack.c.l.b16 %v1727
  %v2127 = vunpack.c.h.b16 %v1727
  %v2128 = vunpack.c.l.b16 %v1728
  %v2129 = vunpack.c.h.b16 %v1728
  %v2130 = vunpack.c.l.b16 %v1729
  %v2131 = vunpack.c.h.b16 %v1729
  %v2132 = vunpack.c.l.b16 %v1730
  %v2133 = vunpack.c.h.b16 %v1730
  %v2134 = vunpack.c.l.b16 %v1731
  %v2135 = vunpack.c.h.b16 %v1731
  %v2136 = vunpack.c.l.b16 %v1732
  %v2137 = vunpack.c.h.b16 %v1732
  %v2138 = vunpack.c.l.b16 %v1733
  %v2139 = vunpack.c.h.b16 %v1733
  %v2140 = vpack.c.b16 %v1888, %v1884
  %v2141 = vpack.c.b16 %v1889, %v1885
  %v2142 = vpack.c.b16 %v1890, %v1886
  %v2143 = vpack.c.b16 %v1891, %v1887
  %v2144 = vpack.c.b16 %v1896, %v1892
  %v2145 = vpack.c.b16 %v1897, %v1893
  %v2146 = vpack.c.b16 %v1898, %v1894
  %v2147 = vpack.c.b16 %v1899, %v1895
  %v2148 = vpack.c.b16 %v1904, %v1900
  %v2149 = vpack.c.b16 %v1905, %v1901
  %v2150 = vpack.c.b16 %v1906, %v1902
  %v2151 = vpack.c.b16 %v1907, %v1903
  %v2152 = vpack.c.b16 %v1912, %v1908
  %v2153 = vpack.c.b16 %v1913, %v1909
  %v2154 = vpack.c.b16 %v1914, %v1910
  %v2155 = vpack.c.b16 %v1915, %v1911
  %v2156 = vpack.c.b16 %v1920, %v1916
  %v2157 = vpack.c.b16 %v1921, %v1917
  %v2158 = vpack.c.b16 %v1922, %v1918
  %v2159 = vpack.c.b16 %v1923, %v1919
  %v2160 = vpack.c.b16 %v1928, %v1924
  %v2161 = vpack.c.b16 %v1929, %v1925
  %v2162 = vpack.c.b16 %v1930, %v1926
  %v2163 = vpack.c.b16 %v1931, %v1927
  %v2164 = vpack.c.b16 %v1936, %v1932
  %v2165 = vpack.c.b16 %v1937, %v1933
  %v2166 = vpack.c.b16 %v1938, %v1934
  %v2167 = vpack.c.b16 %v1939, %v1935
  %v2168 = vpack.c.b16 %v1944, %v1940
  %v2169 = vpack.c.b16 %v1945, %v1941
  %v2170 = vpack.c.b16 %v1946, %v1942
  %v2171 = vpack.c.b16 %v1947, %v1943
  %v2172 = vpack.c.b16 %v1952, %v1948
  %v2173 = vpack.c.b16 %v1953, %v1949
  %v2174 = vpack.c.b16 %v1954, %v1950
  %v2175 = vpack.c.b16 %v1955, %v1951
  %v2176 = vpack.c.b16 %v1960, %v1956
  %v2177 = vpack.c.b16 %v1961, %v1957
  %v2178 = vpack.c.b16 %v1962, %v1958
  %v2179 = vpack.c.b16 %v1963, %v1959
  %v2180 = vpack.c.b16 %v1968, %v1964
  %v2181 = vpack.c.b16 %v1969, %v1965
  %v2182 = vpack.c.b16 %v1970, %v1966
  %v2183 = vpack.c.b16 %v1971, %v1967
  %v2184 = vpack.c.b16 %v1976, %v1972
  %v2185 = vpack.c.b16 %v1977, %v1973
  %v2186 = vpack.c.b16 %v1978, %v1974
  %v2187 = vpack.c.b16 %v1979, %v1975
  %v2188 = vpack.c.b16 %v1984, %v1980
  %v2189 = vpack.c.b16 %v1985, %v1981
  %v2190 = vpack.c.b16 %v1986, %v1982
  %v2191 = vpack.c.b16 %v1987, %v1983
  %v2192 = vpack.c.b16 %v1992, %v1988
  %v2193 = vpack.c.b16 %v1993, %v1989
  %v2194 = vpack.c.b16 %v1994, %v1990
  %v2195 = vpack.c.b16 %v1995, %v1991
  %v2196 = vpack.c.b16 %v2000, %v1996
  %v2197 = vpack.c.b16 %v2001, %v1997
  %v2198 = vpack.c.b16 %v2002, %v1998
  %v2199 = vpack.c.b16 %v2003, %v1999
  %v2200 = vpack.c.b16 %v2008, %v2004
  %v2201 = vpack.c.b16 %v2009, %v2005
  %v2202 = vpack.c.b16 %v2010, %v2006
  %v2203 = vpack.c.b16 %v2011, %v2007
  %v2204 = vpack.c.b16 %v2016, %v2012
  %v2205 = vpack.c.b16 %v2017, %v2013
  %v2206 = vpack.c.b16 %v2018, %v2014
  %v2207 = vpack.c.b16 %v2019, %v2015
  %v2208 = vpack.c.b16 %v2024, %v2020
  %v2209 = vpack.c.b16 %v2025, %v2021
  %v2210 = vpack.c.b16 %v2026, %v2022
  %v2211 = vpack.c.b16 %v2027, %v2023
  %v2212 = vpack.c.b16 %v2032, %v2028
  %v2213 = vpack.c.b16 %v2033, %v2029
  %v2214 = vpack.c.b16 %v2034, %v2030
  %v2215 = vpack.c.b16 %v2035, %v2031
  %v2216 = vpack.c.b16 %v2040, %v2036
  %v2217 = vpack.c.b16 %v2041, %v2037
  %v2218 = vpack.c.b16 %v2042, %v2038
  %v2219 = vpack.c.b16 %v2043, %v2039
  %v2220 = vpack.c.b16 %v2048, %v2044
  %v2221 = vpack.c.b16 %v2049, %v2045
  %v2222 = vpack.c.b16 %v2050, %v2046
  %v2223 = vpack.c.b16 %v2051, %v2047
  %v2224 = vpack.c.b16 %v2056, %v2052
  %v2225 = vpack.c.b16 %v2057, %v2053
  %v2226 = vpack.c.b16 %v2058, %v2054
  %v2227 = vpack.c.b16 %v2059, %v2055
  %v2228 = vpack.c.b16 %v2064, %v2060
  %v2229 = vpack.c.b16 %v2065, %v2061
  %v2230 = vpack.c.b16 %v2066, %v2062
  %v2231 = vpack.c.b16 %v2067, %v2063
  %v2232 = vpack.c.b16 %v2072, %v2068
  %v2233 = vpack.c.b16 %v2073, %v2069
  %v2234 = vpack.c.b16 %v2074, %v2070
  %v2235 = vpack.c.b16 %v2075, %v2071
  %v2236 = vpack.c.b16 %v2080, %v2076
  %v2237 = vpack.c.b16 %v2081, %v2077
  %v2238 = vpack.c.b16 %v2082, %v2078
  %v2239 = vpack.c.b16 %v2083, %v2079
  %v2240 = vpack.c.b16 %v2088, %v2084
  %v2241 = vpack.c.b16 %v2089, %v2085
  %v2242 = vpack.c.b16 %v2090, %v2086
  %v2243 = vpack.c.b16 %v2091, %v2087
  %v2244 = vpack.c.b16 %v2096, %v2092
  %v2245 = vpack.c.b16 %v2097, %v2093
  %v2246 = vpack.c.b16 %v2098, %v2094
  %v2247 = vpack.c.b16 %v2099, %v2095
  %v2248 = vpack.c.b16 %v2104, %v2100
  %v2249 = vpack.c.b16 %v2105, %v2101
  %v2250 = vpack.c.b16 %v2106, %v2102
  %v2251 = vpack.c.b16 %v2107, %v2103
  %v2252 = vpack.c.b16 %v2112, %v2108
  %v2253 = vpack.c.b16 %v2113, %v2109
  %v2254 = vpack.c.b16 %v2114, %v2110
  %v2255 = vpack.c.b16 %v2115, %v2111
  %v2256 = vpack.c.b16 %v2120, %v2116
  %v2257 = vpack.c.b16 %v2121, %v2117
  %v2258 = vpack.c.b16 %v2122, %v2118
  %v2259 = vpack.c.b16 %v2123, %v2119
  %v2260 = vpack.c.b16 %v2128, %v2124
  %v2261 = vpack.c.b16 %v2129, %v2125
  %v2262 = vpack.c.b16 %v2130, %v2126
  %v2263 = vpack.c.b16 %v2131, %v2127
  %v2264 = vpack.c.b16 %v2136, %v2132
  %v2265 = vpack.c.b16 %v2137, %v2133
  %v2266 = vpack.c.b16 %v2138, %v2134
  %v2267 = vpack.c.b16 %v2139, %v2135
  %2396 = vmatprep.subr.bf16.mxu0 %v2169
  %2397 = vmatpush1.bf16.msra.mxu0 %v2168
  %2398 = vmatprep.subr.bf16.mxu0 %v2165
  %2399 = vmatpush1.bf16.msra.mxu0 %v2164
  %2400 = vmatprep.subr.bf16.mxu0 %v2161
  %2401 = vmatpush1.bf16.msra.mxu0 %v2160
  %2402 = vmatprep.subr.bf16.mxu0 %v2157
  %2403 = vmatpush1.bf16.msra.mxu0 %v2156
  %2404 = vmatprep.subr.bf16.mxu0 %v2153
  %2405 = vmatpush1.bf16.msra.mxu0 %v2152
  %2406 = vmatprep.subr.bf16.mxu0 %v2149
  %2407 = vmatpush1.bf16.msra.mxu0 %v2148
  %2408 = vmatprep.subr.bf16.mxu0 %v2145
  %2409 = vmatpush1.bf16.msra.mxu0 %v2144
  %2410 = vmatprep.subr.bf16.mxu0 %v2141
  %2411 = vmatpush1.bf16.msra.mxu0 %v2140
  %2412 = vmatprep.subr.bf16.mxu0 %v2201
  %2413 = vmatpush2.bf16.msra.mxu0 %v2200
  %2414 = vmatprep.subr.bf16.mxu0 %v2197
  %2415 = vmatpush2.bf16.msra.mxu0 %v2196
  %2416 = vmatprep.subr.bf16.mxu0 %v2193
  %2417 = vmatpush2.bf16.msra.mxu0 %v2192
  %2418 = vmatprep.subr.bf16.mxu0 %v2189
  %2419 = vmatpush2.bf16.msra.mxu0 %v2188
  %2420 = vmatprep.subr.bf16.mxu0 %v2185
  %2421 = vmatpush2.bf16.msra.mxu0 %v2184
  %2422 = vmatprep.subr.bf16.mxu0 %v2181
  %2423 = vmatpush2.bf16.msra.mxu0 %v2180
  %2424 = vmatprep.subr.bf16.mxu0 %v2177
  %2425 = vmatpush2.bf16.msra.mxu0 %v2176
  %2426 = vmatprep.subr.bf16.mxu0 %v2173
  %2427 = vmatpush2.bf16.msra.mxu0 %v2172
  %2428 = vmatprep.mubr.bf16.mxu0 %v1603
  %2429 = vmatmul.mubr.bf16.gmra.mxu0 %v1602
  %v2430 = vpop.f32.mrf.mxu0
  %v2431 = vadd.f32 %v1739, %v2430
  %v2432 = vpop.f32.mrf.mxu0
  %v2433 = vadd.f32 %v1743, %v2432
  %v2434 = vpop.f32.mrf.mxu0
  %v2435 = vadd.f32 %v1739, %v2434
  %v2436 = vpop.f32.mrf.mxu0
  %v2437 = vadd.f32 %v1743, %v2436
  %2438 = vdwg.mxu0
  %2439 = vmatprep.subr.bf16.mxu0 %v2233
  %2440 = vmatpush1.bf16.msra.mxu0 %v2232
  %2441 = vmatprep.subr.bf16.mxu0 %v2229
  %2442 = vmatpush1.bf16.msra.mxu0 %v2228
  %2443 = vmatprep.subr.bf16.mxu0 %v2225
  %2444 = vmatpush1.bf16.msra.mxu0 %v2224
  %2445 = vmatprep.subr.bf16.mxu0 %v2221
  %2446 = vmatpush1.bf16.msra.mxu0 %v2220
  %2447 = vmatprep.subr.bf16.mxu0 %v2217
  %2448 = vmatpush1.bf16.msra.mxu0 %v2216
  %2449 = vmatprep.subr.bf16.mxu0 %v2213
  %2450 = vmatpush1.bf16.msra.mxu0 %v2212
  %2451 = vmatprep.subr.bf16.mxu0 %v2209
  %2452 = vmatpush1.bf16.msra.mxu0 %v2208
  %2453 = vmatprep.subr.bf16.mxu0 %v2205
  %2454 = vmatpush1.bf16.msra.mxu0 %v2204
  %2455 = vmatprep.subr.bf16.mxu0 %v2265
  %2456 = vmatpush2.bf16.msra.mxu0 %v2264
  %2457 = vmatprep.subr.bf16.mxu0 %v2261
  %2458 = vmatpush2.bf16.msra.mxu0 %v2260
  %2459 = vmatprep.subr.bf16.mxu0 %v2257
  %2460 = vmatpush2.bf16.msra.mxu0 %v2256
  %2461 = vmatprep.subr.bf16.mxu0 %v2253
  %2462 = vmatpush2.bf16.msra.mxu0 %v2252
  %2463 = vmatprep.subr.bf16.mxu0 %v2249
  %2464 = vmatpush2.bf16.msra.mxu0 %v2248
  %2465 = vmatprep.subr.bf16.mxu0 %v2245
  %2466 = vmatpush2.bf16.msra.mxu0 %v2244
  %2467 = vmatprep.subr.bf16.mxu0 %v2241
  %2468 = vmatpush2.bf16.msra.mxu0 %v2240
  %2469 = vmatprep.subr.bf16.mxu0 %v2237
  %2470 = vmatpush2.bf16.msra.mxu0 %v2236
  %2471 = vmatprep.mubr.bf16.mxu0 %v1605
  %2472 = vmatmul.mubr.bf16.gmra.mxu0 %v1604
  %v2473 = vpop.f32.mrf.mxu0
  %v2474 = vadd.f32 %v2431, %v2473
  %v2475 = vpop.f32.mrf.mxu0
  %v2476 = vadd.f32 %v2433, %v2475
  %v2477 = vpop.f32.mrf.mxu0
  %v2478 = vadd.f32 %v2435, %v2477
  %v2479 = vpop.f32.mrf.mxu0
  %v2480 = vadd.f32 %v2437, %v2479
  %2481 = vdwg.mxu0
  %2482 = vmatprep.subr.bf16.mxu0 %v2171
  %2483 = vmatpush1.bf16.msra.mxu0 %v2170
  %2484 = vmatprep.subr.bf16.mxu0 %v2167
  %2485 = vmatpush1.bf16.msra.mxu0 %v2166
  %2486 = vmatprep.subr.bf16.mxu0 %v2163
  %2487 = vmatpush1.bf16.msra.mxu0 %v2162
  %2488 = vmatprep.subr.bf16.mxu0 %v2159
  %2489 = vmatpush1.bf16.msra.mxu0 %v2158
  %2490 = vmatprep.subr.bf16.mxu0 %v2155
  %2491 = vmatpush1.bf16.msra.mxu0 %v2154
  %2492 = vmatprep.subr.bf16.mxu0 %v2151
  %2493 = vmatpush1.bf16.msra.mxu0 %v2150
  %2494 = vmatprep.subr.bf16.mxu0 %v2147
  %2495 = vmatpush1.bf16.msra.mxu0 %v2146
  %2496 = vmatprep.subr.bf16.mxu0 %v2143
  %2497 = vmatpush1.bf16.msra.mxu0 %v2142
  %2498 = vmatprep.subr.bf16.mxu0 %v2203
  %2499 = vmatpush2.bf16.msra.mxu0 %v2202
  %2500 = vmatprep.subr.bf16.mxu0 %v2199
  %2501 = vmatpush2.bf16.msra.mxu0 %v2198
  %2502 = vmatprep.subr.bf16.mxu0 %v2195
  %2503 = vmatpush2.bf16.msra.mxu0 %v2194
  %2504 = vmatprep.subr.bf16.mxu0 %v2191
  %2505 = vmatpush2.bf16.msra.mxu0 %v2190
  %2506 = vmatprep.subr.bf16.mxu0 %v2187
  %2507 = vmatpush2.bf16.msra.mxu0 %v2186
  %2508 = vmatprep.subr.bf16.mxu0 %v2183
  %2509 = vmatpush2.bf16.msra.mxu0 %v2182
  %2510 = vmatprep.subr.bf16.mxu0 %v2179
  %2511 = vmatpush2.bf16.msra.mxu0 %v2178
  %2512 = vmatprep.subr.bf16.mxu0 %v2175
  %2513 = vmatpush2.bf16.msra.mxu0 %v2174
  %2514 = vmatprep.mubr.bf16.mxu0 %v1603
  %2515 = vmatmul.mubr.bf16.gmra.mxu0 %v1602
  %v2516 = vpop.f32.mrf.mxu0
  %v2517 = vadd.f32 %v1747, %v2516
  %v2518 = vpop.f32.mrf.mxu0
  %v2519 = vadd.f32 %v1751, %v2518
  %v2520 = vpop.f32.mrf.mxu0
  %v2521 = vadd.f32 %v1747, %v2520
  %v2522 = vpop.f32.mrf.mxu0
  %v2523 = vadd.f32 %v1751, %v2522
  %2524 = vdwg.mxu0
  %2525 = vmatprep.subr.bf16.mxu0 %v2235
  %2526 = vmatpush1.bf16.msra.mxu0 %v2234
  %2527 = vmatprep.subr.bf16.mxu0 %v2231
  %2528 = vmatpush1.bf16.msra.mxu0 %v2230
  %2529 = vmatprep.subr.bf16.mxu0 %v2227
  %2530 = vmatpush1.bf16.msra.mxu0 %v2226
  %2531 = vmatprep.subr.bf16.mxu0 %v2223
  %2532 = vmatpush1.bf16.msra.mxu0 %v2222
  %2533 = vmatprep.subr.bf16.mxu0 %v2219
  %2534 = vmatpush1.bf16.msra.mxu0 %v2218
  %2535 = vmatprep.subr.bf16.mxu0 %v2215
  %2536 = vmatpush1.bf16.msra.mxu0 %v2214
  %2537 = vmatprep.subr.bf16.mxu0 %v2211
  %2538 = vmatpush1.bf16.msra.mxu0 %v2210
  %2539 = vmatprep.subr.bf16.mxu0 %v2207
  %2540 = vmatpush1.bf16.msra.mxu0 %v2206
  %2541 = vmatprep.subr.bf16.mxu0 %v2267
  %2542 = vmatpush2.bf16.msra.mxu0 %v2266
  %2543 = vmatprep.subr.bf16.mxu0 %v2263
  %2544 = vmatpush2.bf16.msra.mxu0 %v2262
  %2545 = vmatprep.subr.bf16.mxu0 %v2259
  %2546 = vmatpush2.bf16.msra.mxu0 %v2258
  %2547 = vmatprep.subr.bf16.mxu0 %v2255
  %2548 = vmatpush2.bf16.msra.mxu0 %v2254
  %2549 = vmatprep.subr.bf16.mxu0 %v2251
  %2550 = vmatpush2.bf16.msra.mxu0 %v2250
  %2551 = vmatprep.subr.bf16.mxu0 %v2247
  %2552 = vmatpush2.bf16.msra.mxu0 %v2246
  %2553 = vmatprep.subr.bf16.mxu0 %v2243
  %2554 = vmatpush2.bf16.msra.mxu0 %v2242
  %2555 = vmatprep.subr.bf16.mxu0 %v2239
  %2556 = vmatpush2.bf16.msra.mxu0 %v2238
  %2557 = vmatprep.mubr.bf16.mxu0 %v1605
  %2558 = vmatmul.mubr.bf16.gmra.mxu0 %v1604
  %v2559 = vpop.f32.mrf.mxu0
  %v2560 = vadd.f32 %v2517, %v2559
  %v2561 = vpop.f32.mrf.mxu0
  %v2562 = vadd.f32 %v2519, %v2561
  %v2563 = vpop.f32.mrf.mxu0
  %v2564 = vadd.f32 %v2521, %v2563
  %v2565 = vpop.f32.mrf.mxu0
  %v2566 = vadd.f32 %v2523, %v2565
  %2567 = vdwg.mxu0
  %v2568 = vmax.f32 %v2474, 0.0
  %v2569 = vmax.f32 %v2476, 0.0
  %v2570 = vmax.f32 %v2560, 0.0
  %v2571 = vmax.f32 %v2562, 0.0
  %v2572 = vmax.f32 %v2478, 0.0
  %v2573 = vmax.f32 %v2480, 0.0
  %v2574 = vmax.f32 %v2564, 0.0
  %v2575 = vmax.f32 %v2566, 0.0
  %v2576 = vpack.c.bf16 %v2572, %v2568
  %v2577 = vpack.c.bf16 %v2573, %v2569
  %v2578 = vpack.c.bf16 %v2574, %v2570
  %v2579 = vpack.c.bf16 %v2575, %v2571
  %v2580 = vld [vmem:[%s5] sm:$0xff]
  %v2581 = vld [vmem:[%s5 + $0x8] sm:$0xff]
  %v2582 = vld [vmem:[%s5 + $0x10] sm:$0xff]
  %v2583 = vld [vmem:[%s5 + $0x18] sm:$0xf]
  %v2584 = vld [vmem:[%s5 + $0x1c] sm:$0xff]
  %v2585 = vld [vmem:[%s5 + $0x24] sm:$0xff]
  %v2586 = vld [vmem:[%s5 + $0x2c] sm:$0xff]
  %v2587 = vld [vmem:[%s5 + $0x34] sm:$0xf]
  %v2588 = vld [vmem:[%s5 + $0x38] sm:$0xff]
  %v2589 = vld [vmem:[%s5 + $0x40] sm:$0xff]
  %v2590 = vld [vmem:[%s5 + $0x48] sm:$0xff]
  %v2591 = vld [vmem:[%s5 + $0x50] sm:$0xf]
  %v2592 = vld [vmem:[%s5 + $0x54] sm:$0xff]
  %v2593 = vld [vmem:[%s5 + $0x5c] sm:$0xff]
  %v2594 = vld [vmem:[%s5 + $0x64] sm:$0xff]
  %v2595 = vld [vmem:[%s5 + $0x6c] sm:$0xf]
  %v2596 = vld [vmem:[%s5 + $0x70] sm:$0xff]
  %v2597 = vld [vmem:[%s5 + $0x78] sm:$0xff]
  %v2598 = vld [vmem:[%s5 + $0x80] sm:$0xff]
  %v2599 = vld [vmem:[%s5 + $0x88] sm:$0xf]
  %v2600 = vld [vmem:[%s5 + $0x8c] sm:$0xff]
  %v2601 = vld [vmem:[%s5 + $0x94] sm:$0xff]
  %v2602 = vld [vmem:[%s5 + $0x9c] sm:$0xff]
  %v2603 = vld [vmem:[%s5 + $0xa4] sm:$0xf]
  %v2604 = vld [vmem:[%s5 + $0xa8] sm:$0xff]
  %v2605 = vld [vmem:[%s5 + $0xb0] sm:$0xff]
  %v2606 = vld [vmem:[%s5 + $0xb8] sm:$0xff]
  %v2607 = vld [vmem:[%s5 + $0xc0] sm:$0xf]
  %v2608 = vld [vmem:[%s5 + $0xc4] sm:$0xff]
  %v2609 = vld [vmem:[%s5 + $0xcc] sm:$0xff]
  %v2610 = vld [vmem:[%s5 + $0xd4] sm:$0xff]
  %v2611 = vld [vmem:[%s5 + $0xdc] sm:$0xf]
  %v2612 = vld [vmem:[%s5 + $0xe0] sm:$0xff]
  %v2613 = vld [vmem:[%s5 + $0xe8] sm:$0xff]
  %v2614 = vld [vmem:[%s5 + $0xf0] sm:$0xff]
  %v2615 = vld [vmem:[%s5 + $0xf8] sm:$0xf]
  %v2616 = vld [vmem:[%s5 + $0xfc] sm:$0xff]
  %v2617 = vld [vmem:[%s5 + $0x104] sm:$0xff]
  %v2618 = vld [vmem:[%s5 + $0x10c] sm:$0xff]
  %v2619 = vld [vmem:[%s5 + $0x114] sm:$0xf]
  %v2620 = vld [vmem:[%s5 + $0x118] sm:$0xff]
  %v2621 = vld [vmem:[%s5 + $0x120] sm:$0xff]
  %v2622 = vld [vmem:[%s5 + $0x128] sm:$0xff]
  %v2623 = vld [vmem:[%s5 + $0x130] sm:$0xf]
  %v2624 = vld [vmem:[%s5 + $0x134] sm:$0xff]
  %v2625 = vld [vmem:[%s5 + $0x13c] sm:$0xff]
  %v2626 = vld [vmem:[%s5 + $0x144] sm:$0xff]
  %v2627 = vld [vmem:[%s5 + $0x14c] sm:$0xf]
  %v2628 = vld [vmem:[%s5 + $0x150] sm:$0xff]
  %v2629 = vld [vmem:[%s5 + $0x158] sm:$0xff]
  %v2630 = vld [vmem:[%s5 + $0x160] sm:$0xff]
  %v2631 = vld [vmem:[%s5 + $0x168] sm:$0xf]
  %v2632 = vld [vmem:[%s5 + $0x16c] sm:$0xff]
  %v2633 = vld [vmem:[%s5 + $0x174] sm:$0xff]
  %v2634 = vld [vmem:[%s5 + $0x17c] sm:$0xff]
  %v2635 = vld [vmem:[%s5 + $0x184] sm:$0xf]
  %v2636 = vld [vmem:[%s5 + $0x188] sm:$0xff]
  %v2637 = vld [vmem:[%s5 + $0x190] sm:$0xff]
  %v2638 = vld [vmem:[%s5 + $0x198] sm:$0xff]
  %v2639 = vld [vmem:[%s5 + $0x1a0] sm:$0xf]
  %v2640 = vld [vmem:[%s5 + $0x1a4] sm:$0xff]
  %v2641 = vld [vmem:[%s5 + $0x1ac] sm:$0xff]
  %v2642 = vld [vmem:[%s5 + $0x1b4] sm:$0xff]
  %v2643 = vld [vmem:[%s5 + $0x1bc] sm:$0xf]
  %v2644 = vld [vmem:[%s5 + $0x1c0] sm:$0xff]
  %v2645 = vld [vmem:[%s5 + $0x1c8] sm:$0xff]
  %v2646 = vld [vmem:[%s5 + $0x1d0] sm:$0xff]
  %v2647 = vld [vmem:[%s5 + $0x1d8] sm:$0xf]
  %v2648 = vld [vmem:[%s5 + $0x1dc] sm:$0xff]
  %v2649 = vld [vmem:[%s5 + $0x1e4] sm:$0xff]
  %v2650 = vld [vmem:[%s5 + $0x1ec] sm:$0xff]
  %v2651 = vld [vmem:[%s5 + $0x1f4] sm:$0xf]
  %v2652 = vld [vmem:[%s5 + $0x1f8] sm:$0xff]
  %v2653 = vld [vmem:[%s5 + $0x200] sm:$0xff]
  %v2654 = vld [vmem:[%s5 + $0x208] sm:$0xff]
  %v2655 = vld [vmem:[%s5 + $0x210] sm:$0xf]
  %v2656 = vld [vmem:[%s5 + $0x214] sm:$0xff]
  %v2657 = vld [vmem:[%s5 + $0x21c] sm:$0xff]
  %v2658 = vld [vmem:[%s5 + $0x224] sm:$0xff]
  %v2659 = vld [vmem:[%s5 + $0x22c] sm:$0xf]
  %v2660 = vld [vmem:[%s5 + $0x230] sm:$0xff]
  %v2661 = vld [vmem:[%s5 + $0x238] sm:$0xff]
  %v2662 = vld [vmem:[%s5 + $0x240] sm:$0xff]
  %v2663 = vld [vmem:[%s5 + $0x248] sm:$0xf]
  %v2664 = vld [vmem:[%s5 + $0x24c] sm:$0xff]
  %v2665 = vld [vmem:[%s5 + $0x254] sm:$0xff]
  %v2666 = vld [vmem:[%s5 + $0x25c] sm:$0xff]
  %v2667 = vld [vmem:[%s5 + $0x264] sm:$0xf]
  %v2668 = vld [vmem:[%s5 + $0x268] sm:$0xff]
  %v2669 = vld [vmem:[%s5 + $0x270] sm:$0xff]
  %v2670 = vld [vmem:[%s5 + $0x278] sm:$0xff]
  %v2671 = vld [vmem:[%s5 + $0x280] sm:$0xf]
  %v2672 = vld [vmem:[%s5 + $0x284] sm:$0xff]
  %v2673 = vld [vmem:[%s5 + $0x28c] sm:$0xff]
  %v2674 = vld [vmem:[%s5 + $0x294] sm:$0xff]
  %v2675 = vld [vmem:[%s5 + $0x29c] sm:$0xf]
  %v2676 = vld [vmem:[%s5 + $0x2a0] sm:$0xff]
  %v2677 = vld [vmem:[%s5 + $0x2a8] sm:$0xff]
  %v2678 = vld [vmem:[%s5 + $0x2b0] sm:$0xff]
  %v2679 = vld [vmem:[%s5 + $0x2b8] sm:$0xf]
  %v2680 = vld [vmem:[%s5 + $0x2bc] sm:$0xff]
  %v2681 = vld [vmem:[%s5 + $0x2c4] sm:$0xff]
  %v2682 = vld [vmem:[%s5 + $0x2cc] sm:$0xff]
  %v2683 = vld [vmem:[%s5 + $0x2d4] sm:$0xf]
  %v2684 = vld [vmem:[%s5 + $0x2d8] sm:$0xff]
  %v2685 = vld [vmem:[%s5 + $0x2e0] sm:$0xff]
  %v2686 = vld [vmem:[%s5 + $0x2e8] sm:$0xff]
  %v2687 = vld [vmem:[%s5 + $0x2f0] sm:$0xf]
  %v2688 = vld [vmem:[%s5 + $0x2f4] sm:$0xff]
  %v2689 = vld [vmem:[%s5 + $0x2fc] sm:$0xff]
  %v2690 = vld [vmem:[%s5 + $0x304] sm:$0xff]
  %v2691 = vld [vmem:[%s5 + $0x30c] sm:$0xf]
  %v2692 = vld [vmem:[%s5 + $0x310] sm:$0xff]
  %v2693 = vld [vmem:[%s5 + $0x318] sm:$0xff]
  %v2694 = vld [vmem:[%s5 + $0x320] sm:$0xff]
  %v2695 = vld [vmem:[%s5 + $0x328] sm:$0xf]
  %v2696 = vld [vmem:[%s5 + $0x32c] sm:$0xff]
  %v2697 = vld [vmem:[%s5 + $0x334] sm:$0xff]
  %v2698 = vld [vmem:[%s5 + $0x33c] sm:$0xff]
  %v2699 = vld [vmem:[%s5 + $0x344] sm:$0xf]
  %v2700 = vld [vmem:[%s5 + $0x348] sm:$0xff]
  %v2701 = vld [vmem:[%s5 + $0x350] sm:$0xff]
  %v2702 = vld [vmem:[%s5 + $0x358] sm:$0xff]
  %v2703 = vld [vmem:[%s5 + $0x360] sm:$0xf]
  %v2704 = vld [vmem:[%s5 + $0x364] sm:$0xff]
  %v2705 = vld [vmem:[%s5 + $0x36c] sm:$0xff]
  %v2706 = vld [vmem:[%s5 + $0x374] sm:$0xff]
  %v2707 = vld [vmem:[%s5 + $0x37c] sm:$0xf]
  %v2708 = vld [vmem:[%s5 + $0x380] sm:$0xff]
  %v2709 = vld [vmem:[%s5 + $0x388] sm:$0xff]
  %v2710 = vld [vmem:[%s5 + $0x390] sm:$0xff]
  %v2711 = vld [vmem:[%s5 + $0x398] sm:$0xf]
  %v2712 = vld [vmem:[%s5 + $0x39c] sm:$0xff]
  %v2713 = vld [vmem:[%s5 + $0x3a4] sm:$0xff]
  %v2714 = vld [vmem:[%s5 + $0x3ac] sm:$0xff]
  %v2715 = vld [vmem:[%s5 + $0x3b4] sm:$0xf]
  %v2716 = vld [vmem:[%s5 + $0x3b8] sm:$0xff]
  %v2717 = vld [vmem:[%s5 + $0x3c0] sm:$0xff]
  %v2718 = vld [vmem:[%s5 + $0x3c8] sm:$0xff]
  %v2719 = vld [vmem:[%s5 + $0x3d0] sm:$0xf]
  %v2720 = vld [vmem:[%s5 + $0x3d4] sm:$0xff]
  %v2721 = vld [vmem:[%s5 + $0x3dc] sm:$0xff]
  %v2722 = vld [vmem:[%s5 + $0x3e4] sm:$0xff]
  %v2723 = vld [vmem:[%s5 + $0x3ec] sm:$0xf]
  %v2724 = vld [vmem:[%s5 + $0x3f0] sm:$0xff]
  %v2725 = vld [vmem:[%s5 + $0x3f8] sm:$0xff]
  %v2726 = vld [vmem:[%s5 + $0x400] sm:$0xff]
  %v2727 = vld [vmem:[%s5 + $0x408] sm:$0xf]
  %v2728 = vld [vmem:[%s5 + $0x40c] sm:$0xff]
  %v2729 = vld [vmem:[%s5 + $0x414] sm:$0xff]
  %v2730 = vld [vmem:[%s5 + $0x41c] sm:$0xff]
  %v2731 = vld [vmem:[%s5 + $0x424] sm:$0xf]
  %v2732 = vld [vmem:[%s5 + $0x428] sm:$0xff]
  %v2733 = vld [vmem:[%s5 + $0x430] sm:$0xff]
  %v2734 = vld [vmem:[%s5 + $0x438] sm:$0xff]
  %v2735 = vld [vmem:[%s5 + $0x440] sm:$0xf]
  %v2736 = vld [vmem:[%s5 + $0x444] sm:$0xff]
  %v2737 = vld [vmem:[%s5 + $0x44c] sm:$0xff]
  %v2738 = vld [vmem:[%s5 + $0x454] sm:$0xff]
  %v2739 = vld [vmem:[%s5 + $0x45c] sm:$0xf]
  %v2740 = vld [vmem:[%s5 + $0x460] sm:$0xff]
  %v2741 = vld [vmem:[%s5 + $0x468] sm:$0xff]
  %v2742 = vld [vmem:[%s5 + $0x470] sm:$0xff]
  %v2743 = vld [vmem:[%s5 + $0x478] sm:$0xf]
  %v2744 = vld [vmem:[%s5 + $0x47c] sm:$0xff]
  %v2745 = vld [vmem:[%s5 + $0x484] sm:$0xff]
  %v2746 = vld [vmem:[%s5 + $0x48c] sm:$0xff]
  %v2747 = vld [vmem:[%s5 + $0x494] sm:$0xf]
  %v2748 = vld [vmem:[%s5 + $0x498] sm:$0xff]
  %v2749 = vld [vmem:[%s5 + $0x4a0] sm:$0xff]
  %v2750 = vld [vmem:[%s5 + $0x4a8] sm:$0xff]
  %v2751 = vld [vmem:[%s5 + $0x4b0] sm:$0xf]
  %v2752 = vld [vmem:[%s5 + $0x4b4] sm:$0xff]
  %v2753 = vld [vmem:[%s5 + $0x4bc] sm:$0xff]
  %v2754 = vld [vmem:[%s5 + $0x4c4] sm:$0xff]
  %v2755 = vld [vmem:[%s5 + $0x4cc] sm:$0xf]
  %v2756 = vld [vmem:[%s5 + $0x4d0] sm:$0xff]
  %v2757 = vld [vmem:[%s5 + $0x4d8] sm:$0xff]
  %v2758 = vld [vmem:[%s5 + $0x4e0] sm:$0xff]
  %v2759 = vld [vmem:[%s5 + $0x4e8] sm:$0xf]
  %v2760 = vld [vmem:[%s5 + $0x4ec] sm:$0xff]
  %v2761 = vld [vmem:[%s5 + $0x4f4] sm:$0xff]
  %v2762 = vld [vmem:[%s5 + $0x4fc] sm:$0xff]
  %v2763 = vld [vmem:[%s5 + $0x504] sm:$0xf]
  %v2764 = vld [vmem:[%s5 + $0x508] sm:$0xff]
  %v2765 = vld [vmem:[%s5 + $0x510] sm:$0xff]
  %v2766 = vld [vmem:[%s5 + $0x518] sm:$0xff]
  %v2767 = vld [vmem:[%s5 + $0x520] sm:$0xf]
  %v2768 = vld [vmem:[%s5 + $0x524] sm:$0xff]
  %v2769 = vld [vmem:[%s5 + $0x52c] sm:$0xff]
  %v2770 = vld [vmem:[%s5 + $0x534] sm:$0xff]
  %v2771 = vld [vmem:[%s5 + $0x53c] sm:$0xf]
  %v2772 = vld [vmem:[%s5 + $0x540] sm:$0xff]
  %v2773 = vld [vmem:[%s5 + $0x548] sm:$0xff]
  %v2774 = vld [vmem:[%s5 + $0x550] sm:$0xff]
  %v2775 = vld [vmem:[%s5 + $0x558] sm:$0xf]
  %v2776 = vld [vmem:[%s5 + $0x55c] sm:$0xff]
  %v2777 = vld [vmem:[%s5 + $0x564] sm:$0xff]
  %v2778 = vld [vmem:[%s5 + $0x56c] sm:$0xff]
  %v2779 = vld [vmem:[%s5 + $0x574] sm:$0xf]
  %v2780 = vld [vmem:[%s5 + $0x578] sm:$0xff]
  %v2781 = vld [vmem:[%s5 + $0x580] sm:$0xff]
  %v2782 = vld [vmem:[%s5 + $0x588] sm:$0xff]
  %v2783 = vld [vmem:[%s5 + $0x590] sm:$0xf]
  %v2784 = vld [vmem:[%s5 + $0x594] sm:$0xff]
  %v2785 = vld [vmem:[%s5 + $0x59c] sm:$0xff]
  %v2786 = vld [vmem:[%s5 + $0x5a4] sm:$0xff]
  %v2787 = vld [vmem:[%s5 + $0x5ac] sm:$0xf]
  %v2788 = vld [vmem:[%s5 + $0x5b0] sm:$0xff]
  %v2789 = vld [vmem:[%s5 + $0x5b8] sm:$0xff]
  %v2790 = vld [vmem:[%s5 + $0x5c0] sm:$0xff]
  %v2791 = vld [vmem:[%s5 + $0x5c8] sm:$0xf]
  %v2792 = vld [vmem:[%s5 + $0x5cc] sm:$0xff]
  %v2793 = vld [vmem:[%s5 + $0x5d4] sm:$0xff]
  %v2794 = vld [vmem:[%s5 + $0x5dc] sm:$0xff]
  %v2795 = vld [vmem:[%s5 + $0x5e4] sm:$0xf]
  %v2796 = vld [vmem:[%s5 + $0x5e8] sm:$0xff]
  %v2797 = vld [vmem:[%s5 + $0x5f0] sm:$0xff]
  %v2798 = vld [vmem:[%s5 + $0x5f8] sm:$0xff]
  %v2799 = vld [vmem:[%s5 + $0x600] sm:$0xf]
  %v2800 = vld [vmem:[%s5 + $0x604] sm:$0xff]
  %v2801 = vld [vmem:[%s5 + $0x60c] sm:$0xff]
  %v2802 = vld [vmem:[%s5 + $0x614] sm:$0xff]
  %v2803 = vld [vmem:[%s5 + $0x61c] sm:$0xf]
  %v2804 = vld [vmem:[%s5 + $0x620] sm:$0xff]
  %v2805 = vld [vmem:[%s5 + $0x628] sm:$0xff]
  %v2806 = vld [vmem:[%s5 + $0x630] sm:$0xff]
  %v2807 = vld [vmem:[%s5 + $0x638] sm:$0xf]
  %v2808 = vld [vmem:[%s5 + $0x63c] sm:$0xff]
  %v2809 = vld [vmem:[%s5 + $0x644] sm:$0xff]
  %v2810 = vld [vmem:[%s5 + $0x64c] sm:$0xff]
  %v2811 = vld [vmem:[%s5 + $0x654] sm:$0xf]
  %v2812 = vld [vmem:[%s5 + $0x658] sm:$0xff]
  %v2813 = vld [vmem:[%s5 + $0x660] sm:$0xff]
  %v2814 = vld [vmem:[%s5 + $0x668] sm:$0xff]
  %v2815 = vld [vmem:[%s5 + $0x670] sm:$0xf]
  %v2816 = vld [vmem:[%s5 + $0x674] sm:$0xff]
  %v2817 = vld [vmem:[%s5 + $0x67c] sm:$0xff]
  %v2818 = vld [vmem:[%s5 + $0x684] sm:$0xff]
  %v2819 = vld [vmem:[%s5 + $0x68c] sm:$0xf]
  %v2820 = vld [vmem:[%s5 + $0x690] sm:$0xff]
  %v2821 = vld [vmem:[%s5 + $0x698] sm:$0xff]
  %v2822 = vld [vmem:[%s5 + $0x6a0] sm:$0xff]
  %v2823 = vld [vmem:[%s5 + $0x6a8] sm:$0xf]
  %v2824 = vld [vmem:[%s5 + $0x6ac] sm:$0xff]
  %v2825 = vld [vmem:[%s5 + $0x6b4] sm:$0xff]
  %v2826 = vld [vmem:[%s5 + $0x6bc] sm:$0xff]
  %v2827 = vld [vmem:[%s5 + $0x6c4] sm:$0xf]
  %v2828 = vld [vmem:[%s5 + $0x6c8] sm:$0xff]
  %v2829 = vld [vmem:[%s5 + $0x6d0] sm:$0xff]
  %v2830 = vld [vmem:[%s5 + $0x6d8] sm:$0xff]
  %v2831 = vld [vmem:[%s5 + $0x6e0] sm:$0xf]
  %v2832 = vld [vmem:[%s5 + $0x6e4] sm:$0xff]
  %v2833 = vld [vmem:[%s5 + $0x6ec] sm:$0xff]
  %v2834 = vld [vmem:[%s5 + $0x6f4] sm:$0xff]
  %v2835 = vld [vmem:[%s5 + $0x6fc] sm:$0xf]
  %v2836 = vld [vmem:[%s6] sm:$0x7f]
  %v2838 = vlaneseq
  %v2839 = vshrl.u32 %v2838, 7
  %v2840 = vsub.s32 0, %v2839
  %v2841 = vrot.slane %v2836, %v2840
  %v2842 = vlaneseq
  %v2843 = vshrl.u32 %v2842, 7
  %v2844 = vsub.s32 1, %v2843
  %v2845 = vrot.slane %v2836, %v2844
  %v2846 = vlaneseq
  %v2847 = vshrl.u32 %v2846, 7
  %v2848 = vsub.s32 2, %v2847
  %v2849 = vrot.slane %v2836, %v2848
  %v2850 = vlaneseq
  %v2851 = vshrl.u32 %v2850, 7
  %v2852 = vsub.s32 3, %v2851
  %v2853 = vrot.slane %v2836, %v2852
  %v2854 = vlaneseq
  %v2855 = vshrl.u32 %v2854, 7
  %v2856 = vsub.s32 4, %v2855
  %v2857 = vrot.slane %v2836, %v2856
  %v2858 = vlaneseq
  %v2859 = vshrl.u32 %v2858, 7
  %v2860 = vsub.s32 5, %v2859
  %v2861 = vrot.slane %v2836, %v2860
  %v2862 = vlaneseq
  %v2863 = vshrl.u32 %v2862, 7
  %v2864 = vsub.s32 6, %v2863
  %v2865 = vrot.slane %v2836, %v2864
  %v3129 = vunpack.c.l.b16 %v2580
  %v3130 = vunpack.c.h.b16 %v2580
  %v3131 = vunpack.c.l.b16 %v2581
  %v3132 = vunpack.c.h.b16 %v2581
  %v3133 = vunpack.c.l.b16 %v2582
  %v3134 = vunpack.c.h.b16 %v2582
  %v3135 = vunpack.c.l.b16 %v2583
  %v3136 = vunpack.c.l.b16 %v2584
  %v3137 = vunpack.c.h.b16 %v2584
  %v3138 = vunpack.c.l.b16 %v2585
  %v3139 = vunpack.c.h.b16 %v2585
  %v3140 = vunpack.c.l.b16 %v2586
  %v3141 = vunpack.c.h.b16 %v2586
  %v3142 = vunpack.c.l.b16 %v2587
  %v3143 = vunpack.c.l.b16 %v2588
  %v3144 = vunpack.c.h.b16 %v2588
  %v3145 = vunpack.c.l.b16 %v2589
  %v3146 = vunpack.c.h.b16 %v2589
  %v3147 = vunpack.c.l.b16 %v2590
  %v3148 = vunpack.c.h.b16 %v2590
  %v3149 = vunpack.c.l.b16 %v2591
  %v3150 = vunpack.c.l.b16 %v2592
  %v3151 = vunpack.c.h.b16 %v2592
  %v3152 = vunpack.c.l.b16 %v2593
  %v3153 = vunpack.c.h.b16 %v2593
  %v3154 = vunpack.c.l.b16 %v2594
  %v3155 = vunpack.c.h.b16 %v2594
  %v3156 = vunpack.c.l.b16 %v2595
  %v3157 = vunpack.c.l.b16 %v2596
  %v3158 = vunpack.c.h.b16 %v2596
  %v3159 = vunpack.c.l.b16 %v2597
  %v3160 = vunpack.c.h.b16 %v2597
  %v3161 = vunpack.c.l.b16 %v2598
  %v3162 = vunpack.c.h.b16 %v2598
  %v3163 = vunpack.c.l.b16 %v2599
  %v3164 = vunpack.c.l.b16 %v2600
  %v3165 = vunpack.c.h.b16 %v2600
  %v3166 = vunpack.c.l.b16 %v2601
  %v3167 = vunpack.c.h.b16 %v2601
  %v3168 = vunpack.c.l.b16 %v2602
  %v3169 = vunpack.c.h.b16 %v2602
  %v3170 = vunpack.c.l.b16 %v2603
  %v3171 = vunpack.c.l.b16 %v2604
  %v3172 = vunpack.c.h.b16 %v2604
  %v3173 = vunpack.c.l.b16 %v2605
  %v3174 = vunpack.c.h.b16 %v2605
  %v3175 = vunpack.c.l.b16 %v2606
  %v3176 = vunpack.c.h.b16 %v2606
  %v3177 = vunpack.c.l.b16 %v2607
  %v3178 = vunpack.c.l.b16 %v2608
  %v3179 = vunpack.c.h.b16 %v2608
  %v3180 = vunpack.c.l.b16 %v2609
  %v3181 = vunpack.c.h.b16 %v2609
  %v3182 = vunpack.c.l.b16 %v2610
  %v3183 = vunpack.c.h.b16 %v2610
  %v3184 = vunpack.c.l.b16 %v2611
  %v3185 = vunpack.c.l.b16 %v2612
  %v3186 = vunpack.c.h.b16 %v2612
  %v3187 = vunpack.c.l.b16 %v2613
  %v3188 = vunpack.c.h.b16 %v2613
  %v3189 = vunpack.c.l.b16 %v2614
  %v3190 = vunpack.c.h.b16 %v2614
  %v3191 = vunpack.c.l.b16 %v2615
  %v3192 = vunpack.c.l.b16 %v2616
  %v3193 = vunpack.c.h.b16 %v2616
  %v3194 = vunpack.c.l.b16 %v2617
  %v3195 = vunpack.c.h.b16 %v2617
  %v3196 = vunpack.c.l.b16 %v2618
  %v3197 = vunpack.c.h.b16 %v2618
  %v3198 = vunpack.c.l.b16 %v2619
  %v3199 = vunpack.c.l.b16 %v2620
  %v3200 = vunpack.c.h.b16 %v2620
  %v3201 = vunpack.c.l.b16 %v2621
  %v3202 = vunpack.c.h.b16 %v2621
  %v3203 = vunpack.c.l.b16 %v2622
  %v3204 = vunpack.c.h.b16 %v2622
  %v3205 = vunpack.c.l.b16 %v2623
  %v3206 = vunpack.c.l.b16 %v2624
  %v3207 = vunpack.c.h.b16 %v2624
  %v3208 = vunpack.c.l.b16 %v2625
  %v3209 = vunpack.c.h.b16 %v2625
  %v3210 = vunpack.c.l.b16 %v2626
  %v3211 = vunpack.c.h.b16 %v2626
  %v3212 = vunpack.c.l.b16 %v2627
  %v3213 = vunpack.c.l.b16 %v2628
  %v3214 = vunpack.c.h.b16 %v2628
  %v3215 = vunpack.c.l.b16 %v2629
  %v3216 = vunpack.c.h.b16 %v2629
  %v3217 = vunpack.c.l.b16 %v2630
  %v3218 = vunpack.c.h.b16 %v2630
  %v3219 = vunpack.c.l.b16 %v2631
  %v3220 = vunpack.c.l.b16 %v2632
  %v3221 = vunpack.c.h.b16 %v2632
  %v3222 = vunpack.c.l.b16 %v2633
  %v3223 = vunpack.c.h.b16 %v2633
  %v3224 = vunpack.c.l.b16 %v2634
  %v3225 = vunpack.c.h.b16 %v2634
  %v3226 = vunpack.c.l.b16 %v2635
  %v3227 = vunpack.c.l.b16 %v2636
  %v3228 = vunpack.c.h.b16 %v2636
  %v3229 = vunpack.c.l.b16 %v2637
  %v3230 = vunpack.c.h.b16 %v2637
  %v3231 = vunpack.c.l.b16 %v2638
  %v3232 = vunpack.c.h.b16 %v2638
  %v3233 = vunpack.c.l.b16 %v2639
  %v3234 = vunpack.c.l.b16 %v2640
  %v3235 = vunpack.c.h.b16 %v2640
  %v3236 = vunpack.c.l.b16 %v2641
  %v3237 = vunpack.c.h.b16 %v2641
  %v3238 = vunpack.c.l.b16 %v2642
  %v3239 = vunpack.c.h.b16 %v2642
  %v3240 = vunpack.c.l.b16 %v2643
  %v3241 = vunpack.c.l.b16 %v2644
  %v3242 = vunpack.c.h.b16 %v2644
  %v3243 = vunpack.c.l.b16 %v2645
  %v3244 = vunpack.c.h.b16 %v2645
  %v3245 = vunpack.c.l.b16 %v2646
  %v3246 = vunpack.c.h.b16 %v2646
  %v3247 = vunpack.c.l.b16 %v2647
  %v3248 = vunpack.c.l.b16 %v2648
  %v3249 = vunpack.c.h.b16 %v2648
  %v3250 = vunpack.c.l.b16 %v2649
  %v3251 = vunpack.c.h.b16 %v2649
  %v3252 = vunpack.c.l.b16 %v2650
  %v3253 = vunpack.c.h.b16 %v2650
  %v3254 = vunpack.c.l.b16 %v2651
  %v3255 = vunpack.c.l.b16 %v2652
  %v3256 = vunpack.c.h.b16 %v2652
  %v3257 = vunpack.c.l.b16 %v2653
  %v3258 = vunpack.c.h.b16 %v2653
  %v3259 = vunpack.c.l.b16 %v2654
  %v3260 = vunpack.c.h.b16 %v2654
  %v3261 = vunpack.c.l.b16 %v2655
  %v3262 = vunpack.c.l.b16 %v2656
  %v3263 = vunpack.c.h.b16 %v2656
  %v3264 = vunpack.c.l.b16 %v2657
  %v3265 = vunpack.c.h.b16 %v2657
  %v3266 = vunpack.c.l.b16 %v2658
  %v3267 = vunpack.c.h.b16 %v2658
  %v3268 = vunpack.c.l.b16 %v2659
  %v3269 = vunpack.c.l.b16 %v2660
  %v3270 = vunpack.c.h.b16 %v2660
  %v3271 = vunpack.c.l.b16 %v2661
  %v3272 = vunpack.c.h.b16 %v2661
  %v3273 = vunpack.c.l.b16 %v2662
  %v3274 = vunpack.c.h.b16 %v2662
  %v3275 = vunpack.c.l.b16 %v2663
  %v3276 = vunpack.c.l.b16 %v2664
  %v3277 = vunpack.c.h.b16 %v2664
  %v3278 = vunpack.c.l.b16 %v2665
  %v3279 = vunpack.c.h.b16 %v2665
  %v3280 = vunpack.c.l.b16 %v2666
  %v3281 = vunpack.c.h.b16 %v2666
  %v3282 = vunpack.c.l.b16 %v2667
  %v3283 = vunpack.c.l.b16 %v2668
  %v3284 = vunpack.c.h.b16 %v2668
  %v3285 = vunpack.c.l.b16 %v2669
  %v3286 = vunpack.c.h.b16 %v2669
  %v3287 = vunpack.c.l.b16 %v2670
  %v3288 = vunpack.c.h.b16 %v2670
  %v3289 = vunpack.c.l.b16 %v2671
  %v3290 = vunpack.c.l.b16 %v2672
  %v3291 = vunpack.c.h.b16 %v2672
  %v3292 = vunpack.c.l.b16 %v2673
  %v3293 = vunpack.c.h.b16 %v2673
  %v3294 = vunpack.c.l.b16 %v2674
  %v3295 = vunpack.c.h.b16 %v2674
  %v3296 = vunpack.c.l.b16 %v2675
  %v3297 = vunpack.c.l.b16 %v2676
  %v3298 = vunpack.c.h.b16 %v2676
  %v3299 = vunpack.c.l.b16 %v2677
  %v3300 = vunpack.c.h.b16 %v2677
  %v3301 = vunpack.c.l.b16 %v2678
  %v3302 = vunpack.c.h.b16 %v2678
  %v3303 = vunpack.c.l.b16 %v2679
  %v3304 = vunpack.c.l.b16 %v2680
  %v3305 = vunpack.c.h.b16 %v2680
  %v3306 = vunpack.c.l.b16 %v2681
  %v3307 = vunpack.c.h.b16 %v2681
  %v3308 = vunpack.c.l.b16 %v2682
  %v3309 = vunpack.c.h.b16 %v2682
  %v3310 = vunpack.c.l.b16 %v2683
  %v3311 = vunpack.c.l.b16 %v2684
  %v3312 = vunpack.c.h.b16 %v2684
  %v3313 = vunpack.c.l.b16 %v2685
  %v3314 = vunpack.c.h.b16 %v2685
  %v3315 = vunpack.c.l.b16 %v2686
  %v3316 = vunpack.c.h.b16 %v2686
  %v3317 = vunpack.c.l.b16 %v2687
  %v3318 = vunpack.c.l.b16 %v2688
  %v3319 = vunpack.c.h.b16 %v2688
  %v3320 = vunpack.c.l.b16 %v2689
  %v3321 = vunpack.c.h.b16 %v2689
  %v3322 = vunpack.c.l.b16 %v2690
  %v3323 = vunpack.c.h.b16 %v2690
  %v3324 = vunpack.c.l.b16 %v2691
  %v3325 = vunpack.c.l.b16 %v2692
  %v3326 = vunpack.c.h.b16 %v2692
  %v3327 = vunpack.c.l.b16 %v2693
  %v3328 = vunpack.c.h.b16 %v2693
  %v3329 = vunpack.c.l.b16 %v2694
  %v3330 = vunpack.c.h.b16 %v2694
  %v3331 = vunpack.c.l.b16 %v2695
  %v3332 = vunpack.c.l.b16 %v2696
  %v3333 = vunpack.c.h.b16 %v2696
  %v3334 = vunpack.c.l.b16 %v2697
  %v3335 = vunpack.c.h.b16 %v2697
  %v3336 = vunpack.c.l.b16 %v2698
  %v3337 = vunpack.c.h.b16 %v2698
  %v3338 = vunpack.c.l.b16 %v2699
  %v3339 = vunpack.c.l.b16 %v2700
  %v3340 = vunpack.c.h.b16 %v2700
  %v3341 = vunpack.c.l.b16 %v2701
  %v3342 = vunpack.c.h.b16 %v2701
  %v3343 = vunpack.c.l.b16 %v2702
  %v3344 = vunpack.c.h.b16 %v2702
  %v3345 = vunpack.c.l.b16 %v2703
  %v3346 = vunpack.c.l.b16 %v2704
  %v3347 = vunpack.c.h.b16 %v2704
  %v3348 = vunpack.c.l.b16 %v2705
  %v3349 = vunpack.c.h.b16 %v2705
  %v3350 = vunpack.c.l.b16 %v2706
  %v3351 = vunpack.c.h.b16 %v2706
  %v3352 = vunpack.c.l.b16 %v2707
  %v3353 = vunpack.c.l.b16 %v2708
  %v3354 = vunpack.c.h.b16 %v2708
  %v3355 = vunpack.c.l.b16 %v2709
  %v3356 = vunpack.c.h.b16 %v2709
  %v3357 = vunpack.c.l.b16 %v2710
  %v3358 = vunpack.c.h.b16 %v2710
  %v3359 = vunpack.c.l.b16 %v2711
  %v3360 = vunpack.c.l.b16 %v2712
  %v3361 = vunpack.c.h.b16 %v2712
  %v3362 = vunpack.c.l.b16 %v2713
  %v3363 = vunpack.c.h.b16 %v2713
  %v3364 = vunpack.c.l.b16 %v2714
  %v3365 = vunpack.c.h.b16 %v2714
  %v3366 = vunpack.c.l.b16 %v2715
  %v3367 = vunpack.c.l.b16 %v2716
  %v3368 = vunpack.c.h.b16 %v2716
  %v3369 = vunpack.c.l.b16 %v2717
  %v3370 = vunpack.c.h.b16 %v2717
  %v3371 = vunpack.c.l.b16 %v2718
  %v3372 = vunpack.c.h.b16 %v2718
  %v3373 = vunpack.c.l.b16 %v2719
  %v3374 = vunpack.c.l.b16 %v2720
  %v3375 = vunpack.c.h.b16 %v2720
  %v3376 = vunpack.c.l.b16 %v2721
  %v3377 = vunpack.c.h.b16 %v2721
  %v3378 = vunpack.c.l.b16 %v2722
  %v3379 = vunpack.c.h.b16 %v2722
  %v3380 = vunpack.c.l.b16 %v2723
  %v3381 = vunpack.c.l.b16 %v2724
  %v3382 = vunpack.c.h.b16 %v2724
  %v3383 = vunpack.c.l.b16 %v2725
  %v3384 = vunpack.c.h.b16 %v2725
  %v3385 = vunpack.c.l.b16 %v2726
  %v3386 = vunpack.c.h.b16 %v2726
  %v3387 = vunpack.c.l.b16 %v2727
  %v3388 = vunpack.c.l.b16 %v2728
  %v3389 = vunpack.c.h.b16 %v2728
  %v3390 = vunpack.c.l.b16 %v2729
  %v3391 = vunpack.c.h.b16 %v2729
  %v3392 = vunpack.c.l.b16 %v2730
  %v3393 = vunpack.c.h.b16 %v2730
  %v3394 = vunpack.c.l.b16 %v2731
  %v3395 = vunpack.c.l.b16 %v2732
  %v3396 = vunpack.c.h.b16 %v2732
  %v3397 = vunpack.c.l.b16 %v2733
  %v3398 = vunpack.c.h.b16 %v2733
  %v3399 = vunpack.c.l.b16 %v2734
  %v3400 = vunpack.c.h.b16 %v2734
  %v3401 = vunpack.c.l.b16 %v2735
  %v3402 = vunpack.c.l.b16 %v2736
  %v3403 = vunpack.c.h.b16 %v2736
  %v3404 = vunpack.c.l.b16 %v2737
  %v3405 = vunpack.c.h.b16 %v2737
  %v3406 = vunpack.c.l.b16 %v2738
  %v3407 = vunpack.c.h.b16 %v2738
  %v3408 = vunpack.c.l.b16 %v2739
  %v3409 = vunpack.c.l.b16 %v2740
  %v3410 = vunpack.c.h.b16 %v2740
  %v3411 = vunpack.c.l.b16 %v2741
  %v3412 = vunpack.c.h.b16 %v2741
  %v3413 = vunpack.c.l.b16 %v2742
  %v3414 = vunpack.c.h.b16 %v2742
  %v3415 = vunpack.c.l.b16 %v2743
  %v3416 = vunpack.c.l.b16 %v2744
  %v3417 = vunpack.c.h.b16 %v2744
  %v3418 = vunpack.c.l.b16 %v2745
  %v3419 = vunpack.c.h.b16 %v2745
  %v3420 = vunpack.c.l.b16 %v2746
  %v3421 = vunpack.c.h.b16 %v2746
  %v3422 = vunpack.c.l.b16 %v2747
  %v3423 = vunpack.c.l.b16 %v2748
  %v3424 = vunpack.c.h.b16 %v2748
  %v3425 = vunpack.c.l.b16 %v2749
  %v3426 = vunpack.c.h.b16 %v2749
  %v3427 = vunpack.c.l.b16 %v2750
  %v3428 = vunpack.c.h.b16 %v2750
  %v3429 = vunpack.c.l.b16 %v2751
  %v3430 = vunpack.c.l.b16 %v2752
  %v3431 = vunpack.c.h.b16 %v2752
  %v3432 = vunpack.c.l.b16 %v2753
  %v3433 = vunpack.c.h.b16 %v2753
  %v3434 = vunpack.c.l.b16 %v2754
  %v3435 = vunpack.c.h.b16 %v2754
  %v3436 = vunpack.c.l.b16 %v2755
  %v3437 = vunpack.c.l.b16 %v2756
  %v3438 = vunpack.c.h.b16 %v2756
  %v3439 = vunpack.c.l.b16 %v2757
  %v3440 = vunpack.c.h.b16 %v2757
  %v3441 = vunpack.c.l.b16 %v2758
  %v3442 = vunpack.c.h.b16 %v2758
  %v3443 = vunpack.c.l.b16 %v2759
  %v3444 = vunpack.c.l.b16 %v2760
  %v3445 = vunpack.c.h.b16 %v2760
  %v3446 = vunpack.c.l.b16 %v2761
  %v3447 = vunpack.c.h.b16 %v2761
  %v3448 = vunpack.c.l.b16 %v2762
  %v3449 = vunpack.c.h.b16 %v2762
  %v3450 = vunpack.c.l.b16 %v2763
  %v3451 = vunpack.c.l.b16 %v2764
  %v3452 = vunpack.c.h.b16 %v2764
  %v3453 = vunpack.c.l.b16 %v2765
  %v3454 = vunpack.c.h.b16 %v2765
  %v3455 = vunpack.c.l.b16 %v2766
  %v3456 = vunpack.c.h.b16 %v2766
  %v3457 = vunpack.c.l.b16 %v2767
  %v3458 = vunpack.c.l.b16 %v2768
  %v3459 = vunpack.c.h.b16 %v2768
  %v3460 = vunpack.c.l.b16 %v2769
  %v3461 = vunpack.c.h.b16 %v2769
  %v3462 = vunpack.c.l.b16 %v2770
  %v3463 = vunpack.c.h.b16 %v2770
  %v3464 = vunpack.c.l.b16 %v2771
  %v3465 = vunpack.c.l.b16 %v2772
  %v3466 = vunpack.c.h.b16 %v2772
  %v3467 = vunpack.c.l.b16 %v2773
  %v3468 = vunpack.c.h.b16 %v2773
  %v3469 = vunpack.c.l.b16 %v2774
  %v3470 = vunpack.c.h.b16 %v2774
  %v3471 = vunpack.c.l.b16 %v2775
  %v3472 = vunpack.c.l.b16 %v2776
  %v3473 = vunpack.c.h.b16 %v2776
  %v3474 = vunpack.c.l.b16 %v2777
  %v3475 = vunpack.c.h.b16 %v2777
  %v3476 = vunpack.c.l.b16 %v2778
  %v3477 = vunpack.c.h.b16 %v2778
  %v3478 = vunpack.c.l.b16 %v2779
  %v3479 = vunpack.c.l.b16 %v2780
  %v3480 = vunpack.c.h.b16 %v2780
  %v3481 = vunpack.c.l.b16 %v2781
  %v3482 = vunpack.c.h.b16 %v2781
  %v3483 = vunpack.c.l.b16 %v2782
  %v3484 = vunpack.c.h.b16 %v2782
  %v3485 = vunpack.c.l.b16 %v2783
  %v3486 = vunpack.c.l.b16 %v2784
  %v3487 = vunpack.c.h.b16 %v2784
  %v3488 = vunpack.c.l.b16 %v2785
  %v3489 = vunpack.c.h.b16 %v2785
  %v3490 = vunpack.c.l.b16 %v2786
  %v3491 = vunpack.c.h.b16 %v2786
  %v3492 = vunpack.c.l.b16 %v2787
  %v3493 = vunpack.c.l.b16 %v2788
  %v3494 = vunpack.c.h.b16 %v2788
  %v3495 = vunpack.c.l.b16 %v2789
  %v3496 = vunpack.c.h.b16 %v2789
  %v3497 = vunpack.c.l.b16 %v2790
  %v3498 = vunpack.c.h.b16 %v2790
  %v3499 = vunpack.c.l.b16 %v2791
  %v3500 = vunpack.c.l.b16 %v2792
  %v3501 = vunpack.c.h.b16 %v2792
  %v3502 = vunpack.c.l.b16 %v2793
  %v3503 = vunpack.c.h.b16 %v2793
  %v3504 = vunpack.c.l.b16 %v2794
  %v3505 = vunpack.c.h.b16 %v2794
  %v3506 = vunpack.c.l.b16 %v2795
  %v3507 = vunpack.c.l.b16 %v2796
  %v3508 = vunpack.c.h.b16 %v2796
  %v3509 = vunpack.c.l.b16 %v2797
  %v3510 = vunpack.c.h.b16 %v2797
  %v3511 = vunpack.c.l.b16 %v2798
  %v3512 = vunpack.c.h.b16 %v2798
  %v3513 = vunpack.c.l.b16 %v2799
  %v3514 = vunpack.c.l.b16 %v2800
  %v3515 = vunpack.c.h.b16 %v2800
  %v3516 = vunpack.c.l.b16 %v2801
  %v3517 = vunpack.c.h.b16 %v2801
  %v3518 = vunpack.c.l.b16 %v2802
  %v3519 = vunpack.c.h.b16 %v2802
  %v3520 = vunpack.c.l.b16 %v2803
  %v3521 = vunpack.c.l.b16 %v2804
  %v3522 = vunpack.c.h.b16 %v2804
  %v3523 = vunpack.c.l.b16 %v2805
  %v3524 = vunpack.c.h.b16 %v2805
  %v3525 = vunpack.c.l.b16 %v2806
  %v3526 = vunpack.c.h.b16 %v2806
  %v3527 = vunpack.c.l.b16 %v2807
  %v3528 = vunpack.c.l.b16 %v2808
  %v3529 = vunpack.c.h.b16 %v2808
  %v3530 = vunpack.c.l.b16 %v2809
  %v3531 = vunpack.c.h.b16 %v2809
  %v3532 = vunpack.c.l.b16 %v2810
  %v3533 = vunpack.c.h.b16 %v2810
  %v3534 = vunpack.c.l.b16 %v2811
  %v3535 = vunpack.c.l.b16 %v2812
  %v3536 = vunpack.c.h.b16 %v2812
  %v3537 = vunpack.c.l.b16 %v2813
  %v3538 = vunpack.c.h.b16 %v2813
  %v3539 = vunpack.c.l.b16 %v2814
  %v3540 = vunpack.c.h.b16 %v2814
  %v3541 = vunpack.c.l.b16 %v2815
  %v3542 = vunpack.c.l.b16 %v2816
  %v3543 = vunpack.c.h.b16 %v2816
  %v3544 = vunpack.c.l.b16 %v2817
  %v3545 = vunpack.c.h.b16 %v2817
  %v3546 = vunpack.c.l.b16 %v2818
  %v3547 = vunpack.c.h.b16 %v2818
  %v3548 = vunpack.c.l.b16 %v2819
  %v3549 = vunpack.c.l.b16 %v2820
  %v3550 = vunpack.c.h.b16 %v2820
  %v3551 = vunpack.c.l.b16 %v2821
  %v3552 = vunpack.c.h.b16 %v2821
  %v3553 = vunpack.c.l.b16 %v2822
  %v3554 = vunpack.c.h.b16 %v2822
  %v3555 = vunpack.c.l.b16 %v2823
  %v3556 = vunpack.c.l.b16 %v2824
  %v3557 = vunpack.c.h.b16 %v2824
  %v3558 = vunpack.c.l.b16 %v2825
  %v3559 = vunpack.c.h.b16 %v2825
  %v3560 = vunpack.c.l.b16 %v2826
  %v3561 = vunpack.c.h.b16 %v2826
  %v3562 = vunpack.c.l.b16 %v2827
  %v3563 = vunpack.c.l.b16 %v2828
  %v3564 = vunpack.c.h.b16 %v2828
  %v3565 = vunpack.c.l.b16 %v2829
  %v3566 = vunpack.c.h.b16 %v2829
  %v3567 = vunpack.c.l.b16 %v2830
  %v3568 = vunpack.c.h.b16 %v2830
  %v3569 = vunpack.c.l.b16 %v2831
  %v3570 = vunpack.c.l.b16 %v2832
  %v3571 = vunpack.c.h.b16 %v2832
  %v3572 = vunpack.c.l.b16 %v2833
  %v3573 = vunpack.c.h.b16 %v2833
  %v3574 = vunpack.c.l.b16 %v2834
  %v3575 = vunpack.c.h.b16 %v2834
  %v3576 = vunpack.c.l.b16 %v2835
  %v3577 = vpack.c.b16 %v3136, %v3129
  %v3578 = vpack.c.b16 %v3137, %v3130
  %v3579 = vpack.c.b16 %v3138, %v3131
  %v3580 = vpack.c.b16 %v3139, %v3132
  %v3581 = vpack.c.b16 %v3140, %v3133
  %v3582 = vpack.c.b16 %v3141, %v3134
  %v3583 = vpack.c.b16 %v3142, %v3135
  %v3584 = vpack.c.b16 %v3150, %v3143
  %v3585 = vpack.c.b16 %v3151, %v3144
  %v3586 = vpack.c.b16 %v3152, %v3145
  %v3587 = vpack.c.b16 %v3153, %v3146
  %v3588 = vpack.c.b16 %v3154, %v3147
  %v3589 = vpack.c.b16 %v3155, %v3148
  %v3590 = vpack.c.b16 %v3156, %v3149
  %v3591 = vpack.c.b16 %v3164, %v3157
  %v3592 = vpack.c.b16 %v3165, %v3158
  %v3593 = vpack.c.b16 %v3166, %v3159
  %v3594 = vpack.c.b16 %v3167, %v3160
  %v3595 = vpack.c.b16 %v3168, %v3161
  %v3596 = vpack.c.b16 %v3169, %v3162
  %v3597 = vpack.c.b16 %v3170, %v3163
  %v3598 = vpack.c.b16 %v3178, %v3171
  %v3599 = vpack.c.b16 %v3179, %v3172
  %v3600 = vpack.c.b16 %v3180, %v3173
  %v3601 = vpack.c.b16 %v3181, %v3174
  %v3602 = vpack.c.b16 %v3182, %v3175
  %v3603 = vpack.c.b16 %v3183, %v3176
  %v3604 = vpack.c.b16 %v3184, %v3177
  %v3605 = vpack.c.b16 %v3192, %v3185
  %v3606 = vpack.c.b16 %v3193, %v3186
  %v3607 = vpack.c.b16 %v3194, %v3187
  %v3608 = vpack.c.b16 %v3195, %v3188
  %v3609 = vpack.c.b16 %v3196, %v3189
  %v3610 = vpack.c.b16 %v3197, %v3190
  %v3611 = vpack.c.b16 %v3198, %v3191
  %v3612 = vpack.c.b16 %v3206, %v3199
  %v3613 = vpack.c.b16 %v3207, %v3200
  %v3614 = vpack.c.b16 %v3208, %v3201
  %v3615 = vpack.c.b16 %v3209, %v3202
  %v3616 = vpack.c.b16 %v3210, %v3203
  %v3617 = vpack.c.b16 %v3211, %v3204
  %v3618 = vpack.c.b16 %v3212, %v3205
  %v3619 = vpack.c.b16 %v3220, %v3213
  %v3620 = vpack.c.b16 %v3221, %v3214
  %v3621 = vpack.c.b16 %v3222, %v3215
  %v3622 = vpack.c.b16 %v3223, %v3216
  %v3623 = vpack.c.b16 %v3224, %v3217
  %v3624 = vpack.c.b16 %v3225, %v3218
  %v3625 = vpack.c.b16 %v3226, %v3219
  %v3626 = vpack.c.b16 %v3234, %v3227
  %v3627 = vpack.c.b16 %v3235, %v3228
  %v3628 = vpack.c.b16 %v3236, %v3229
  %v3629 = vpack.c.b16 %v3237, %v3230
  %v3630 = vpack.c.b16 %v3238, %v3231
  %v3631 = vpack.c.b16 %v3239, %v3232
  %v3632 = vpack.c.b16 %v3240, %v3233
  %v3633 = vpack.c.b16 %v3248, %v3241
  %v3634 = vpack.c.b16 %v3249, %v3242
  %v3635 = vpack.c.b16 %v3250, %v3243
  %v3636 = vpack.c.b16 %v3251, %v3244
  %v3637 = vpack.c.b16 %v3252, %v3245
  %v3638 = vpack.c.b16 %v3253, %v3246
  %v3639 = vpack.c.b16 %v3254, %v3247
  %v3640 = vpack.c.b16 %v3262, %v3255
  %v3641 = vpack.c.b16 %v3263, %v3256
  %v3642 = vpack.c.b16 %v3264, %v3257
  %v3643 = vpack.c.b16 %v3265, %v3258
  %v3644 = vpack.c.b16 %v3266, %v3259
  %v3645 = vpack.c.b16 %v3267, %v3260
  %v3646 = vpack.c.b16 %v3268, %v3261
  %v3647 = vpack.c.b16 %v3276, %v3269
  %v3648 = vpack.c.b16 %v3277, %v3270
  %v3649 = vpack.c.b16 %v3278, %v3271
  %v3650 = vpack.c.b16 %v3279, %v3272
  %v3651 = vpack.c.b16 %v3280, %v3273
  %v3652 = vpack.c.b16 %v3281, %v3274
  %v3653 = vpack.c.b16 %v3282, %v3275
  %v3654 = vpack.c.b16 %v3290, %v3283
  %v3655 = vpack.c.b16 %v3291, %v3284
  %v3656 = vpack.c.b16 %v3292, %v3285
  %v3657 = vpack.c.b16 %v3293, %v3286
  %v3658 = vpack.c.b16 %v3294, %v3287
  %v3659 = vpack.c.b16 %v3295, %v3288
  %v3660 = vpack.c.b16 %v3296, %v3289
  %v3661 = vpack.c.b16 %v3304, %v3297
  %v3662 = vpack.c.b16 %v3305, %v3298
  %v3663 = vpack.c.b16 %v3306, %v3299
  %v3664 = vpack.c.b16 %v3307, %v3300
  %v3665 = vpack.c.b16 %v3308, %v3301
  %v3666 = vpack.c.b16 %v3309, %v3302
  %v3667 = vpack.c.b16 %v3310, %v3303
  %v3668 = vpack.c.b16 %v3318, %v3311
  %v3669 = vpack.c.b16 %v3319, %v3312
  %v3670 = vpack.c.b16 %v3320, %v3313
  %v3671 = vpack.c.b16 %v3321, %v3314
  %v3672 = vpack.c.b16 %v3322, %v3315
  %v3673 = vpack.c.b16 %v3323, %v3316
  %v3674 = vpack.c.b16 %v3324, %v3317
  %v3675 = vpack.c.b16 %v3332, %v3325
  %v3676 = vpack.c.b16 %v3333, %v3326
  %v3677 = vpack.c.b16 %v3334, %v3327
  %v3678 = vpack.c.b16 %v3335, %v3328
  %v3679 = vpack.c.b16 %v3336, %v3329
  %v3680 = vpack.c.b16 %v3337, %v3330
  %v3681 = vpack.c.b16 %v3338, %v3331
  %v3682 = vpack.c.b16 %v3346, %v3339
  %v3683 = vpack.c.b16 %v3347, %v3340
  %v3684 = vpack.c.b16 %v3348, %v3341
  %v3685 = vpack.c.b16 %v3349, %v3342
  %v3686 = vpack.c.b16 %v3350, %v3343
  %v3687 = vpack.c.b16 %v3351, %v3344
  %v3688 = vpack.c.b16 %v3352, %v3345
  %v3689 = vpack.c.b16 %v3360, %v3353
  %v3690 = vpack.c.b16 %v3361, %v3354
  %v3691 = vpack.c.b16 %v3362, %v3355
  %v3692 = vpack.c.b16 %v3363, %v3356
  %v3693 = vpack.c.b16 %v3364, %v3357
  %v3694 = vpack.c.b16 %v3365, %v3358
  %v3695 = vpack.c.b16 %v3366, %v3359
  %v3696 = vpack.c.b16 %v3374, %v3367
  %v3697 = vpack.c.b16 %v3375, %v3368
  %v3698 = vpack.c.b16 %v3376, %v3369
  %v3699 = vpack.c.b16 %v3377, %v3370
  %v3700 = vpack.c.b16 %v3378, %v3371
  %v3701 = vpack.c.b16 %v3379, %v3372
  %v3702 = vpack.c.b16 %v3380, %v3373
  %v3703 = vpack.c.b16 %v3388, %v3381
  %v3704 = vpack.c.b16 %v3389, %v3382
  %v3705 = vpack.c.b16 %v3390, %v3383
  %v3706 = vpack.c.b16 %v3391, %v3384
  %v3707 = vpack.c.b16 %v3392, %v3385
  %v3708 = vpack.c.b16 %v3393, %v3386
  %v3709 = vpack.c.b16 %v3394, %v3387
  %v3710 = vpack.c.b16 %v3402, %v3395
  %v3711 = vpack.c.b16 %v3403, %v3396
  %v3712 = vpack.c.b16 %v3404, %v3397
  %v3713 = vpack.c.b16 %v3405, %v3398
  %v3714 = vpack.c.b16 %v3406, %v3399
  %v3715 = vpack.c.b16 %v3407, %v3400
  %v3716 = vpack.c.b16 %v3408, %v3401
  %v3717 = vpack.c.b16 %v3416, %v3409
  %v3718 = vpack.c.b16 %v3417, %v3410
  %v3719 = vpack.c.b16 %v3418, %v3411
  %v3720 = vpack.c.b16 %v3419, %v3412
  %v3721 = vpack.c.b16 %v3420, %v3413
  %v3722 = vpack.c.b16 %v3421, %v3414
  %v3723 = vpack.c.b16 %v3422, %v3415
  %v3724 = vpack.c.b16 %v3430, %v3423
  %v3725 = vpack.c.b16 %v3431, %v3424
  %v3726 = vpack.c.b16 %v3432, %v3425
  %v3727 = vpack.c.b16 %v3433, %v3426
  %v3728 = vpack.c.b16 %v3434, %v3427
  %v3729 = vpack.c.b16 %v3435, %v3428
  %v3730 = vpack.c.b16 %v3436, %v3429
  %v3731 = vpack.c.b16 %v3444, %v3437
  %v3732 = vpack.c.b16 %v3445, %v3438
  %v3733 = vpack.c.b16 %v3446, %v3439
  %v3734 = vpack.c.b16 %v3447, %v3440
  %v3735 = vpack.c.b16 %v3448, %v3441
  %v3736 = vpack.c.b16 %v3449, %v3442
  %v3737 = vpack.c.b16 %v3450, %v3443
  %v3738 = vpack.c.b16 %v3458, %v3451
  %v3739 = vpack.c.b16 %v3459, %v3452
  %v3740 = vpack.c.b16 %v3460, %v3453
  %v3741 = vpack.c.b16 %v3461, %v3454
  %v3742 = vpack.c.b16 %v3462, %v3455
  %v3743 = vpack.c.b16 %v3463, %v3456
  %v3744 = vpack.c.b16 %v3464, %v3457
  %v3745 = vpack.c.b16 %v3472, %v3465
  %v3746 = vpack.c.b16 %v3473, %v3466
  %v3747 = vpack.c.b16 %v3474, %v3467
  %v3748 = vpack.c.b16 %v3475, %v3468
  %v3749 = vpack.c.b16 %v3476, %v3469
  %v3750 = vpack.c.b16 %v3477, %v3470
  %v3751 = vpack.c.b16 %v3478, %v3471
  %v3752 = vpack.c.b16 %v3486, %v3479
  %v3753 = vpack.c.b16 %v3487, %v3480
  %v3754 = vpack.c.b16 %v3488, %v3481
  %v3755 = vpack.c.b16 %v3489, %v3482
  %v3756 = vpack.c.b16 %v3490, %v3483
  %v3757 = vpack.c.b16 %v3491, %v3484
  %v3758 = vpack.c.b16 %v3492, %v3485
  %v3759 = vpack.c.b16 %v3500, %v3493
  %v3760 = vpack.c.b16 %v3501, %v3494
  %v3761 = vpack.c.b16 %v3502, %v3495
  %v3762 = vpack.c.b16 %v3503, %v3496
  %v3763 = vpack.c.b16 %v3504, %v3497
  %v3764 = vpack.c.b16 %v3505, %v3498
  %v3765 = vpack.c.b16 %v3506, %v3499
  %v3766 = vpack.c.b16 %v3514, %v3507
  %v3767 = vpack.c.b16 %v3515, %v3508
  %v3768 = vpack.c.b16 %v3516, %v3509
  %v3769 = vpack.c.b16 %v3517, %v3510
  %v3770 = vpack.c.b16 %v3518, %v3511
  %v3771 = vpack.c.b16 %v3519, %v3512
  %v3772 = vpack.c.b16 %v3520, %v3513
  %v3773 = vpack.c.b16 %v3528, %v3521
  %v3774 = vpack.c.b16 %v3529, %v3522
  %v3775 = vpack.c.b16 %v3530, %v3523
  %v3776 = vpack.c.b16 %v3531, %v3524
  %v3777 = vpack.c.b16 %v3532, %v3525
  %v3778 = vpack.c.b16 %v3533, %v3526
  %v3779 = vpack.c.b16 %v3534, %v3527
  %v3780 = vpack.c.b16 %v3542, %v3535
  %v3781 = vpack.c.b16 %v3543, %v3536
  %v3782 = vpack.c.b16 %v3544, %v3537
  %v3783 = vpack.c.b16 %v3545, %v3538
  %v3784 = vpack.c.b16 %v3546, %v3539
  %v3785 = vpack.c.b16 %v3547, %v3540
  %v3786 = vpack.c.b16 %v3548, %v3541
  %v3787 = vpack.c.b16 %v3556, %v3549
  %v3788 = vpack.c.b16 %v3557, %v3550
  %v3789 = vpack.c.b16 %v3558, %v3551
  %v3790 = vpack.c.b16 %v3559, %v3552
  %v3791 = vpack.c.b16 %v3560, %v3553
  %v3792 = vpack.c.b16 %v3561, %v3554
  %v3793 = vpack.c.b16 %v3562, %v3555
  %v3794 = vpack.c.b16 %v3570, %v3563
  %v3795 = vpack.c.b16 %v3571, %v3564
  %v3796 = vpack.c.b16 %v3572, %v3565
  %v3797 = vpack.c.b16 %v3573, %v3566
  %v3798 = vpack.c.b16 %v3574, %v3567
  %v3799 = vpack.c.b16 %v3575, %v3568
  %v3800 = vpack.c.b16 %v3576, %v3569
  %4025 = vmatprep.subr.bf16.mxu0 %v3627
  %4026 = vmatpush1.bf16.msra.mxu0 %v3626
  %4027 = vmatprep.subr.bf16.mxu0 %v3620
  %4028 = vmatpush1.bf16.msra.mxu0 %v3619
  %4029 = vmatprep.subr.bf16.mxu0 %v3613
  %4030 = vmatpush1.bf16.msra.mxu0 %v3612
  %4031 = vmatprep.subr.bf16.mxu0 %v3606
  %4032 = vmatpush1.bf16.msra.mxu0 %v3605
  %4033 = vmatprep.subr.bf16.mxu0 %v3599
  %4034 = vmatpush1.bf16.msra.mxu0 %v3598
  %4035 = vmatprep.subr.bf16.mxu0 %v3592
  %4036 = vmatpush1.bf16.msra.mxu0 %v3591
  %4037 = vmatprep.subr.bf16.mxu0 %v3585
  %4038 = vmatpush1.bf16.msra.mxu0 %v3584
  %4039 = vmatprep.subr.bf16.mxu0 %v3578
  %4040 = vmatpush1.bf16.msra.mxu0 %v3577
  %4041 = vmatprep.subr.bf16.mxu0 %v3683
  %4042 = vmatpush2.bf16.msra.mxu0 %v3682
  %4043 = vmatprep.subr.bf16.mxu0 %v3676
  %4044 = vmatpush2.bf16.msra.mxu0 %v3675
  %4045 = vmatprep.subr.bf16.mxu0 %v3669
  %4046 = vmatpush2.bf16.msra.mxu0 %v3668
  %4047 = vmatprep.subr.bf16.mxu0 %v3662
  %4048 = vmatpush2.bf16.msra.mxu0 %v3661
  %4049 = vmatprep.subr.bf16.mxu0 %v3655
  %4050 = vmatpush2.bf16.msra.mxu0 %v3654
  %4051 = vmatprep.subr.bf16.mxu0 %v3648
  %4052 = vmatpush2.bf16.msra.mxu0 %v3647
  %4053 = vmatprep.subr.bf16.mxu0 %v3641
  %4054 = vmatpush2.bf16.msra.mxu0 %v3640
  %4055 = vmatprep.subr.bf16.mxu0 %v3634
  %4056 = vmatpush2.bf16.msra.mxu0 %v3633
  %4057 = vmatprep.mubr.bf16.mxu0 %v2577
  %4058 = vmatmul.mubr.bf16.gmra.mxu0 %v2576
  %v4059 = vpop.f32.mrf.mxu0
  %v4060 = vadd.f32 %v2841, %v4059
  %v4061 = vpop.f32.mrf.mxu0
  %v4062 = vadd.f32 %v2845, %v4061
  %v4063 = vpop.f32.mrf.mxu0
  %v4064 = vadd.f32 %v2841, %v4063
  %v4065 = vpop.f32.mrf.mxu0
  %v4066 = vadd.f32 %v2845, %v4065
  %4067 = vdwg.mxu0
  %4068 = vmatprep.subr.bf16.mxu0 %v3739
  %4069 = vmatpush1.bf16.msra.mxu0 %v3738
  %4070 = vmatprep.subr.bf16.mxu0 %v3732
  %4071 = vmatpush1.bf16.msra.mxu0 %v3731
  %4072 = vmatprep.subr.bf16.mxu0 %v3725
  %4073 = vmatpush1.bf16.msra.mxu0 %v3724
  %4074 = vmatprep.subr.bf16.mxu0 %v3718
  %4075 = vmatpush1.bf16.msra.mxu0 %v3717
  %4076 = vmatprep.subr.bf16.mxu0 %v3711
  %4077 = vmatpush1.bf16.msra.mxu0 %v3710
  %4078 = vmatprep.subr.bf16.mxu0 %v3704
  %4079 = vmatpush1.bf16.msra.mxu0 %v3703
  %4080 = vmatprep.subr.bf16.mxu0 %v3697
  %4081 = vmatpush1.bf16.msra.mxu0 %v3696
  %4082 = vmatprep.subr.bf16.mxu0 %v3690
  %4083 = vmatpush1.bf16.msra.mxu0 %v3689
  %4084 = vmatprep.subr.bf16.mxu0 %v3795
  %4085 = vmatpush2.bf16.msra.mxu0 %v3794
  %4086 = vmatprep.subr.bf16.mxu0 %v3788
  %4087 = vmatpush2.bf16.msra.mxu0 %v3787
  %4088 = vmatprep.subr.bf16.mxu0 %v3781
  %4089 = vmatpush2.bf16.msra.mxu0 %v3780
  %4090 = vmatprep.subr.bf16.mxu0 %v3774
  %4091 = vmatpush2.bf16.msra.mxu0 %v3773
  %4092 = vmatprep.subr.bf16.mxu0 %v3767
  %4093 = vmatpush2.bf16.msra.mxu0 %v3766
  %4094 = vmatprep.subr.bf16.mxu0 %v3760
  %4095 = vmatpush2.bf16.msra.mxu0 %v3759
  %4096 = vmatprep.subr.bf16.mxu0 %v3753
  %4097 = vmatpush2.bf16.msra.mxu0 %v3752
  %4098 = vmatprep.subr.bf16.mxu0 %v3746
  %4099 = vmatpush2.bf16.msra.mxu0 %v3745
  %4100 = vmatprep.mubr.bf16.mxu0 %v2579
  %4101 = vmatmul.mubr.bf16.gmra.mxu0 %v2578
  %v4102 = vpop.f32.mrf.mxu0
  %v4103 = vadd.f32 %v4060, %v4102
  %v4104 = vpop.f32.mrf.mxu0
  %v4105 = vadd.f32 %v4062, %v4104
  %v4106 = vpop.f32.mrf.mxu0
  %v4107 = vadd.f32 %v4064, %v4106
  %v4108 = vpop.f32.mrf.mxu0
  %v4109 = vadd.f32 %v4066, %v4108
  %4110 = vdwg.mxu0
  %4111 = vmatprep.subr.bf16.mxu0 %v3629
  %4112 = vmatpush1.bf16.msra.mxu0 %v3628
  %4113 = vmatprep.subr.bf16.mxu0 %v3622
  %4114 = vmatpush1.bf16.msra.mxu0 %v3621
  %4115 = vmatprep.subr.bf16.mxu0 %v3615
  %4116 = vmatpush1.bf16.msra.mxu0 %v3614
  %4117 = vmatprep.subr.bf16.mxu0 %v3608
  %4118 = vmatpush1.bf16.msra.mxu0 %v3607
  %4119 = vmatprep.subr.bf16.mxu0 %v3601
  %4120 = vmatpush1.bf16.msra.mxu0 %v3600
  %4121 = vmatprep.subr.bf16.mxu0 %v3594
  %4122 = vmatpush1.bf16.msra.mxu0 %v3593
  %4123 = vmatprep.subr.bf16.mxu0 %v3587
  %4124 = vmatpush1.bf16.msra.mxu0 %v3586
  %4125 = vmatprep.subr.bf16.mxu0 %v3580
  %4126 = vmatpush1.bf16.msra.mxu0 %v3579
  %4127 = vmatprep.subr.bf16.mxu0 %v3685
  %4128 = vmatpush2.bf16.msra.mxu0 %v3684
  %4129 = vmatprep.subr.bf16.mxu0 %v3678
  %4130 = vmatpush2.bf16.msra.mxu0 %v3677
  %4131 = vmatprep.subr.bf16.mxu0 %v3671
  %4132 = vmatpush2.bf16.msra.mxu0 %v3670
  %4133 = vmatprep.subr.bf16.mxu0 %v3664
  %4134 = vmatpush2.bf16.msra.mxu0 %v3663
  %4135 = vmatprep.subr.bf16.mxu0 %v3657
  %4136 = vmatpush2.bf16.msra.mxu0 %v3656
  %4137 = vmatprep.subr.bf16.mxu0 %v3650
  %4138 = vmatpush2.bf16.msra.mxu0 %v3649
  %4139 = vmatprep.subr.bf16.mxu0 %v3643
  %4140 = vmatpush2.bf16.msra.mxu0 %v3642
  %4141 = vmatprep.subr.bf16.mxu0 %v3636
  %4142 = vmatpush2.bf16.msra.mxu0 %v3635
  %4143 = vmatprep.mubr.bf16.mxu0 %v2577
  %4144 = vmatmul.mubr.bf16.gmra.mxu0 %v2576
  %v4145 = vpop.f32.mrf.mxu0
  %v4146 = vadd.f32 %v2849, %v4145
  %v4147 = vpop.f32.mrf.mxu0
  %v4148 = vadd.f32 %v2853, %v4147
  %v4149 = vpop.f32.mrf.mxu0
  %v4150 = vadd.f32 %v2849, %v4149
  %v4151 = vpop.f32.mrf.mxu0
  %v4152 = vadd.f32 %v2853, %v4151
  %4153 = vdwg.mxu0
  %4154 = vmatprep.subr.bf16.mxu0 %v3741
  %4155 = vmatpush1.bf16.msra.mxu0 %v3740
  %4156 = vmatprep.subr.bf16.mxu0 %v3734
  %4157 = vmatpush1.bf16.msra.mxu0 %v3733
  %4158 = vmatprep.subr.bf16.mxu0 %v3727
  %4159 = vmatpush1.bf16.msra.mxu0 %v3726
  %4160 = vmatprep.subr.bf16.mxu0 %v3720
  %4161 = vmatpush1.bf16.msra.mxu0 %v3719
  %4162 = vmatprep.subr.bf16.mxu0 %v3713
  %4163 = vmatpush1.bf16.msra.mxu0 %v3712
  %4164 = vmatprep.subr.bf16.mxu0 %v3706
  %4165 = vmatpush1.bf16.msra.mxu0 %v3705
  %4166 = vmatprep.subr.bf16.mxu0 %v3699
  %4167 = vmatpush1.bf16.msra.mxu0 %v3698
  %4168 = vmatprep.subr.bf16.mxu0 %v3692
  %4169 = vmatpush1.bf16.msra.mxu0 %v3691
  %4170 = vmatprep.subr.bf16.mxu0 %v3797
  %4171 = vmatpush2.bf16.msra.mxu0 %v3796
  %4172 = vmatprep.subr.bf16.mxu0 %v3790
  %4173 = vmatpush2.bf16.msra.mxu0 %v3789
  %4174 = vmatprep.subr.bf16.mxu0 %v3783
  %4175 = vmatpush2.bf16.msra.mxu0 %v3782
  %4176 = vmatprep.subr.bf16.mxu0 %v3776
  %4177 = vmatpush2.bf16.msra.mxu0 %v3775
  %4178 = vmatprep.subr.bf16.mxu0 %v3769
  %4179 = vmatpush2.bf16.msra.mxu0 %v3768
  %4180 = vmatprep.subr.bf16.mxu0 %v3762
  %4181 = vmatpush2.bf16.msra.mxu0 %v3761
  %4182 = vmatprep.subr.bf16.mxu0 %v3755
  %4183 = vmatpush2.bf16.msra.mxu0 %v3754
  %4184 = vmatprep.subr.bf16.mxu0 %v3748
  %4185 = vmatpush2.bf16.msra.mxu0 %v3747
  %4186 = vmatprep.mubr.bf16.mxu0 %v2579
  %4187 = vmatmul.mubr.bf16.gmra.mxu0 %v2578
  %v4188 = vpop.f32.mrf.mxu0
  %v4189 = vadd.f32 %v4146, %v4188
  %v4190 = vpop.f32.mrf.mxu0
  %v4191 = vadd.f32 %v4148, %v4190
  %v4192 = vpop.f32.mrf.mxu0
  %v4193 = vadd.f32 %v4150, %v4192
  %v4194 = vpop.f32.mrf.mxu0
  %v4195 = vadd.f32 %v4152, %v4194
  %4196 = vdwg.mxu0
  %4197 = vmatprep.subr.bf16.mxu0 %v3631
  %4198 = vmatpush1.bf16.msra.mxu0 %v3630
  %4199 = vmatprep.subr.bf16.mxu0 %v3624
  %4200 = vmatpush1.bf16.msra.mxu0 %v3623
  %4201 = vmatprep.subr.bf16.mxu0 %v3617
  %4202 = vmatpush1.bf16.msra.mxu0 %v3616
  %4203 = vmatprep.subr.bf16.mxu0 %v3610
  %4204 = vmatpush1.bf16.msra.mxu0 %v3609
  %4205 = vmatprep.subr.bf16.mxu0 %v3603
  %4206 = vmatpush1.bf16.msra.mxu0 %v3602
  %4207 = vmatprep.subr.bf16.mxu0 %v3596
  %4208 = vmatpush1.bf16.msra.mxu0 %v3595
  %4209 = vmatprep.subr.bf16.mxu0 %v3589
  %4210 = vmatpush1.bf16.msra.mxu0 %v3588
  %4211 = vmatprep.subr.bf16.mxu0 %v3582
  %4212 = vmatpush1.bf16.msra.mxu0 %v3581
  %4213 = vmatprep.subr.bf16.mxu0 %v3687
  %4214 = vmatpush2.bf16.msra.mxu0 %v3686
  %4215 = vmatprep.subr.bf16.mxu0 %v3680
  %4216 = vmatpush2.bf16.msra.mxu0 %v3679
  %4217 = vmatprep.subr.bf16.mxu0 %v3673
  %4218 = vmatpush2.bf16.msra.mxu0 %v3672
  %4219 = vmatprep.subr.bf16.mxu0 %v3666
  %4220 = vmatpush2.bf16.msra.mxu0 %v3665
  %4221 = vmatprep.subr.bf16.mxu0 %v3659
  %4222 = vmatpush2.bf16.msra.mxu0 %v3658
  %4223 = vmatprep.subr.bf16.mxu0 %v3652
  %4224 = vmatpush2.bf16.msra.mxu0 %v3651
  %4225 = vmatprep.subr.bf16.mxu0 %v3645
  %4226 = vmatpush2.bf16.msra.mxu0 %v3644
  %4227 = vmatprep.subr.bf16.mxu0 %v3638
  %4228 = vmatpush2.bf16.msra.mxu0 %v3637
  %4229 = vmatprep.mubr.bf16.mxu0 %v2577
  %4230 = vmatmul.mubr.bf16.gmra.mxu0 %v2576
  %v4231 = vpop.f32.mrf.mxu0
  %v4232 = vadd.f32 %v2857, %v4231
  %v4233 = vpop.f32.mrf.mxu0
  %v4234 = vadd.f32 %v2861, %v4233
  %v4235 = vpop.f32.mrf.mxu0
  %v4236 = vadd.f32 %v2857, %v4235
  %v4237 = vpop.f32.mrf.mxu0
  %v4238 = vadd.f32 %v2861, %v4237
  %4239 = vdwg.mxu0
  %4240 = vmatprep.subr.bf16.mxu0 %v3743
  %4241 = vmatpush1.bf16.msra.mxu0 %v3742
  %4242 = vmatprep.subr.bf16.mxu0 %v3736
  %4243 = vmatpush1.bf16.msra.mxu0 %v3735
  %4244 = vmatprep.subr.bf16.mxu0 %v3729
  %4245 = vmatpush1.bf16.msra.mxu0 %v3728
  %4246 = vmatprep.subr.bf16.mxu0 %v3722
  %4247 = vmatpush1.bf16.msra.mxu0 %v3721
  %4248 = vmatprep.subr.bf16.mxu0 %v3715
  %4249 = vmatpush1.bf16.msra.mxu0 %v3714
  %4250 = vmatprep.subr.bf16.mxu0 %v3708
  %4251 = vmatpush1.bf16.msra.mxu0 %v3707
  %4252 = vmatprep.subr.bf16.mxu0 %v3701
  %4253 = vmatpush1.bf16.msra.mxu0 %v3700
  %4254 = vmatprep.subr.bf16.mxu0 %v3694
  %4255 = vmatpush1.bf16.msra.mxu0 %v3693
  %4256 = vmatprep.subr.bf16.mxu0 %v3799
  %4257 = vmatpush2.bf16.msra.mxu0 %v3798
  %4258 = vmatprep.subr.bf16.mxu0 %v3792
  %4259 = vmatpush2.bf16.msra.mxu0 %v3791
  %4260 = vmatprep.subr.bf16.mxu0 %v3785
  %4261 = vmatpush2.bf16.msra.mxu0 %v3784
  %4262 = vmatprep.subr.bf16.mxu0 %v3778
  %4263 = vmatpush2.bf16.msra.mxu0 %v3777
  %4264 = vmatprep.subr.bf16.mxu0 %v3771
  %4265 = vmatpush2.bf16.msra.mxu0 %v3770
  %4266 = vmatprep.subr.bf16.mxu0 %v3764
  %4267 = vmatpush2.bf16.msra.mxu0 %v3763
  %4268 = vmatprep.subr.bf16.mxu0 %v3757
  %4269 = vmatpush2.bf16.msra.mxu0 %v3756
  %4270 = vmatprep.subr.bf16.mxu0 %v3750
  %4271 = vmatpush2.bf16.msra.mxu0 %v3749
  %4272 = vmatprep.mubr.bf16.mxu0 %v2579
  %4273 = vmatmul.mubr.bf16.gmra.mxu0 %v2578
  %v4274 = vpop.f32.mrf.mxu0
  %v4275 = vadd.f32 %v4232, %v4274
  %v4276 = vpop.f32.mrf.mxu0
  %v4277 = vadd.f32 %v4234, %v4276
  %v4278 = vpop.f32.mrf.mxu0
  %v4279 = vadd.f32 %v4236, %v4278
  %v4280 = vpop.f32.mrf.mxu0
  %v4281 = vadd.f32 %v4238, %v4280
  %4282 = vdwg.mxu0
  %4283 = vmatprep.subr.bf16.mxu0 0
  %4284 = vmatpush1.bf16.msra.mxu0 %v3632
  %4285 = vmatprep.subr.bf16.mxu0 0
  %4286 = vmatpush1.bf16.msra.mxu0 %v3625
  %4287 = vmatprep.subr.bf16.mxu0 0
  %4288 = vmatpush1.bf16.msra.mxu0 %v3618
  %4289 = vmatprep.subr.bf16.mxu0 0
  %4290 = vmatpush1.bf16.msra.mxu0 %v3611
  %4291 = vmatprep.subr.bf16.mxu0 0
  %4292 = vmatpush1.bf16.msra.mxu0 %v3604
  %4293 = vmatprep.subr.bf16.mxu0 0
  %4294 = vmatpush1.bf16.msra.mxu0 %v3597
  %4295 = vmatprep.subr.bf16.mxu0 0
  %4296 = vmatpush1.bf16.msra.mxu0 %v3590
  %4297 = vmatprep.subr.bf16.mxu0 0
  %4298 = vmatpush1.bf16.msra.mxu0 %v3583
  %4299 = vmatprep.subr.bf16.mxu0 0
  %4300 = vmatpush2.bf16.msra.mxu0 %v3688
  %4301 = vmatprep.subr.bf16.mxu0 0
  %4302 = vmatpush2.bf16.msra.mxu0 %v3681
  %4303 = vmatprep.subr.bf16.mxu0 0
  %4304 = vmatpush2.bf16.msra.mxu0 %v3674
  %4305 = vmatprep.subr.bf16.mxu0 0
  %4306 = vmatpush2.bf16.msra.mxu0 %v3667
  %4307 = vmatprep.subr.bf16.mxu0 0
  %4308 = vmatpush2.bf16.msra.mxu0 %v3660
  %4309 = vmatprep.subr.bf16.mxu0 0
  %4310 = vmatpush2.bf16.msra.mxu0 %v3653
  %4311 = vmatprep.subr.bf16.mxu0 0
  %4312 = vmatpush2.bf16.msra.mxu0 %v3646
  %4313 = vmatprep.subr.bf16.mxu0 0
  %4314 = vmatpush2.bf16.msra.mxu0 %v3639
  %4315 = vmatprep.mubr.bf16.mxu0 %v2577
  %4316 = vmatmul.mubr.bf16.gmra.mxu0 %v2576
  %v4317 = vpop.f32.mrf.mxu0
  %v4318 = vadd.f32 %v2865, %v4317
  %v4319 = vpop.f32.mrf.mxu0
  %v4320 = vpop.f32.mrf.mxu0
  %v4321 = vadd.f32 %v2865, %v4320
  %v4322 = vpop.f32.mrf.mxu0
  %4323 = vdwg.mxu0
  %4324 = vmatprep.subr.bf16.mxu0 0
  %4325 = vmatpush1.bf16.msra.mxu0 %v3744
  %4326 = vmatprep.subr.bf16.mxu0 0
  %4327 = vmatpush1.bf16.msra.mxu0 %v3737
  %4328 = vmatprep.subr.bf16.mxu0 0
  %4329 = vmatpush1.bf16.msra.mxu0 %v3730
  %4330 = vmatprep.subr.bf16.mxu0 0
  %4331 = vmatpush1.bf16.msra.mxu0 %v3723
  %4332 = vmatprep.subr.bf16.mxu0 0
  %4333 = vmatpush1.bf16.msra.mxu0 %v3716
  %4334 = vmatprep.subr.bf16.mxu0 0
  %4335 = vmatpush1.bf16.msra.mxu0 %v3709
  %4336 = vmatprep.subr.bf16.mxu0 0
  %4337 = vmatpush1.bf16.msra.mxu0 %v3702
  %4338 = vmatprep.subr.bf16.mxu0 0
  %4339 = vmatpush1.bf16.msra.mxu0 %v3695
  %4340 = vmatprep.subr.bf16.mxu0 0
  %4341 = vmatpush2.bf16.msra.mxu0 %v3800
  %4342 = vmatprep.subr.bf16.mxu0 0
  %4343 = vmatpush2.bf16.msra.mxu0 %v3793
  %4344 = vmatprep.subr.bf16.mxu0 0
  %4345 = vmatpush2.bf16.msra.mxu0 %v3786
  %4346 = vmatprep.subr.bf16.mxu0 0
  %4347 = vmatpush2.bf16.msra.mxu0 %v3779
  %4348 = vmatprep.subr.bf16.mxu0 0
  %4349 = vmatpush2.bf16.msra.mxu0 %v3772
  %4350 = vmatprep.subr.bf16.mxu0 0
  %4351 = vmatpush2.bf16.msra.mxu0 %v3765
  %4352 = vmatprep.subr.bf16.mxu0 0
  %4353 = vmatpush2.bf16.msra.mxu0 %v3758
  %4354 = vmatprep.subr.bf16.mxu0 0
  %4355 = vmatpush2.bf16.msra.mxu0 %v3751
  %4356 = vmatprep.mubr.bf16.mxu0 %v2579
  %4357 = vmatmul.mubr.bf16.gmra.mxu0 %v2578
  %v4358 = vpop.f32.mrf.mxu0
  %v4359 = vadd.f32 %v4318, %v4358
  %v4360 = vpop.f32.mrf.mxu0
  %v4361 = vpop.f32.mrf.mxu0
  %v4362 = vadd.f32 %v4321, %v4361
  %v4363 = vpop.f32.mrf.mxu0
  %4364 = vdwg.mxu0
  %v4365 = vxor.u32 %v4103, 2147483648
  %v4366 = vxor.u32 %v4105, 2147483648
  %v4367 = vxor.u32 %v4189, 2147483648
  %v4368 = vxor.u32 %v4191, 2147483648
  %v4369 = vxor.u32 %v4275, 2147483648
  %v4370 = vxor.u32 %v4277, 2147483648
  %v4371 = vxor.u32 %v4359, 2147483648
  %v4372 = vxor.u32 %v4107, 2147483648
  %v4373 = vxor.u32 %v4109, 2147483648
  %v4374 = vxor.u32 %v4193, 2147483648
  %v4375 = vxor.u32 %v4195, 2147483648
  %v4376 = vxor.u32 %v4279, 2147483648
  %v4377 = vxor.u32 %v4281, 2147483648
  %v4378 = vxor.u32 %v4362, 2147483648
  %v4379 = vmul.f32 %v4365, 1.442695
  %v4380 = vpow.pop %v4379
  %v4381 = vmul.f32 %v4366, 1.442695
  %v4382 = vpow.pop %v4381
  %v4383 = vmul.f32 %v4367, 1.442695
  %v4384 = vpow.pop %v4383
  %v4385 = vmul.f32 %v4368, 1.442695
  %v4386 = vpow.pop %v4385
  %v4387 = vmul.f32 %v4369, 1.442695
  %v4388 = vpow.pop %v4387
  %v4389 = vmul.f32 %v4370, 1.442695
  %v4390 = vpow.pop %v4389
  %v4391 = vmul.f32 %v4371, 1.442695
  %v4392 = vpow.pop %v4391
  %v4393 = vmul.f32 %v4372, 1.442695
  %v4394 = vpow.pop %v4393
  %v4395 = vmul.f32 %v4373, 1.442695
  %v4396 = vpow.pop %v4395
  %v4397 = vmul.f32 %v4374, 1.442695
  %v4398 = vpow.pop %v4397
  %v4399 = vmul.f32 %v4375, 1.442695
  %v4400 = vpow.pop %v4399
  %v4401 = vmul.f32 %v4376, 1.442695
  %v4402 = vpow.pop %v4401
  %v4403 = vmul.f32 %v4377, 1.442695
  %v4404 = vpow.pop %v4403
  %v4405 = vmul.f32 %v4378, 1.442695
  %v4406 = vpow.pop %v4405
  %v4407 = vadd.f32 %v4380, 1.0
  %v4408 = vadd.f32 %v4382, 1.0
  %v4409 = vadd.f32 %v4384, 1.0
  %v4410 = vadd.f32 %v4386, 1.0
  %v4411 = vadd.f32 %v4388, 1.0
  %v4412 = vadd.f32 %v4390, 1.0
  %v4413 = vadd.f32 %v4392, 1.0
  %v4414 = vadd.f32 %v4394, 1.0
  %v4415 = vadd.f32 %v4396, 1.0
  %v4416 = vadd.f32 %v4398, 1.0
  %v4417 = vadd.f32 %v4400, 1.0
  %v4418 = vadd.f32 %v4402, 1.0
  %v4419 = vadd.f32 %v4404, 1.0
  %v4420 = vadd.f32 %v4406, 1.0
  %v4421 = vrcp.pop %v4407
  %v4422 = vmul.f32 1.0, %v4421
  %v4423 = vrcp.pop %v4408
  %v4424 = vmul.f32 1.0, %v4423
  %v4425 = vrcp.pop %v4409
  %v4426 = vmul.f32 1.0, %v4425
  %v4427 = vrcp.pop %v4410
  %v4428 = vmul.f32 1.0, %v4427
  %v4429 = vrcp.pop %v4411
  %v4430 = vmul.f32 1.0, %v4429
  %v4431 = vrcp.pop %v4412
  %v4432 = vmul.f32 1.0, %v4431
  %v4433 = vrcp.pop %v4413
  %v4434 = vmul.f32 1.0, %v4433
  %v4435 = vrcp.pop %v4414
  %v4436 = vmul.f32 1.0, %v4435
  %v4437 = vrcp.pop %v4415
  %v4438 = vmul.f32 1.0, %v4437
  %v4439 = vrcp.pop %v4416
  %v4440 = vmul.f32 1.0, %v4439
  %v4441 = vrcp.pop %v4417
  %v4442 = vmul.f32 1.0, %v4441
  %v4443 = vrcp.pop %v4418
  %v4444 = vmul.f32 1.0, %v4443
  %v4445 = vrcp.pop %v4419
  %v4446 = vmul.f32 1.0, %v4445
  %v4447 = vrcp.pop %v4420
  %v4448 = vmul.f32 1.0, %v4447
  %v4449 = vpack.c.bf16 %v4436, %v4422
  %v4450 = vpack.c.bf16 %v4438, %v4424
  %v4451 = vpack.c.bf16 %v4440, %v4426
  %v4452 = vpack.c.bf16 %v4442, %v4428
  %v4453 = vpack.c.bf16 %v4444, %v4430
  %v4454 = vpack.c.bf16 %v4446, %v4432
  %v4455 = vpack.c.bf16 %v4448, %v4434
  %v4463 = vunpack.c.l.b16 %v4449
  %v4464 = vunpack.c.l.b16 %v4450
  %v4465 = vunpack.c.l.b16 %v4451
  %v4466 = vunpack.c.l.b16 %v4452
  %v4467 = vunpack.c.l.b16 %v4453
  %v4468 = vunpack.c.l.b16 %v4454
  %v4469 = vunpack.c.l.b16 %v4455
  %v4470 = vunpack.c.h.b16 %v4449
  %v4471 = vunpack.c.h.b16 %v4450
  %v4472 = vunpack.c.h.b16 %v4451
  %v4473 = vunpack.c.h.b16 %v4452
  %v4474 = vunpack.c.h.b16 %v4453
  %v4475 = vunpack.c.h.b16 %v4454
  %v4476 = vunpack.c.h.b16 %v4455
  %v4477 = vpack.c.b16 %v4464, %v4463
  %v4478 = vpack.c.b16 %v4466, %v4465
  %v4479 = vpack.c.b16 %v4468, %v4467
  %v4480 = vpack.c.b16 %v4469, %v4469
  %v4481 = vpack.c.b16 %v4471, %v4470
  %v4482 = vpack.c.b16 %v4473, %v4472
  %v4483 = vpack.c.b16 %v4475, %v4474
  %v4484 = vpack.c.b16 %v4476, %v4476
  %4493 = vst [vmem:[%s7] sm:$0xff] %v4477
  %4494 = vst [vmem:[%s7 + $0x8] sm:$0xff] %v4478
  %4495 = vst [vmem:[%s7 + $0x10] sm:$0xff] %v4479
  %vm4496 = vcmask 125952
  %4497 = vst.msk [vmem:[%s7 + $0x18] sm:$0xf] %vm4496, %v4480
  %4498 = vst [vmem:[%s7 + $0x1c] sm:$0xff] %v4481
  %4499 = vst [vmem:[%s7 + $0x24] sm:$0xff] %v4482
  %4500 = vst [vmem:[%s7 + $0x2c] sm:$0xff] %v4483
  %4501 = vst.msk [vmem:[%s7 + $0x34] sm:$0xf] %vm4496, %v4484
  // Predicated region
  $region30: #{baseline_net_forward.1} parent=0 // pred_check
    _
  $region31: #{baseline_net_forward.1} parent=0 // pred_check_branch
    %4503 = sbr.rel (0) target = $region33
  $region32: #{baseline_net_forward.1} parent=0 // pred_region
    _
  $region33: #{baseline_net_forward.1} parent=0 // pred_fallthru
    _
  // Predicated region
  $region34: #{baseline_net_forward.1} parent=0 // pred_check
    _
  $region35: #{baseline_net_forward.1} parent=0 // pred_check_branch
    %4505 = sbr.rel (0) target = $region37
  $region36: #{baseline_net_forward.1} parent=0 // pred_region
    _
  $region37: #{baseline_net_forward.1} parent=0 // pred_fallthru
    _

</llo_original>
